<compile_context>
chip_gen: v7x
topology: tpu7x:2x2x1
jax: 0.10.0
libtpu: 0.0.40
codegen_flags: <defaults>
</compile_context>

<pallas_src>
import functools
import numpy as np
import jax
import jax.numpy as jnp
from jax import lax
from jax.experimental import pallas as pl
from jax.experimental.pallas import tpu as pltpu


# ----------------------------------------------------------------------------
# in-kernel helpers
# ----------------------------------------------------------------------------
def _bf(x):
    return x.astype(jnp.bfloat16)


def _mish(x):
    # mish(x) = x * tanh(softplus(x)) = x * u / (u + 2),  u = e^x * (e^x + 2)
    t = jnp.exp(jnp.minimum(x, 20.0))          # clamp: mish(x) ~= x for x >~ 20
    u = t * (t + 2.0)
    return x * (u * pl.reciprocal(u + 2.0, approx=True))


def _sigmoid(x):
    return pl.reciprocal(1.0 + jnp.exp(-x), approx=True)


# ----------------------------------------------------------------------------
# fused MelStyleEncoder kernel (one grid step == one batch element)
# ----------------------------------------------------------------------------
def _mel_style_encoder_kernel(
    x_ref, mrow_ref, mcol_ref,
    sw1_ref, sb1_ref, sw2_ref, sb2_ref,
    c1w_ref, c1b_ref, c2w_ref, c2b_ref,
    wqkv_ref, bqkv_ref, wo_ref, bo_ref,
    wfc_ref, bfc_ref,
    o_ref,
    pad_ref,
    *, T, H, n_head, ksize, temperature):

    x = x_ref[...]                          # [T, n_mel] f32
    mrow = mrow_ref[...]                    # [1, T]   1.0 == padded key
    mcol = mcol_ref[...]                    # [T, 1]   1.0 == padded position
    keep = 1.0 - mcol                       # [T, 1]

    pad = (ksize - 1) // 2
    # Zero the halo strips of the time-padded conv scratch once per grid step
    # (done every step so each megacore core sees initialized scratch).
    pad_ref[pl.ds(0, pad), :] = jnp.zeros((pad, H), jnp.float32)
    pad_ref[pl.ds(pad + T, pad), :] = jnp.zeros((pad, H), jnp.float32)

    # ---- spectral: Linear -> Mish -> (Dropout) -> Linear -> Mish -> (Dropout)
    h = jnp.dot(_bf(x), sw1_ref[...], preferred_element_type=jnp.float32) + sb1_ref[...]
    h = _mish(h)
    h = jnp.dot(_bf(h), sw2_ref[...], preferred_element_type=jnp.float32) + sb2_ref[...]
    h = _mish(h)                            # [T, H] f32

    # ---- temporal: two Conv1dGLU blocks (conv over time, channels-last, im2col)
    def conv1d_glu(y, w_ref, b_ref):
        # write the live window into the time-padded scratch, im2col -> 1 matmul
        pad_ref[pl.ds(pad, T), :] = y
        ycol = jnp.concatenate(
            [pad_ref[pl.ds(kk, T), :] for kk in range(ksize)], axis=-1)   # [T, k*H]
        z = jnp.dot(_bf(ycol), w_ref[...],
                    preferred_element_type=jnp.float32) + b_ref[...]      # [T, 2H]
        z1 = z[:, :H]
        z2 = z[:, H:]
        return y + z1 * _sigmoid(z2)        # residual + GLU  (dropout == identity)

    h = conv1d_glu(h, c1w_ref, c1b_ref)
    h = conv1d_glu(h, c2w_ref, c2b_ref)

    # ---- masked_fill(mask, 0) before self-attention (also the attn residual)
    h = h * keep                            # [T, H]

    # ---- multi-head self-attention (temperature = sqrt(d_model))
    qkv = jnp.dot(_bf(h), wqkv_ref[...],
                  preferred_element_type=jnp.float32) + bqkv_ref[...]     # [T, 3H]
    d_k = H // n_head
    inv_temp = 1.0 / temperature
    neg_bias = mrow * (-1e30)               # [1, T] additive key mask (finite)
    proj = jnp.zeros((T, H), jnp.float32)
    for hh in range(n_head):                # static, tiny head loop
        q_h = qkv[:, hh * d_k:(hh + 1) * d_k]
        k_h = qkv[:, H + hh * d_k:H + (hh + 1) * d_k]
        v_h = qkv[:, 2 * H + hh * d_k:2 * H + (hh + 1) * d_k]
        s = lax.dot_general(_bf(q_h), _bf(k_h), (((1,), (1,)), ((), ())),
                            preferred_element_type=jnp.float32)           # [T, T]
        s = s * inv_temp + neg_bias                         # scale + mask keys
        s = s - jnp.max(s, axis=-1, keepdims=True)
        p = jnp.exp(s)
        p = p * pl.reciprocal(jnp.sum(p, axis=-1, keepdims=True), approx=True)
        o_h = jnp.dot(_bf(p), _bf(v_h), preferred_element_type=jnp.float32)  # [T, d_v]
        # per-head output projection against aligned row-slice of Wo
        proj = proj + jnp.dot(_bf(o_h), wo_ref[pl.ds(hh * d_k, d_k), :],
                              preferred_element_type=jnp.float32)
    h = h + proj + bo_ref[...]              # residual (dropout == identity)

    # ---- fc + masked temporal average pool
    y = jnp.dot(_bf(h), wfc_ref[...],
                preferred_element_type=jnp.float32) + bfc_ref[...]        # [T, out]
    y = y * keep
    n_valid = jnp.sum(keep, axis=0, keepdims=True)                        # [1, 1]
    o_ref[...] = (jnp.sum(y, axis=0, keepdims=True) / n_valid).astype(o_ref.dtype)


# ----------------------------------------------------------------------------
# wrapper
# ----------------------------------------------------------------------------
def mel_style_encoder(params, x, mask, cfg):
    """x: [B, T, n_mel] f32, mask: [B, T] bool (True == padded) -> [B, style_dim]"""
    B, T, n_mel = x.shape
    H = cfg["style_hidden"]
    out_dim = cfg["style_vector_dim"]
    ks = cfg["style_kernel_size"]
    n_head = cfg["style_head"]
    assert ks % 2 == 1 and H % n_head == 0
    pad = (ks - 1) // 2
    temperature = float(np.power(H, 0.5))   # StyleSpeech: sqrt(d_model)

    mf = mask.astype(jnp.float32)
    mrow = mf[:, None, :]                   # [B, 1, T]  key mask
    mcol = mf[:, :, None]                   # [B, T, 1]  position mask

    wdt = jnp.bfloat16                      # weights resident in VMEM as bf16
    sw1 = params["spec_w1"].astype(wdt)
    sb1 = params["spec_b1"].reshape(1, H)
    sw2 = params["spec_w2"].astype(wdt)
    sb2 = params["spec_b2"].reshape(1, H)
    c1w = params["conv1_w"].reshape(ks * H, 2 * H).astype(wdt)
    c1b = params["conv1_b"].reshape(1, 2 * H)
    c2w = params["conv2_w"].reshape(ks * H, 2 * H).astype(wdt)
    c2b = params["conv2_b"].reshape(1, 2 * H)
    wqkv = jnp.concatenate([params["wq"], params["wk"], params["wv"]], axis=1).astype(wdt)
    bqkv = jnp.concatenate([params["bq"], params["bk"], params["bv"]]).reshape(1, 3 * H)
    wo = params["wo"].astype(wdt)
    bo = params["bo"].reshape(1, H)
    wfc = params["fc_w"].astype(wdt)
    bfc = params["fc_b"].reshape(1, out_dim)

    kernel = functools.partial(_mel_style_encoder_kernel,
                               T=T, H=H, n_head=n_head, ksize=ks,
                               temperature=temperature)

    def _wspec(shape):
        zeros = (0,) * len(shape)
        return pl.BlockSpec(shape, lambda b, _z=zeros: _z)

    out = pl.pallas_call(
        kernel,
        out_shape=jax.ShapeDtypeStruct((B, 1, out_dim), jnp.float32),
        grid=(B,),
        in_specs=[
            pl.BlockSpec((None, T, n_mel), lambda b: (b, 0, 0)),   # x
            pl.BlockSpec((None, 1, T), lambda b: (b, 0, 0)),       # mask over keys
            pl.BlockSpec((None, T, 1), lambda b: (b, 0, 0)),       # mask over rows
            _wspec((n_mel, H)), _wspec((1, H)),                    # spectral 1
            _wspec((H, H)), _wspec((1, H)),                        # spectral 2
            _wspec((ks * H, 2 * H)), _wspec((1, 2 * H)),           # conv1 (im2col)
            _wspec((ks * H, 2 * H)), _wspec((1, 2 * H)),           # conv2 (im2col)
            _wspec((H, 3 * H)), _wspec((1, 3 * H)),                # fused QKV
            _wspec((H, H)), _wspec((1, H)),                        # attn out proj
            _wspec((H, out_dim)), _wspec((1, out_dim)),            # fc
        ],
        out_specs=pl.BlockSpec((None, 1, out_dim), lambda b: (b, 0, 0)),
        scratch_shapes=[pltpu.VMEM((T + 2 * pad, H), jnp.float32)],
        compiler_params=pltpu.CompilerParams(
            dimension_semantics=("parallel",)),
    )(x, mrow, mcol, sw1, sb1, sw2, sb2, c1w, c1b, c2w, c2b,
      wqkv, bqkv, wo, bo, wfc, bfc)
    return out.reshape(B, out_dim)


# ----------------------------------------------------------------------------
# deterministic parameter init (PyTorch-default-like uniform bounds)
# ----------------------------------------------------------------------------
def init_params(key, cfg):
    n_mel = cfg["n_mel_channels"]
    H = cfg["style_hidden"]
    out_dim = cfg["style_vector_dim"]
    ks = cfg["style_kernel_size"]
    keys = iter(jax.random.split(key, 64))

    def lin(d_in, d_out):
        kw, kb = jax.random.split(next(keys))
        bound = 1.0 / np.sqrt(d_in)
        w = jax.random.uniform(kw, (d_in, d_out), jnp.float32, -bound, bound)
        b = jax.random.uniform(kb, (d_out,), jnp.float32, -bound, bound)
        return w, b

    def conv(k, c_in, c_out):
        kw, kb = jax.random.split(next(keys))
        bound = 1.0 / np.sqrt(c_in * k)
        w = jax.random.uniform(kw, (k, c_in, c_out), jnp.float32, -bound, bound)
        b = jax.random.uniform(kb, (c_out,), jnp.float32, -bound, bound)
        return w, b

    p = {}
    p["spec_w1"], p["spec_b1"] = lin(n_mel, H)
    p["spec_w2"], p["spec_b2"] = lin(H, H)
    p["conv1_w"], p["conv1_b"] = conv(ks, H, 2 * H)     # [k, C_in, C_out]
    p["conv2_w"], p["conv2_b"] = conv(ks, H, 2 * H)
    p["wq"], p["bq"] = lin(H, H)                        # n_head * d_k == H
    p["wk"], p["bk"] = lin(H, H)
    p["wv"], p["bv"] = lin(H, H)
    p["wo"], p["bo"] = lin(H, H)
    p["fc_w"], p["fc_b"] = lin(H, out_dim)
    return p


# ----------------------------------------------------------------------------
# main
# ----------------------------------------------------------------------------
if __name__ == "__main__":
    cfg = dict(
        n_mel_channels=80,
        style_hidden=128,
        style_vector_dim=128,
        style_kernel_size=5,
        style_head=2,
        dropout=0.1,          # identity in eval-mode forward
    )
    B, T = 2, 16

    root = jax.random.PRNGKey(0)
    kp, kx = jax.random.split(root)
    params = init_params(kp, cfg)

    x = jax.random.normal(kx, (B, T, cfg["n_mel_channels"]), jnp.float32)
    lengths = jnp.array([16, 12])
    mask = jnp.arange(T)[None, :] >= lengths[:, None]    # [B, T] bool, True == padded

    w = mel_style_encoder(params, x, mask, cfg)
    jax.block_until_ready(w)

    assert w.shape == (B, cfg["style_vector_dim"])
    assert bool(jnp.all(jnp.isfinite(w)))
    print("KERNEL_OK")
</pallas_src>

<mosaic_0001>
module attributes {stable_mosaic.version = 11 : i64} {
  func.func @_mel_style_encoder_kernel(%arg0: i32, %arg1: memref<1x16x80xf32, #tpu.memory_space<vmem>>, %arg2: memref<1x1x16xf32, #tpu.memory_space<vmem>>, %arg3: memref<1x16x1xf32, #tpu.memory_space<vmem>>, %arg4: memref<80x128xbf16, #tpu.memory_space<vmem>>, %arg5: memref<1x128xf32, #tpu.memory_space<vmem>>, %arg6: memref<128x128xbf16, #tpu.memory_space<vmem>>, %arg7: memref<1x128xf32, #tpu.memory_space<vmem>>, %arg8: memref<640x256xbf16, #tpu.memory_space<vmem>>, %arg9: memref<1x256xf32, #tpu.memory_space<vmem>>, %arg10: memref<640x256xbf16, #tpu.memory_space<vmem>>, %arg11: memref<1x256xf32, #tpu.memory_space<vmem>>, %arg12: memref<128x384xbf16, #tpu.memory_space<vmem>>, %arg13: memref<1x384xf32, #tpu.memory_space<vmem>>, %arg14: memref<128x128xbf16, #tpu.memory_space<vmem>>, %arg15: memref<1x128xf32, #tpu.memory_space<vmem>>, %arg16: memref<128x128xbf16, #tpu.memory_space<vmem>>, %arg17: memref<1x128xf32, #tpu.memory_space<vmem>>, %arg18: memref<1x1x128xf32, #tpu.memory_space<vmem>>, %arg19: memref<20x128xf32, #tpu.memory_space<vmem>>) attributes {dimension_semantics = [#tpu.dimension_semantics<parallel>], iteration_bounds = array<i64: 2>, scalar_prefetch = 0 : i64, scratch_operands = 1 : i64, tpu.core_type = #tpu.core_type<tc>, window_params = [{transform_indices = @transform_0, window_bounds = array<i64: 1, 16, 80>}, {transform_indices = @transform_1, window_bounds = array<i64: 1, 1, 16>}, {transform_indices = @transform_2, window_bounds = array<i64: 1, 16, 1>}, {pipeline_mode = #tpu.pipeline_mode<synchronous>, transform_indices = @transform_3, window_bounds = array<i64: 80, 128>}, {pipeline_mode = #tpu.pipeline_mode<synchronous>, transform_indices = @transform_4, window_bounds = array<i64: 1, 128>}, {pipeline_mode = #tpu.pipeline_mode<synchronous>, transform_indices = @transform_5, window_bounds = array<i64: 128, 128>}, {pipeline_mode = #tpu.pipeline_mode<synchronous>, transform_indices = @transform_6, window_bounds = array<i64: 1, 128>}, {pipeline_mode = #tpu.pipeline_mode<synchronous>, transform_indices = @transform_7, window_bounds = array<i64: 640, 256>}, {pipeline_mode = #tpu.pipeline_mode<synchronous>, transform_indices = @transform_8, window_bounds = array<i64: 1, 256>}, {pipeline_mode = #tpu.pipeline_mode<synchronous>, transform_indices = @transform_9, window_bounds = array<i64: 640, 256>}, {pipeline_mode = #tpu.pipeline_mode<synchronous>, transform_indices = @transform_10, window_bounds = array<i64: 1, 256>}, {pipeline_mode = #tpu.pipeline_mode<synchronous>, transform_indices = @transform_11, window_bounds = array<i64: 128, 384>}, {pipeline_mode = #tpu.pipeline_mode<synchronous>, transform_indices = @transform_12, window_bounds = array<i64: 1, 384>}, {pipeline_mode = #tpu.pipeline_mode<synchronous>, transform_indices = @transform_13, window_bounds = array<i64: 128, 128>}, {pipeline_mode = #tpu.pipeline_mode<synchronous>, transform_indices = @transform_14, window_bounds = array<i64: 1, 128>}, {pipeline_mode = #tpu.pipeline_mode<synchronous>, transform_indices = @transform_15, window_bounds = array<i64: 128, 128>}, {pipeline_mode = #tpu.pipeline_mode<synchronous>, transform_indices = @transform_16, window_bounds = array<i64: 1, 128>}, {transform_indices = @transform_17, window_bounds = array<i64: 1, 1, 128>}]} {
    %c0 = arith.constant 0 : index
    %c0_0 = arith.constant 0 : index
    %c0_1 = arith.constant 0 : index
    %0 = vector.load %arg1[%c0, %c0_0, %c0_1] : memref<1x16x80xf32, #tpu.memory_space<vmem>>, vector<1x16x80xf32>
    %1 = vector.shape_cast %0 : vector<1x16x80xf32> to vector<16x80xf32>
    %c0_2 = arith.constant 0 : index
    %c0_3 = arith.constant 0 : index
    %c0_4 = arith.constant 0 : index
    %2 = vector.load %arg2[%c0_2, %c0_3, %c0_4] : memref<1x1x16xf32, #tpu.memory_space<vmem>>, vector<1x1x16xf32>
    %3 = vector.shape_cast %2 : vector<1x1x16xf32> to vector<1x16xf32>
    %c0_5 = arith.constant 0 : index
    %c0_6 = arith.constant 0 : index
    %c0_7 = arith.constant 0 : index
    %4 = vector.load %arg3[%c0_5, %c0_6, %c0_7] : memref<1x16x1xf32, #tpu.memory_space<vmem>>, vector<1x16x1xf32>
    %5 = vector.shape_cast %4 : vector<1x16x1xf32> to vector<16x1xf32>
    %cst = arith.constant 1.000000e+00 : f32
    %6 = vector.broadcast %cst : f32 to vector<16x1xf32>
    %7 = arith.subf %6, %5 : vector<16x1xf32>
    %cst_8 = arith.constant 0.000000e+00 : f32
    %8 = vector.broadcast %cst_8 : f32 to vector<2x128xf32>
    %c0_9 = arith.constant 0 : index
    %c0_10 = arith.constant 0 : index
    %9 = vector.load %arg19[%c0_9, %c0_10] : memref<20x128xf32, #tpu.memory_space<vmem>>, vector<2x128xf32>
    tpu.vector_store %arg19[%c0_9, %c0_10], %8 {strides = array<i32>} : memref<20x128xf32, #tpu.memory_space<vmem>>, vector<2x128xf32>,
    %cst_11 = arith.constant 0.000000e+00 : f32
    %10 = vector.broadcast %cst_11 : f32 to vector<2x128xf32>
    %c18 = arith.constant 18 : index
    %c0_12 = arith.constant 0 : index
    %11 = vector.load %arg19[%c18, %c0_12] : memref<20x128xf32, #tpu.memory_space<vmem>>, vector<2x128xf32>
    tpu.vector_store %arg19[%c18, %c0_12], %10 {strides = array<i32>} : memref<20x128xf32, #tpu.memory_space<vmem>>, vector<2x128xf32>,
    %12 = arith.truncf %1 : vector<16x80xf32> to vector<16x80xbf16>
    %c0_13 = arith.constant 0 : index
    %c0_14 = arith.constant 0 : index
    %13 = vector.load %arg4[%c0_13, %c0_14] : memref<80x128xbf16, #tpu.memory_space<vmem>>, vector<80x128xbf16>
    %cst_15 = arith.constant dense<0.000000e+00> : vector<16x128xf32>
    %14 = tpu.matmul %12, %13, %cst_15 {dimension_numbers = #tpu.dot_dimension_numbers<[1], [0], [0], [1], [0, 0, 1, 1], [], []>} : vector<16x80xbf16>, vector<80x128xbf16>, vector<16x128xf32> -> vector<16x128xf32>
    %c0_16 = arith.constant 0 : index
    %c0_17 = arith.constant 0 : index
    %15 = vector.load %arg5[%c0_16, %c0_17] : memref<1x128xf32, #tpu.memory_space<vmem>>, vector<1x128xf32>
    %16 = vector.broadcast %15 : vector<1x128xf32> to vector<16x128xf32>
    %17 = arith.addf %14, %16 : vector<16x128xf32>
    %cst_18 = arith.constant 2.000000e+01 : f32
    %18 = vector.broadcast %cst_18 : f32 to vector<16x128xf32>
    %19 = arith.minimumf %17, %18 : vector<16x128xf32>
    %20 = math.exp %19 : vector<16x128xf32>
    %cst_19 = arith.constant 2.000000e+00 : f32
    %21 = vector.broadcast %cst_19 : f32 to vector<16x128xf32>
    %22 = arith.addf %20, %21 : vector<16x128xf32>
    %23 = arith.mulf %20, %22 : vector<16x128xf32>
    %cst_20 = arith.constant 2.000000e+00 : f32
    %24 = vector.broadcast %cst_20 : f32 to vector<16x128xf32>
    %25 = arith.addf %23, %24 : vector<16x128xf32>
    %26 = tpu.reciprocal %25 {approx = true} : vector<16x128xf32> -> vector<16x128xf32>
    %27 = arith.mulf %23, %26 : vector<16x128xf32>
    %28 = arith.mulf %17, %27 : vector<16x128xf32>
    %29 = arith.truncf %28 : vector<16x128xf32> to vector<16x128xbf16>
    %c0_21 = arith.constant 0 : index
    %c0_22 = arith.constant 0 : index
    %30 = vector.load %arg6[%c0_21, %c0_22] : memref<128x128xbf16, #tpu.memory_space<vmem>>, vector<128x128xbf16>
    %cst_23 = arith.constant dense<0.000000e+00> : vector<16x128xf32>
    %31 = tpu.matmul %29, %30, %cst_23 {dimension_numbers = #tpu.dot_dimension_numbers<[1], [0], [0], [1], [0, 0, 1, 1], [], []>} : vector<16x128xbf16>, vector<128x128xbf16>, vector<16x128xf32> -> vector<16x128xf32>
    %c0_24 = arith.constant 0 : index
    %c0_25 = arith.constant 0 : index
    %32 = vector.load %arg7[%c0_24, %c0_25] : memref<1x128xf32, #tpu.memory_space<vmem>>, vector<1x128xf32>
    %33 = vector.broadcast %32 : vector<1x128xf32> to vector<16x128xf32>
    %34 = arith.addf %31, %33 : vector<16x128xf32>
    %cst_26 = arith.constant 2.000000e+01 : f32
    %35 = vector.broadcast %cst_26 : f32 to vector<16x128xf32>
    %36 = arith.minimumf %34, %35 : vector<16x128xf32>
    %37 = math.exp %36 : vector<16x128xf32>
    %cst_27 = arith.constant 2.000000e+00 : f32
    %38 = vector.broadcast %cst_27 : f32 to vector<16x128xf32>
    %39 = arith.addf %37, %38 : vector<16x128xf32>
    %40 = arith.mulf %37, %39 : vector<16x128xf32>
    %cst_28 = arith.constant 2.000000e+00 : f32
    %41 = vector.broadcast %cst_28 : f32 to vector<16x128xf32>
    %42 = arith.addf %40, %41 : vector<16x128xf32>
    %43 = tpu.reciprocal %42 {approx = true} : vector<16x128xf32> -> vector<16x128xf32>
    %44 = arith.mulf %40, %43 : vector<16x128xf32>
    %45 = arith.mulf %34, %44 : vector<16x128xf32>
    %c2 = arith.constant 2 : index
    %c0_29 = arith.constant 0 : index
    %46 = vector.load %arg19[%c2, %c0_29] : memref<20x128xf32, #tpu.memory_space<vmem>>, vector<16x128xf32>
    tpu.vector_store %arg19[%c2, %c0_29], %45 {strides = array<i32>} : memref<20x128xf32, #tpu.memory_space<vmem>>, vector<16x128xf32>,
    %c0_30 = arith.constant 0 : index
    %c0_31 = arith.constant 0 : index
    %47 = vector.load %arg19[%c0_30, %c0_31] : memref<20x128xf32, #tpu.memory_space<vmem>>, vector<16x128xf32>
    %c1 = arith.constant 1 : index
    %c0_32 = arith.constant 0 : index
    %48 = vector.load %arg19[%c1, %c0_32] : memref<20x128xf32, #tpu.memory_space<vmem>>, vector<16x128xf32>
    %c2_33 = arith.constant 2 : index
    %c0_34 = arith.constant 0 : index
    %49 = vector.load %arg19[%c2_33, %c0_34] : memref<20x128xf32, #tpu.memory_space<vmem>>, vector<16x128xf32>
    %c3 = arith.constant 3 : index
    %c0_35 = arith.constant 0 : index
    %50 = vector.load %arg19[%c3, %c0_35] : memref<20x128xf32, #tpu.memory_space<vmem>>, vector<16x128xf32>
    %c4 = arith.constant 4 : index
    %c0_36 = arith.constant 0 : index
    %51 = vector.load %arg19[%c4, %c0_36] : memref<20x128xf32, #tpu.memory_space<vmem>>, vector<16x128xf32>
    %52 = tpu.concatenate %47, %48, %49, %50, %51 in 1 : vector<16x128xf32>, vector<16x128xf32>, vector<16x128xf32>, vector<16x128xf32>, vector<16x128xf32> -> vector<16x640xf32>
    %53 = arith.truncf %52 : vector<16x640xf32> to vector<16x640xbf16>
    %c0_37 = arith.constant 0 : index
    %c0_38 = arith.constant 0 : index
    %54 = vector.load %arg8[%c0_37, %c0_38] : memref<640x256xbf16, #tpu.memory_space<vmem>>, vector<640x256xbf16>
    %cst_39 = arith.constant dense<0.000000e+00> : vector<16x256xf32>
    %55 = tpu.matmul %53, %54, %cst_39 {dimension_numbers = #tpu.dot_dimension_numbers<[1], [0], [0], [1], [0, 0, 1, 1], [], []>} : vector<16x640xbf16>, vector<640x256xbf16>, vector<16x256xf32> -> vector<16x256xf32>
    %c0_40 = arith.constant 0 : index
    %c0_41 = arith.constant 0 : index
    %56 = vector.load %arg9[%c0_40, %c0_41] : memref<1x256xf32, #tpu.memory_space<vmem>>, vector<1x256xf32>
    %57 = vector.broadcast %56 : vector<1x256xf32> to vector<16x256xf32>
    %58 = arith.addf %55, %57 : vector<16x256xf32>
    %59 = vector.extract_strided_slice %58 {offsets = [0, 0], sizes = [16, 128], strides = [1, 1]} : vector<16x256xf32> to vector<16x128xf32>
    %60 = vector.extract_strided_slice %58 {offsets = [0, 128], sizes = [16, 128], strides = [1, 1]} : vector<16x256xf32> to vector<16x128xf32>
    %cst_42 = arith.constant 0.000000e+00 : f32
    %61 = vector.broadcast %cst_42 : f32 to vector<16x128xf32>
    %62 = arith.subf %61, %60 : vector<16x128xf32>
    %63 = math.exp %62 : vector<16x128xf32>
    %cst_43 = arith.constant 1.000000e+00 : f32
    %64 = vector.broadcast %cst_43 : f32 to vector<16x128xf32>
    %65 = arith.addf %64, %63 : vector<16x128xf32>
    %66 = tpu.reciprocal %65 {approx = true} : vector<16x128xf32> -> vector<16x128xf32>
    %67 = arith.mulf %59, %66 : vector<16x128xf32>
    %68 = arith.addf %45, %67 : vector<16x128xf32>
    %c2_44 = arith.constant 2 : index
    %c0_45 = arith.constant 0 : index
    %69 = vector.load %arg19[%c2_44, %c0_45] : memref<20x128xf32, #tpu.memory_space<vmem>>, vector<16x128xf32>
    tpu.vector_store %arg19[%c2_44, %c0_45], %68 {strides = array<i32>} : memref<20x128xf32, #tpu.memory_space<vmem>>, vector<16x128xf32>,
    %c0_46 = arith.constant 0 : index
    %c0_47 = arith.constant 0 : index
    %70 = vector.load %arg19[%c0_46, %c0_47] : memref<20x128xf32, #tpu.memory_space<vmem>>, vector<16x128xf32>
    %c1_48 = arith.constant 1 : index
    %c0_49 = arith.constant 0 : index
    %71 = vector.load %arg19[%c1_48, %c0_49] : memref<20x128xf32, #tpu.memory_space<vmem>>, vector<16x128xf32>
    %c2_50 = arith.constant 2 : index
    %c0_51 = arith.constant 0 : index
    %72 = vector.load %arg19[%c2_50, %c0_51] : memref<20x128xf32, #tpu.memory_space<vmem>>, vector<16x128xf32>
    %c3_52 = arith.constant 3 : index
    %c0_53 = arith.constant 0 : index
    %73 = vector.load %arg19[%c3_52, %c0_53] : memref<20x128xf32, #tpu.memory_space<vmem>>, vector<16x128xf32>
    %c4_54 = arith.constant 4 : index
    %c0_55 = arith.constant 0 : index
    %74 = vector.load %arg19[%c4_54, %c0_55] : memref<20x128xf32, #tpu.memory_space<vmem>>, vector<16x128xf32>
    %75 = tpu.concatenate %70, %71, %72, %73, %74 in 1 : vector<16x128xf32>, vector<16x128xf32>, vector<16x128xf32>, vector<16x128xf32>, vector<16x128xf32> -> vector<16x640xf32>
    %76 = arith.truncf %75 : vector<16x640xf32> to vector<16x640xbf16>
    %c0_56 = arith.constant 0 : index
    %c0_57 = arith.constant 0 : index
    %77 = vector.load %arg10[%c0_56, %c0_57] : memref<640x256xbf16, #tpu.memory_space<vmem>>, vector<640x256xbf16>
    %cst_58 = arith.constant dense<0.000000e+00> : vector<16x256xf32>
    %78 = tpu.matmul %76, %77, %cst_58 {dimension_numbers = #tpu.dot_dimension_numbers<[1], [0], [0], [1], [0, 0, 1, 1], [], []>} : vector<16x640xbf16>, vector<640x256xbf16>, vector<16x256xf32> -> vector<16x256xf32>
    %c0_59 = arith.constant 0 : index
    %c0_60 = arith.constant 0 : index
    %79 = vector.load %arg11[%c0_59, %c0_60] : memref<1x256xf32, #tpu.memory_space<vmem>>, vector<1x256xf32>
    %80 = vector.broadcast %79 : vector<1x256xf32> to vector<16x256xf32>
    %81 = arith.addf %78, %80 : vector<16x256xf32>
    %82 = vector.extract_strided_slice %81 {offsets = [0, 0], sizes = [16, 128], strides = [1, 1]} : vector<16x256xf32> to vector<16x128xf32>
    %83 = vector.extract_strided_slice %81 {offsets = [0, 128], sizes = [16, 128], strides = [1, 1]} : vector<16x256xf32> to vector<16x128xf32>
    %cst_61 = arith.constant 0.000000e+00 : f32
    %84 = vector.broadcast %cst_61 : f32 to vector<16x128xf32>
    %85 = arith.subf %84, %83 : vector<16x128xf32>
    %86 = math.exp %85 : vector<16x128xf32>
    %cst_62 = arith.constant 1.000000e+00 : f32
    %87 = vector.broadcast %cst_62 : f32 to vector<16x128xf32>
    %88 = arith.addf %87, %86 : vector<16x128xf32>
    %89 = tpu.reciprocal %88 {approx = true} : vector<16x128xf32> -> vector<16x128xf32>
    %90 = arith.mulf %82, %89 : vector<16x128xf32>
    %91 = arith.addf %68, %90 : vector<16x128xf32>
    %92 = vector.broadcast %7 : vector<16x1xf32> to vector<16x128xf32>
    %93 = arith.mulf %91, %92 : vector<16x128xf32>
    %94 = arith.truncf %93 : vector<16x128xf32> to vector<16x128xbf16>
    %c0_63 = arith.constant 0 : index
    %c0_64 = arith.constant 0 : index
    %95 = vector.load %arg12[%c0_63, %c0_64] : memref<128x384xbf16, #tpu.memory_space<vmem>>, vector<128x384xbf16>
    %cst_65 = arith.constant dense<0.000000e+00> : vector<16x384xf32>
    %96 = tpu.matmul %94, %95, %cst_65 {dimension_numbers = #tpu.dot_dimension_numbers<[1], [0], [0], [1], [0, 0, 1, 1], [], []>} : vector<16x128xbf16>, vector<128x384xbf16>, vector<16x384xf32> -> vector<16x384xf32>
    %c0_66 = arith.constant 0 : index
    %c0_67 = arith.constant 0 : index
    %97 = vector.load %arg13[%c0_66, %c0_67] : memref<1x384xf32, #tpu.memory_space<vmem>>, vector<1x384xf32>
    %98 = vector.broadcast %97 : vector<1x384xf32> to vector<16x384xf32>
    %99 = arith.addf %96, %98 : vector<16x384xf32>
    %cst_68 = arith.constant -1.000000e+30 : f32
    %100 = vector.broadcast %cst_68 : f32 to vector<1x16xf32>
    %101 = arith.mulf %3, %100 : vector<1x16xf32>
    %cst_69 = arith.constant 0.000000e+00 : f32
    %102 = vector.broadcast %cst_69 : f32 to vector<16x128xf32>
    %103 = vector.extract_strided_slice %99 {offsets = [0, 0], sizes = [16, 64], strides = [1, 1]} : vector<16x384xf32> to vector<16x64xf32>
    %104 = vector.extract_strided_slice %99 {offsets = [0, 128], sizes = [16, 64], strides = [1, 1]} : vector<16x384xf32> to vector<16x64xf32>
    %105 = vector.extract_strided_slice %99 {offsets = [0, 256], sizes = [16, 64], strides = [1, 1]} : vector<16x384xf32> to vector<16x64xf32>
    %106 = arith.truncf %103 : vector<16x64xf32> to vector<16x64xbf16>
    %107 = arith.truncf %104 : vector<16x64xf32> to vector<16x64xbf16>
    %cst_70 = arith.constant dense<0.000000e+00> : vector<16x16xf32>
    %108 = tpu.matmul %106, %107, %cst_70 {dimension_numbers = #tpu.dot_dimension_numbers<[1], [1], [0], [0], [0, 0, 1, 0], [], []>} : vector<16x64xbf16>, vector<16x64xbf16>, vector<16x16xf32> -> vector<16x16xf32>
    %cst_71 = arith.constant 0.0883883461 : f32
    %109 = vector.broadcast %cst_71 : f32 to vector<16x16xf32>
    %110 = arith.mulf %108, %109 : vector<16x16xf32>
    %111 = vector.broadcast %101 : vector<1x16xf32> to vector<16x16xf32>
    %112 = arith.addf %110, %111 : vector<16x16xf32>
    %cst_72 = arith.constant dense<0xFF800000> : vector<16xf32>
    %113 = vector.multi_reduction <maximumf>, %112, %cst_72 [1] : vector<16x16xf32> to vector<16xf32>
    %114 = vector.shape_cast %113 : vector<16xf32> to vector<16x1xf32>
    %115 = vector.broadcast %114 : vector<16x1xf32> to vector<16x16xf32>
    %116 = arith.subf %112, %115 : vector<16x16xf32>
    %117 = math.exp %116 : vector<16x16xf32>
    %cst_73 = arith.constant dense<0.000000e+00> : vector<16xf32>
    %118 = vector.multi_reduction <add>, %117, %cst_73 [1] : vector<16x16xf32> to vector<16xf32>
    %119 = vector.shape_cast %118 : vector<16xf32> to vector<16x1xf32>
    %120 = tpu.reciprocal %119 {approx = true} : vector<16x1xf32> -> vector<16x1xf32>
    %121 = vector.broadcast %120 : vector<16x1xf32> to vector<16x16xf32>
    %122 = arith.mulf %117, %121 : vector<16x16xf32>
    %123 = arith.truncf %122 : vector<16x16xf32> to vector<16x16xbf16>
    %124 = arith.truncf %105 : vector<16x64xf32> to vector<16x64xbf16>
    %cst_74 = arith.constant dense<0.000000e+00> : vector<16x64xf32>
    %125 = tpu.matmul %123, %124, %cst_74 {dimension_numbers = #tpu.dot_dimension_numbers<[1], [0], [0], [1], [0, 0, 1, 1], [], []>} : vector<16x16xbf16>, vector<16x64xbf16>, vector<16x64xf32> -> vector<16x64xf32>
    %126 = arith.truncf %125 : vector<16x64xf32> to vector<16x64xbf16>
    %c0_75 = arith.constant 0 : index
    %c0_76 = arith.constant 0 : index
    %127 = vector.load %arg14[%c0_75, %c0_76] : memref<128x128xbf16, #tpu.memory_space<vmem>>, vector<64x128xbf16>
    %cst_77 = arith.constant dense<0.000000e+00> : vector<16x128xf32>
    %128 = tpu.matmul %126, %127, %cst_77 {dimension_numbers = #tpu.dot_dimension_numbers<[1], [0], [0], [1], [0, 0, 1, 1], [], []>} : vector<16x64xbf16>, vector<64x128xbf16>, vector<16x128xf32> -> vector<16x128xf32>
    %129 = arith.addf %102, %128 : vector<16x128xf32>
    %130 = vector.extract_strided_slice %99 {offsets = [0, 64], sizes = [16, 64], strides = [1, 1]} : vector<16x384xf32> to vector<16x64xf32>
    %131 = vector.extract_strided_slice %99 {offsets = [0, 192], sizes = [16, 64], strides = [1, 1]} : vector<16x384xf32> to vector<16x64xf32>
    %132 = vector.extract_strided_slice %99 {offsets = [0, 320], sizes = [16, 64], strides = [1, 1]} : vector<16x384xf32> to vector<16x64xf32>
    %133 = arith.truncf %130 : vector<16x64xf32> to vector<16x64xbf16>
    %134 = arith.truncf %131 : vector<16x64xf32> to vector<16x64xbf16>
    %cst_78 = arith.constant dense<0.000000e+00> : vector<16x16xf32>
    %135 = tpu.matmul %133, %134, %cst_78 {dimension_numbers = #tpu.dot_dimension_numbers<[1], [1], [0], [0], [0, 0, 1, 0], [], []>} : vector<16x64xbf16>, vector<16x64xbf16>, vector<16x16xf32> -> vector<16x16xf32>
    %cst_79 = arith.constant 0.0883883461 : f32
    %136 = vector.broadcast %cst_79 : f32 to vector<16x16xf32>
    %137 = arith.mulf %135, %136 : vector<16x16xf32>
    %138 = vector.broadcast %101 : vector<1x16xf32> to vector<16x16xf32>
    %139 = arith.addf %137, %138 : vector<16x16xf32>
    %cst_80 = arith.constant dense<0xFF800000> : vector<16xf32>
    %140 = vector.multi_reduction <maximumf>, %139, %cst_80 [1] : vector<16x16xf32> to vector<16xf32>
    %141 = vector.shape_cast %140 : vector<16xf32> to vector<16x1xf32>
    %142 = vector.broadcast %141 : vector<16x1xf32> to vector<16x16xf32>
    %143 = arith.subf %139, %142 : vector<16x16xf32>
    %144 = math.exp %143 : vector<16x16xf32>
    %cst_81 = arith.constant dense<0.000000e+00> : vector<16xf32>
    %145 = vector.multi_reduction <add>, %144, %cst_81 [1] : vector<16x16xf32> to vector<16xf32>
    %146 = vector.shape_cast %145 : vector<16xf32> to vector<16x1xf32>
    %147 = tpu.reciprocal %146 {approx = true} : vector<16x1xf32> -> vector<16x1xf32>
    %148 = vector.broadcast %147 : vector<16x1xf32> to vector<16x16xf32>
    %149 = arith.mulf %144, %148 : vector<16x16xf32>
    %150 = arith.truncf %149 : vector<16x16xf32> to vector<16x16xbf16>
    %151 = arith.truncf %132 : vector<16x64xf32> to vector<16x64xbf16>
    %cst_82 = arith.constant dense<0.000000e+00> : vector<16x64xf32>
    %152 = tpu.matmul %150, %151, %cst_82 {dimension_numbers = #tpu.dot_dimension_numbers<[1], [0], [0], [1], [0, 0, 1, 1], [], []>} : vector<16x16xbf16>, vector<16x64xbf16>, vector<16x64xf32> -> vector<16x64xf32>
    %153 = arith.truncf %152 : vector<16x64xf32> to vector<16x64xbf16>
    %c64 = arith.constant 64 : index
    %c0_83 = arith.constant 0 : index
    %154 = vector.load %arg14[%c64, %c0_83] : memref<128x128xbf16, #tpu.memory_space<vmem>>, vector<64x128xbf16>
    %cst_84 = arith.constant dense<0.000000e+00> : vector<16x128xf32>
    %155 = tpu.matmul %153, %154, %cst_84 {dimension_numbers = #tpu.dot_dimension_numbers<[1], [0], [0], [1], [0, 0, 1, 1], [], []>} : vector<16x64xbf16>, vector<64x128xbf16>, vector<16x128xf32> -> vector<16x128xf32>
    %156 = arith.addf %129, %155 : vector<16x128xf32>
    %157 = arith.addf %93, %156 : vector<16x128xf32>
    %c0_85 = arith.constant 0 : index
    %c0_86 = arith.constant 0 : index
    %158 = vector.load %arg15[%c0_85, %c0_86] : memref<1x128xf32, #tpu.memory_space<vmem>>, vector<1x128xf32>
    %159 = vector.broadcast %158 : vector<1x128xf32> to vector<16x128xf32>
    %160 = arith.addf %157, %159 : vector<16x128xf32>
    %161 = arith.truncf %160 : vector<16x128xf32> to vector<16x128xbf16>
    %c0_87 = arith.constant 0 : index
    %c0_88 = arith.constant 0 : index
    %162 = vector.load %arg16[%c0_87, %c0_88] : memref<128x128xbf16, #tpu.memory_space<vmem>>, vector<128x128xbf16>
    %cst_89 = arith.constant dense<0.000000e+00> : vector<16x128xf32>
    %163 = tpu.matmul %161, %162, %cst_89 {dimension_numbers = #tpu.dot_dimension_numbers<[1], [0], [0], [1], [0, 0, 1, 1], [], []>} : vector<16x128xbf16>, vector<128x128xbf16>, vector<16x128xf32> -> vector<16x128xf32>
    %c0_90 = arith.constant 0 : index
    %c0_91 = arith.constant 0 : index
    %164 = vector.load %arg17[%c0_90, %c0_91] : memref<1x128xf32, #tpu.memory_space<vmem>>, vector<1x128xf32>
    %165 = vector.broadcast %164 : vector<1x128xf32> to vector<16x128xf32>
    %166 = arith.addf %163, %165 : vector<16x128xf32>
    %167 = vector.broadcast %7 : vector<16x1xf32> to vector<16x128xf32>
    %168 = arith.mulf %166, %167 : vector<16x128xf32>
    %cst_92 = arith.constant dense<0.000000e+00> : vector<1xf32>
    %169 = vector.multi_reduction <add>, %7, %cst_92 [0] : vector<16x1xf32> to vector<1xf32>
    %170 = vector.shape_cast %169 : vector<1xf32> to vector<1x1xf32>
    %cst_93 = arith.constant dense<0.000000e+00> : vector<128xf32>
    %171 = vector.multi_reduction <add>, %168, %cst_93 [0] : vector<16x128xf32> to vector<128xf32>
    %172 = vector.shape_cast %171 : vector<128xf32> to vector<1x128xf32>
    %173 = vector.broadcast %170 : vector<1x1xf32> to vector<1x128xf32>
    %174 = arith.divf %172, %173 : vector<1x128xf32>
    %c0_94 = arith.constant 0 : index
    %c0_95 = arith.constant 0 : index
    %c0_96 = arith.constant 0 : index
    %175 = vector.load %arg18[%c0_94, %c0_95, %c0_96] : memref<1x1x128xf32, #tpu.memory_space<vmem>>, vector<1x1x128xf32>
    %176 = vector.shape_cast %175 : vector<1x1x128xf32> to vector<1x128xf32>
    %177 = vector.shape_cast %174 : vector<1x128xf32> to vector<1x1x128xf32>
    tpu.vector_store %arg18[%c0_94, %c0_95, %c0_96], %177 {strides = array<i32>} : memref<1x1x128xf32, #tpu.memory_space<vmem>>, vector<1x1x128xf32>,
    return
  }
  func.func @transform_0(%arg0: i32) -> (i32, i32, i32) {
    %c0_i32 = arith.constant 0 : i32
    %c0_i32_0 = arith.constant 0 : i32
    %c0_i32_1 = arith.constant 0 : i32
    return %arg0, %c0_i32, %c0_i32_0 : i32, i32, i32
  }
  func.func @transform_1(%arg0: i32) -> (i32, i32, i32) {
    %c0_i32 = arith.constant 0 : i32
    %c0_i32_0 = arith.constant 0 : i32
    %c0_i32_1 = arith.constant 0 : i32
    return %arg0, %c0_i32, %c0_i32_0 : i32, i32, i32
  }
  func.func @transform_2(%arg0: i32) -> (i32, i32, i32) {
    %c0_i32 = arith.constant 0 : i32
    %c0_i32_0 = arith.constant 0 : i32
    %c0_i32_1 = arith.constant 0 : i32
    return %arg0, %c0_i32, %c0_i32_0 : i32, i32, i32
  }
  func.func @transform_3(%arg0: i32) -> (i32, i32) {
    %c0_i32 = arith.constant 0 : i32
    %c0_i32_0 = arith.constant 0 : i32
    %c0_i32_1 = arith.constant 0 : i32
    return %c0_i32, %c0_i32_0 : i32, i32
  }
  func.func @transform_4(%arg0: i32) -> (i32, i32) {
    %c0_i32 = arith.constant 0 : i32
    %c0_i32_0 = arith.constant 0 : i32
    %c0_i32_1 = arith.constant 0 : i32
    return %c0_i32, %c0_i32_0 : i32, i32
  }
  func.func @transform_5(%arg0: i32) -> (i32, i32) {
    %c0_i32 = arith.constant 0 : i32
    %c0_i32_0 = arith.constant 0 : i32
    %c0_i32_1 = arith.constant 0 : i32
    return %c0_i32, %c0_i32_0 : i32, i32
  }
  func.func @transform_6(%arg0: i32) -> (i32, i32) {
    %c0_i32 = arith.constant 0 : i32
    %c0_i32_0 = arith.constant 0 : i32
    %c0_i32_1 = arith.constant 0 : i32
    return %c0_i32, %c0_i32_0 : i32, i32
  }
  func.func @transform_7(%arg0: i32) -> (i32, i32) {
    %c0_i32 = arith.constant 0 : i32
    %c0_i32_0 = arith.constant 0 : i32
    %c0_i32_1 = arith.constant 0 : i32
    return %c0_i32, %c0_i32_0 : i32, i32
  }
  func.func @transform_8(%arg0: i32) -> (i32, i32) {
    %c0_i32 = arith.constant 0 : i32
    %c0_i32_0 = arith.constant 0 : i32
    %c0_i32_1 = arith.constant 0 : i32
    return %c0_i32, %c0_i32_0 : i32, i32
  }
  func.func @transform_9(%arg0: i32) -> (i32, i32) {
    %c0_i32 = arith.constant 0 : i32
    %c0_i32_0 = arith.constant 0 : i32
    %c0_i32_1 = arith.constant 0 : i32
    return %c0_i32, %c0_i32_0 : i32, i32
  }
  func.func @transform_10(%arg0: i32) -> (i32, i32) {
    %c0_i32 = arith.constant 0 : i32
    %c0_i32_0 = arith.constant 0 : i32
    %c0_i32_1 = arith.constant 0 : i32
    return %c0_i32, %c0_i32_0 : i32, i32
  }
  func.func @transform_11(%arg0: i32) -> (i32, i32) {
    %c0_i32 = arith.constant 0 : i32
    %c0_i32_0 = arith.constant 0 : i32
    %c0_i32_1 = arith.constant 0 : i32
    return %c0_i32, %c0_i32_0 : i32, i32
  }
  func.func @transform_12(%arg0: i32) -> (i32, i32) {
    %c0_i32 = arith.constant 0 : i32
    %c0_i32_0 = arith.constant 0 : i32
    %c0_i32_1 = arith.constant 0 : i32
    return %c0_i32, %c0_i32_0 : i32, i32
  }
  func.func @transform_13(%arg0: i32) -> (i32, i32) {
    %c0_i32 = arith.constant 0 : i32
    %c0_i32_0 = arith.constant 0 : i32
    %c0_i32_1 = arith.constant 0 : i32
    return %c0_i32, %c0_i32_0 : i32, i32
  }
  func.func @transform_14(%arg0: i32) -> (i32, i32) {
    %c0_i32 = arith.constant 0 : i32
    %c0_i32_0 = arith.constant 0 : i32
    %c0_i32_1 = arith.constant 0 : i32
    return %c0_i32, %c0_i32_0 : i32, i32
  }
  func.func @transform_15(%arg0: i32) -> (i32, i32) {
    %c0_i32 = arith.constant 0 : i32
    %c0_i32_0 = arith.constant 0 : i32
    %c0_i32_1 = arith.constant 0 : i32
    return %c0_i32, %c0_i32_0 : i32, i32
  }
  func.func @transform_16(%arg0: i32) -> (i32, i32) {
    %c0_i32 = arith.constant 0 : i32
    %c0_i32_0 = arith.constant 0 : i32
    %c0_i32_1 = arith.constant 0 : i32
    return %c0_i32, %c0_i32_0 : i32, i32
  }
  func.func @transform_17(%arg0: i32) -> (i32, i32, i32) {
    %c0_i32 = arith.constant 0 : i32
    %c0_i32_0 = arith.constant 0 : i32
    %c0_i32_1 = arith.constant 0 : i32
    return %arg0, %c0_i32, %c0_i32_0 : i32, i32, i32
  }
}

</mosaic_0001>

<llo_original>
// kernel: tpu_custom_call.1
$region0: #{tpu_custom_call.1}
  #allocation0 [shape = 'u32[]', space=smem, size = 0x4, offset = 0x4, fixed_abs, tag = 'smem constant byte address 0x4 - core index']
  #allocation1 [shape = 'u32[144,128]{1,0:T(1,128)}', space=vmem, size = 0x12000, scoped, tag = 'internal scratch']
  #allocation2 [shape = 'f32[20,128]{1,0:T(8,128)}', space=vmem, size = 0x3000, scoped, tag = 'scratch operand']
  %s0 = inlined_call_operand.hbm [shape: f32[2,16,80], index: 0, kind: input, shape index: {}]
  %s1 = inlined_call_operand.vmem [shape: f32[2,1,16], index: 1, kind: input, shape index: {}]
  %s2 = inlined_call_operand.vmem [shape: f32[2,16,1], index: 2, kind: input, shape index: {}]
  %s3 = inlined_call_operand.hbm [shape: bf16[80,128], index: 3, kind: input, shape index: {}]
  %s4 = inlined_call_operand.vmem [shape: f32[1,128], index: 4, kind: input, shape index: {}]
  %s5 = inlined_call_operand.hbm [shape: bf16[128,128], index: 5, kind: input, shape index: {}]
  %s6 = inlined_call_operand.vmem [shape: f32[1,128], index: 6, kind: input, shape index: {}]
  %s7 = inlined_call_operand.hbm [shape: bf16[640,256], index: 7, kind: input, shape index: {}]
  %s8 = inlined_call_operand.vmem [shape: f32[1,256], index: 8, kind: input, shape index: {}]
  %s9 = inlined_call_operand.hbm [shape: bf16[640,256], index: 9, kind: input, shape index: {}]
  %s10 = inlined_call_operand.vmem [shape: f32[1,256], index: 10, kind: input, shape index: {}]
  %s11 = inlined_call_operand.hbm [shape: bf16[128,384], index: 11, kind: input, shape index: {}]
  %s12 = inlined_call_operand.vmem [shape: f32[1,384], index: 12, kind: input, shape index: {}]
  %s13 = inlined_call_operand.vmem [shape: bf16[128,128], index: 13, kind: input, shape index: {}]
  %s14 = inlined_call_operand.vmem [shape: f32[1,128], index: 14, kind: input, shape index: {}]
  %s15 = inlined_call_operand.hbm [shape: bf16[128,128], index: 15, kind: input, shape index: {}]
  %s16 = inlined_call_operand.vmem [shape: f32[1,128], index: 16, kind: input, shape index: {}]
  %s17 = inlined_call_operand.hbm [shape: f32[2,1,128], index: 17, kind: output, shape index: {}]
  %s18 = sld [smem:[#allocation0]]
  $region129: #{tpu_custom_call.1} parent=0
    _
  %s20 = ssub.s32 1, %s18
  %s21 = scalar_select 0, %s20, %s18
  $region1: #{tpu_custom_call.1} parent=0
    #allocation3 [shape = 'u8[16384]{0}', space=vmem, size = 0x4000, scoped, tag = 'input window, operand 0']
    #allocation4 [shape = 's32[2]{0}', space=sflag, size = 0x8, scoped, tag = 'scoped memory for tpu_custom_call.1']
    #allocation5 [shape = 's32[2]{0}', space=sflag, size = 0x8, scoped, tag = 'scoped memory for tpu_custom_call.1']
    #allocation6 [shape = 'u8[20480]{0}', space=vmem, size = 0x5000, scoped, tag = 'input window, operand 3, single buffered']
    #allocation7 [shape = 's32[1]{0}', space=sflag, size = 0x4, scoped, tag = 'scoped memory for tpu_custom_call.1']
    #allocation8 [shape = 'u8[32768]{0}', space=vmem, size = 0x8000, scoped, tag = 'input window, operand 5, single buffered']
    #allocation9 [shape = 'u8[327680]{0}', space=vmem, size = 0x50000, scoped, tag = 'input window, operand 7, single buffered']
    #allocation10 [shape = 's32[1]{0}', space=sflag, size = 0x4, scoped, tag = 'scoped memory for tpu_custom_call.1']
    #allocation11 [shape = 'u8[327680]{0}', space=vmem, size = 0x50000, scoped, tag = 'input window, operand 9, single buffered']
    #allocation12 [shape = 'u8[98304]{0}', space=vmem, size = 0x18000, scoped, tag = 'input window, operand 11, single buffered']
    #allocation13 [shape = 's32[1]{0}', space=sflag, size = 0x4, scoped, tag = 'scoped memory for tpu_custom_call.1']
    #allocation14 [shape = 'u8[32768]{0}', space=vmem, size = 0x8000, scoped, tag = 'input window, operand 15, single buffered']
    #allocation15 [shape = 'u8[1024]{0}', space=vmem, size = 0x400, scoped, tag = 'output window, operand 0']
    %22 = vsyncpa [#allocation4], 0
    %s23 = scalar_lea.sflag [#allocation4], 1
    %24 = vsyncpa %s23, 0
    %25 = vsyncpa [#allocation7], 0
    %26 = vsyncpa [#allocation10], 0
    %27 = vsyncpa [#allocation13], 0
    %28 = vsyncpa [#allocation5], 0
    %s29 = scalar_lea.sflag [#allocation5], 1
    %30 = vsyncpa %s29, 0
    loop: start=0, step=1, limit=4
    $region2: #{tpu_custom_call.1} parent=1 // loop_pre_header
      _
    $region3: #{tpu_custom_call.1} parent=1 // loop_header
      %s32 = sphi 0, %s36
      %p33 = scmp.ge.s32.totalorder %s32, 4
      %s42 = sphi 0, %s44
      %s45 = sphi 0, %s42
      %s46 = sphi 0, %s45
      %s62 = sphi 0, %s46
      %s68 = sphi 0, %s70
      %s71 = sphi 0, %s68
      %s72 = sphi 0, %s71
      %s88 = sphi 0, %s72
      %s94 = sphi 0, %s96
      %s97 = sphi 0, %s94
      %s98 = sphi 0, %s97
      %s114 = sphi 0, %s98
      %s118 = sphi 0, %s118
      %s120 = sphi 0, %s118
      %s121 = sphi 0, %s120
      %s135 = sphi 0, %s121
      %s139 = sphi 0, %s139
      %s141 = sphi 0, %s139
      %s142 = sphi 0, %s141
      %s156 = sphi 0, %s142
      %s160 = sphi 0, %s160
      %s162 = sphi 0, %s160
      %s163 = sphi 0, %s162
      %s177 = sphi 0, %s163
      %s181 = sphi 0, %s181
      %s183 = sphi 0, %s181
      %s184 = sphi 0, %s183
      %s198 = sphi 0, %s184
      %s202 = sphi 0, %s202
      %s204 = sphi 0, %s202
      %s205 = sphi 0, %s204
      %s219 = sphi 0, %s205
      %s223 = sphi 0, %s223
      %s225 = sphi 0, %s223
      %s226 = sphi 0, %s225
      %s240 = sphi 0, %s226
      %s244 = sphi 0, %s244
      %s246 = sphi 0, %s244
      %s247 = sphi 0, %s246
      %s261 = sphi 0, %s247
      %s265 = sphi 0, %s265
      %s267 = sphi 0, %s265
      %s268 = sphi 0, %s267
      %s282 = sphi 0, %s268
      %s286 = sphi 0, %s286
      %s288 = sphi 0, %s286
      %s289 = sphi 0, %s288
      %s303 = sphi 0, %s289
      %s307 = sphi 0, %s307
      %s309 = sphi 0, %s307
      %s310 = sphi 0, %s309
      %s324 = sphi 0, %s310
      %s328 = sphi 0, %s328
      %s330 = sphi 0, %s328
      %s331 = sphi 0, %s330
      %s345 = sphi 0, %s331
      %s349 = sphi 0, %s349
      %s351 = sphi 0, %s349
      %s352 = sphi 0, %s351
      %s366 = sphi 0, %s352
      %s370 = sphi 0, %s370
      %s372 = sphi 0, %s370
      %s373 = sphi 0, %s372
      %s387 = sphi 0, %s373
      %s391 = sphi 0, %s391
      %s393 = sphi 0, %s391
      %s394 = sphi 0, %s393
      %s408 = sphi 0, %s394
      %s414 = sphi 0, %s416
      %s417 = sphi 0, %s414
      %s418 = sphi 0, %s417
      %s434 = sphi 0, %s418
    $region4: #{tpu_custom_call.1} parent=1 // loop_header_branch
      %35 = sbr.rel (%p33) target = $region8
    $region5: #{tpu_custom_call.1} parent=1 // loop_body
      %s37 = ssub.s32 %s32, 1
      %s38 = ssub.s32 %s32, 2
      %s39 = sadd.s32 %s32, 1
      %s40 = ssub.s32 %s32, %s39
      %p41 = scmp.eq.s32.totalorder %s40, 0
      %s43 = sadd.s32 %s42, 1
      %s44 = scalar_select %p41, %s42, %s43
      %p47 = pneg %p41
      %p48 = scmp.eq.s32.totalorder %s32, 1
      %p49 = por %p47, %p48
      %p50 = scmp.ne.s32.totalorder %s42, %s45
      %p51 = scmp.eq.s32.totalorder %s32, 0
      %p52 = por %p50, %p51
      %p53 = scmp.ne.s32.totalorder %s42, %s45
      %p54 = scmp.eq.s32.totalorder %s37, 1
      %p55 = por %p53, %p54
      %p56 = scmp.ne.s32.totalorder %s45, %s46
      %p57 = scmp.eq.s32.totalorder %s37, 0
      %p58 = por %p56, %p57
      %p59 = scmp.ne.s32.totalorder %s45, %s46
      %p60 = scmp.eq.s32.totalorder %s38, 1
      %p61 = por %p59, %p60
      %p63 = scmp.ne.s32.totalorder %s46, %s62
      %p64 = scmp.eq.s32.totalorder %s38, 0
      %p65 = por %p63, %p64
      %s66 = ssub.s32 %s32, %s39
      %p67 = scmp.eq.s32.totalorder %s66, 0
      %s69 = sadd.s32 %s68, 1
      %s70 = scalar_select %p67, %s68, %s69
      %p73 = pneg %p67
      %p74 = scmp.eq.s32.totalorder %s32, 1
      %p75 = por %p73, %p74
      %p76 = scmp.ne.s32.totalorder %s68, %s71
      %p77 = scmp.eq.s32.totalorder %s32, 0
      %p78 = por %p76, %p77
      %p79 = scmp.ne.s32.totalorder %s68, %s71
      %p80 = scmp.eq.s32.totalorder %s37, 1
      %p81 = por %p79, %p80
      %p82 = scmp.ne.s32.totalorder %s71, %s72
      %p83 = scmp.eq.s32.totalorder %s37, 0
      %p84 = por %p82, %p83
      %p85 = scmp.ne.s32.totalorder %s71, %s72
      %p86 = scmp.eq.s32.totalorder %s38, 1
      %p87 = por %p85, %p86
      %p89 = scmp.ne.s32.totalorder %s72, %s88
      %p90 = scmp.eq.s32.totalorder %s38, 0
      %p91 = por %p89, %p90
      %s92 = ssub.s32 %s32, %s39
      %p93 = scmp.eq.s32.totalorder %s92, 0
      %s95 = sadd.s32 %s94, 1
      %s96 = scalar_select %p93, %s94, %s95
      %p99 = pneg %p93
      %p100 = scmp.eq.s32.totalorder %s32, 1
      %p101 = por %p99, %p100
      %p102 = scmp.ne.s32.totalorder %s94, %s97
      %p103 = scmp.eq.s32.totalorder %s32, 0
      %p104 = por %p102, %p103
      %p105 = scmp.ne.s32.totalorder %s94, %s97
      %p106 = scmp.eq.s32.totalorder %s37, 1
      %p107 = por %p105, %p106
      %p108 = scmp.ne.s32.totalorder %s97, %s98
      %p109 = scmp.eq.s32.totalorder %s37, 0
      %p110 = por %p108, %p109
      %p111 = scmp.ne.s32.totalorder %s97, %s98
      %p112 = scmp.eq.s32.totalorder %s38, 1
      %p113 = por %p111, %p112
      %p115 = scmp.ne.s32.totalorder %s98, %s114
      %p116 = scmp.eq.s32.totalorder %s38, 0
      %p117 = por %p115, %p116
      %s119 = sadd.s32 %s118, 1
      %p122 = scmp.eq.s32.totalorder %s32, 1
      %p123 = scmp.ne.s32.totalorder %s118, %s120
      %p124 = scmp.eq.s32.totalorder %s32, 0
      %p125 = por %p123, %p124
      %p126 = scmp.ne.s32.totalorder %s118, %s120
      %p127 = scmp.eq.s32.totalorder %s37, 1
      %p128 = por %p126, %p127
      %p129 = scmp.ne.s32.totalorder %s120, %s121
      %p130 = scmp.eq.s32.totalorder %s37, 0
      %p131 = por %p129, %p130
      %p132 = scmp.ne.s32.totalorder %s120, %s121
      %p133 = scmp.eq.s32.totalorder %s38, 1
      %p134 = por %p132, %p133
      %p136 = scmp.ne.s32.totalorder %s121, %s135
      %p137 = scmp.eq.s32.totalorder %s38, 0
      %p138 = por %p136, %p137
      %s140 = sadd.s32 %s139, 1
      %p143 = scmp.eq.s32.totalorder %s32, 1
      %p144 = scmp.ne.s32.totalorder %s139, %s141
      %p145 = scmp.eq.s32.totalorder %s32, 0
      %p146 = por %p144, %p145
      %p147 = scmp.ne.s32.totalorder %s139, %s141
      %p148 = scmp.eq.s32.totalorder %s37, 1
      %p149 = por %p147, %p148
      %p150 = scmp.ne.s32.totalorder %s141, %s142
      %p151 = scmp.eq.s32.totalorder %s37, 0
      %p152 = por %p150, %p151
      %p153 = scmp.ne.s32.totalorder %s141, %s142
      %p154 = scmp.eq.s32.totalorder %s38, 1
      %p155 = por %p153, %p154
      %p157 = scmp.ne.s32.totalorder %s142, %s156
      %p158 = scmp.eq.s32.totalorder %s38, 0
      %p159 = por %p157, %p158
      %s161 = sadd.s32 %s160, 1
      %p164 = scmp.eq.s32.totalorder %s32, 1
      %p165 = scmp.ne.s32.totalorder %s160, %s162
      %p166 = scmp.eq.s32.totalorder %s32, 0
      %p167 = por %p165, %p166
      %p168 = scmp.ne.s32.totalorder %s160, %s162
      %p169 = scmp.eq.s32.totalorder %s37, 1
      %p170 = por %p168, %p169
      %p171 = scmp.ne.s32.totalorder %s162, %s163
      %p172 = scmp.eq.s32.totalorder %s37, 0
      %p173 = por %p171, %p172
      %p174 = scmp.ne.s32.totalorder %s162, %s163
      %p175 = scmp.eq.s32.totalorder %s38, 1
      %p176 = por %p174, %p175
      %p178 = scmp.ne.s32.totalorder %s163, %s177
      %p179 = scmp.eq.s32.totalorder %s38, 0
      %p180 = por %p178, %p179
      %s182 = sadd.s32 %s181, 1
      %p185 = scmp.eq.s32.totalorder %s32, 1
      %p186 = scmp.ne.s32.totalorder %s181, %s183
      %p187 = scmp.eq.s32.totalorder %s32, 0
      %p188 = por %p186, %p187
      %p189 = scmp.ne.s32.totalorder %s181, %s183
      %p190 = scmp.eq.s32.totalorder %s37, 1
      %p191 = por %p189, %p190
      %p192 = scmp.ne.s32.totalorder %s183, %s184
      %p193 = scmp.eq.s32.totalorder %s37, 0
      %p194 = por %p192, %p193
      %p195 = scmp.ne.s32.totalorder %s183, %s184
      %p196 = scmp.eq.s32.totalorder %s38, 1
      %p197 = por %p195, %p196
      %p199 = scmp.ne.s32.totalorder %s184, %s198
      %p200 = scmp.eq.s32.totalorder %s38, 0
      %p201 = por %p199, %p200
      %s203 = sadd.s32 %s202, 1
      %p206 = scmp.eq.s32.totalorder %s32, 1
      %p207 = scmp.ne.s32.totalorder %s202, %s204
      %p208 = scmp.eq.s32.totalorder %s32, 0
      %p209 = por %p207, %p208
      %p210 = scmp.ne.s32.totalorder %s202, %s204
      %p211 = scmp.eq.s32.totalorder %s37, 1
      %p212 = por %p210, %p211
      %p213 = scmp.ne.s32.totalorder %s204, %s205
      %p214 = scmp.eq.s32.totalorder %s37, 0
      %p215 = por %p213, %p214
      %p216 = scmp.ne.s32.totalorder %s204, %s205
      %p217 = scmp.eq.s32.totalorder %s38, 1
      %p218 = por %p216, %p217
      %p220 = scmp.ne.s32.totalorder %s205, %s219
      %p221 = scmp.eq.s32.totalorder %s38, 0
      %p222 = por %p220, %p221
      %s224 = sadd.s32 %s223, 1
      %p227 = scmp.eq.s32.totalorder %s32, 1
      %p228 = scmp.ne.s32.totalorder %s223, %s225
      %p229 = scmp.eq.s32.totalorder %s32, 0
      %p230 = por %p228, %p229
      %p231 = scmp.ne.s32.totalorder %s223, %s225
      %p232 = scmp.eq.s32.totalorder %s37, 1
      %p233 = por %p231, %p232
      %p234 = scmp.ne.s32.totalorder %s225, %s226
      %p235 = scmp.eq.s32.totalorder %s37, 0
      %p236 = por %p234, %p235
      %p237 = scmp.ne.s32.totalorder %s225, %s226
      %p238 = scmp.eq.s32.totalorder %s38, 1
      %p239 = por %p237, %p238
      %p241 = scmp.ne.s32.totalorder %s226, %s240
      %p242 = scmp.eq.s32.totalorder %s38, 0
      %p243 = por %p241, %p242
      %s245 = sadd.s32 %s244, 1
      %p248 = scmp.eq.s32.totalorder %s32, 1
      %p249 = scmp.ne.s32.totalorder %s244, %s246
      %p250 = scmp.eq.s32.totalorder %s32, 0
      %p251 = por %p249, %p250
      %p252 = scmp.ne.s32.totalorder %s244, %s246
      %p253 = scmp.eq.s32.totalorder %s37, 1
      %p254 = por %p252, %p253
      %p255 = scmp.ne.s32.totalorder %s246, %s247
      %p256 = scmp.eq.s32.totalorder %s37, 0
      %p257 = por %p255, %p256
      %p258 = scmp.ne.s32.totalorder %s246, %s247
      %p259 = scmp.eq.s32.totalorder %s38, 1
      %p260 = por %p258, %p259
      %p262 = scmp.ne.s32.totalorder %s247, %s261
      %p263 = scmp.eq.s32.totalorder %s38, 0
      %p264 = por %p262, %p263
      %s266 = sadd.s32 %s265, 1
      %p269 = scmp.eq.s32.totalorder %s32, 1
      %p270 = scmp.ne.s32.totalorder %s265, %s267
      %p271 = scmp.eq.s32.totalorder %s32, 0
      %p272 = por %p270, %p271
      %p273 = scmp.ne.s32.totalorder %s265, %s267
      %p274 = scmp.eq.s32.totalorder %s37, 1
      %p275 = por %p273, %p274
      %p276 = scmp.ne.s32.totalorder %s267, %s268
      %p277 = scmp.eq.s32.totalorder %s37, 0
      %p278 = por %p276, %p277
      %p279 = scmp.ne.s32.totalorder %s267, %s268
      %p280 = scmp.eq.s32.totalorder %s38, 1
      %p281 = por %p279, %p280
      %p283 = scmp.ne.s32.totalorder %s268, %s282
      %p284 = scmp.eq.s32.totalorder %s38, 0
      %p285 = por %p283, %p284
      %s287 = sadd.s32 %s286, 1
      %p290 = scmp.eq.s32.totalorder %s32, 1
      %p291 = scmp.ne.s32.totalorder %s286, %s288
      %p292 = scmp.eq.s32.totalorder %s32, 0
      %p293 = por %p291, %p292
      %p294 = scmp.ne.s32.totalorder %s286, %s288
      %p295 = scmp.eq.s32.totalorder %s37, 1
      %p296 = por %p294, %p295
      %p297 = scmp.ne.s32.totalorder %s288, %s289
      %p298 = scmp.eq.s32.totalorder %s37, 0
      %p299 = por %p297, %p298
      %p300 = scmp.ne.s32.totalorder %s288, %s289
      %p301 = scmp.eq.s32.totalorder %s38, 1
      %p302 = por %p300, %p301
      %p304 = scmp.ne.s32.totalorder %s289, %s303
      %p305 = scmp.eq.s32.totalorder %s38, 0
      %p306 = por %p304, %p305
      %s308 = sadd.s32 %s307, 1
      %p311 = scmp.eq.s32.totalorder %s32, 1
      %p312 = scmp.ne.s32.totalorder %s307, %s309
      %p313 = scmp.eq.s32.totalorder %s32, 0
      %p314 = por %p312, %p313
      %p315 = scmp.ne.s32.totalorder %s307, %s309
      %p316 = scmp.eq.s32.totalorder %s37, 1
      %p317 = por %p315, %p316
      %p318 = scmp.ne.s32.totalorder %s309, %s310
      %p319 = scmp.eq.s32.totalorder %s37, 0
      %p320 = por %p318, %p319
      %p321 = scmp.ne.s32.totalorder %s309, %s310
      %p322 = scmp.eq.s32.totalorder %s38, 1
      %p323 = por %p321, %p322
      %p325 = scmp.ne.s32.totalorder %s310, %s324
      %p326 = scmp.eq.s32.totalorder %s38, 0
      %p327 = por %p325, %p326
      %s329 = sadd.s32 %s328, 1
      %p332 = scmp.eq.s32.totalorder %s32, 1
      %p333 = scmp.ne.s32.totalorder %s328, %s330
      %p334 = scmp.eq.s32.totalorder %s32, 0
      %p335 = por %p333, %p334
      %p336 = scmp.ne.s32.totalorder %s328, %s330
      %p337 = scmp.eq.s32.totalorder %s37, 1
      %p338 = por %p336, %p337
      %p339 = scmp.ne.s32.totalorder %s330, %s331
      %p340 = scmp.eq.s32.totalorder %s37, 0
      %p341 = por %p339, %p340
      %p342 = scmp.ne.s32.totalorder %s330, %s331
      %p343 = scmp.eq.s32.totalorder %s38, 1
      %p344 = por %p342, %p343
      %p346 = scmp.ne.s32.totalorder %s331, %s345
      %p347 = scmp.eq.s32.totalorder %s38, 0
      %p348 = por %p346, %p347
      %s350 = sadd.s32 %s349, 1
      %p353 = scmp.eq.s32.totalorder %s32, 1
      %p354 = scmp.ne.s32.totalorder %s349, %s351
      %p355 = scmp.eq.s32.totalorder %s32, 0
      %p356 = por %p354, %p355
      %p357 = scmp.ne.s32.totalorder %s349, %s351
      %p358 = scmp.eq.s32.totalorder %s37, 1
      %p359 = por %p357, %p358
      %p360 = scmp.ne.s32.totalorder %s351, %s352
      %p361 = scmp.eq.s32.totalorder %s37, 0
      %p362 = por %p360, %p361
      %p363 = scmp.ne.s32.totalorder %s351, %s352
      %p364 = scmp.eq.s32.totalorder %s38, 1
      %p365 = por %p363, %p364
      %p367 = scmp.ne.s32.totalorder %s352, %s366
      %p368 = scmp.eq.s32.totalorder %s38, 0
      %p369 = por %p367, %p368
      %s371 = sadd.s32 %s370, 1
      %p374 = scmp.eq.s32.totalorder %s32, 1
      %p375 = scmp.ne.s32.totalorder %s370, %s372
      %p376 = scmp.eq.s32.totalorder %s32, 0
      %p377 = por %p375, %p376
      %p378 = scmp.ne.s32.totalorder %s370, %s372
      %p379 = scmp.eq.s32.totalorder %s37, 1
      %p380 = por %p378, %p379
      %p381 = scmp.ne.s32.totalorder %s372, %s373
      %p382 = scmp.eq.s32.totalorder %s37, 0
      %p383 = por %p381, %p382
      %p384 = scmp.ne.s32.totalorder %s372, %s373
      %p385 = scmp.eq.s32.totalorder %s38, 1
      %p386 = por %p384, %p385
      %p388 = scmp.ne.s32.totalorder %s373, %s387
      %p389 = scmp.eq.s32.totalorder %s38, 0
      %p390 = por %p388, %p389
      %s392 = sadd.s32 %s391, 1
      %p395 = scmp.eq.s32.totalorder %s32, 1
      %p396 = scmp.ne.s32.totalorder %s391, %s393
      %p397 = scmp.eq.s32.totalorder %s32, 0
      %p398 = por %p396, %p397
      %p399 = scmp.ne.s32.totalorder %s391, %s393
      %p400 = scmp.eq.s32.totalorder %s37, 1
      %p401 = por %p399, %p400
      %p402 = scmp.ne.s32.totalorder %s393, %s394
      %p403 = scmp.eq.s32.totalorder %s37, 0
      %p404 = por %p402, %p403
      %p405 = scmp.ne.s32.totalorder %s393, %s394
      %p406 = scmp.eq.s32.totalorder %s38, 1
      %p407 = por %p405, %p406
      %p409 = scmp.ne.s32.totalorder %s394, %s408
      %p410 = scmp.eq.s32.totalorder %s38, 0
      %p411 = por %p409, %p410
      %s412 = ssub.s32 %s32, %s39
      %p413 = scmp.eq.s32.totalorder %s412, 0
      %s415 = sadd.s32 %s414, 1
      %s416 = scalar_select %p413, %s414, %s415
      %p419 = pneg %p413
      %p420 = scmp.eq.s32.totalorder %s32, 1
      %p421 = por %p419, %p420
      %p422 = scmp.ne.s32.totalorder %s414, %s417
      %p423 = scmp.eq.s32.totalorder %s32, 0
      %p424 = por %p422, %p423
      %p425 = scmp.ne.s32.totalorder %s414, %s417
      %p426 = scmp.eq.s32.totalorder %s37, 1
      %p427 = por %p425, %p426
      %p428 = scmp.ne.s32.totalorder %s417, %s418
      %p429 = scmp.eq.s32.totalorder %s37, 0
      %p430 = por %p428, %p429
      %p431 = scmp.ne.s32.totalorder %s417, %s418
      %p432 = scmp.eq.s32.totalorder %s38, 1
      %p433 = por %p431, %p432
      %p435 = scmp.ne.s32.totalorder %s418, %s434
      %p436 = scmp.eq.s32.totalorder %s38, 0
      %p437 = por %p435, %p436
      %p438 = scmp.le.s32.totalorder 1, %s32
      %p439 = scmp.lt.s32.totalorder %s32, 3
      %p440 = pnand %p438, %p439
      %p441 = pneg %p440
      // Predicated region
      $region9: #{tpu_custom_call.1} parent=5 // pred_check
        _
      $region10: #{tpu_custom_call.1} parent=5 // pred_check_branch
        %443 = sbr.rel (%p440) target = $region12
      $region11: #{tpu_custom_call.1} parent=5 // pred_region
        %s444 = ssub.s32 %s32, 1
        // Predicated region
        $region13: #{tpu_custom_call.1} parent=11 // pred_check
          %p445 = pneg %p131
        $region14: #{tpu_custom_call.1} parent=11 // pred_check_branch
          %447 = sbr.rel (%p445) target = $region16
        $region15: #{tpu_custom_call.1} parent=11 // pred_region
          %s449 = ssub.s32 640, 640
          %450 = vsyncadd [#allocation7], %s449
          %s451 = sshll.u32 [#allocation6], 4
          %s452 = int_to_ptr.vmem [resolvable:$true] %s451
          %457 = dma.hbm_to_vmem [thread:$0]  %s3, 640, %s452, [#allocation7], 64, 64, 4
        $region16: #{tpu_custom_call.1} parent=11 // pred_fallthru
          _
        // Predicated region
        $region17: #{tpu_custom_call.1} parent=11 // pred_check
          %p458 = pneg %p152
        $region18: #{tpu_custom_call.1} parent=11 // pred_check_branch
          %460 = sbr.rel (%p458) target = $region20
        $region19: #{tpu_custom_call.1} parent=11 // pred_region
          _
        $region20: #{tpu_custom_call.1} parent=11 // pred_fallthru
          _
        // Predicated region
        $region21: #{tpu_custom_call.1} parent=11 // pred_check
          %p461 = pneg %p173
        $region22: #{tpu_custom_call.1} parent=11 // pred_check_branch
          %463 = sbr.rel (%p461) target = $region24
        $region23: #{tpu_custom_call.1} parent=11 // pred_region
          %s465 = ssub.s32 1024, 1024
          %466 = vsyncadd [#allocation7], %s465
          %s467 = sshll.u32 [#allocation8], 4
          %s468 = int_to_ptr.vmem [resolvable:$true] %s467
          %473 = dma.hbm_to_vmem [thread:$0]  %s5, 1024, %s468, [#allocation7], 64, 64, 4
        $region24: #{tpu_custom_call.1} parent=11 // pred_fallthru
          _
        // Predicated region
        $region25: #{tpu_custom_call.1} parent=11 // pred_check
          %p474 = pneg %p194
        $region26: #{tpu_custom_call.1} parent=11 // pred_check_branch
          %476 = sbr.rel (%p474) target = $region28
        $region27: #{tpu_custom_call.1} parent=11 // pred_region
          _
        $region28: #{tpu_custom_call.1} parent=11 // pred_fallthru
          _
        // Predicated region
        $region29: #{tpu_custom_call.1} parent=11 // pred_check
          %p477 = pneg %p215
        $region30: #{tpu_custom_call.1} parent=11 // pred_check_branch
          %479 = sbr.rel (%p477) target = $region32
        $region31: #{tpu_custom_call.1} parent=11 // pred_region
          %s481 = ssub.s32 10240, 10240
          %482 = vsyncadd [#allocation10], %s481
          %s483 = sshll.u32 [#allocation9], 4
          %s484 = int_to_ptr.vmem [resolvable:$true] %s483
          %489 = dma.hbm_to_vmem [thread:$0]  %s7, 10240, %s484, [#allocation10], 128, 128, 8
        $region32: #{tpu_custom_call.1} parent=11 // pred_fallthru
          _
        // Predicated region
        $region33: #{tpu_custom_call.1} parent=11 // pred_check
          %p490 = pneg %p236
        $region34: #{tpu_custom_call.1} parent=11 // pred_check_branch
          %492 = sbr.rel (%p490) target = $region36
        $region35: #{tpu_custom_call.1} parent=11 // pred_region
          _
        $region36: #{tpu_custom_call.1} parent=11 // pred_fallthru
          _
        // Predicated region
        $region37: #{tpu_custom_call.1} parent=11 // pred_check
          %p493 = pneg %p257
        $region38: #{tpu_custom_call.1} parent=11 // pred_check_branch
          %495 = sbr.rel (%p493) target = $region40
        $region39: #{tpu_custom_call.1} parent=11 // pred_region
          %s497 = ssub.s32 10240, 10240
          %498 = vsyncadd [#allocation10], %s497
          %s499 = sshll.u32 [#allocation11], 4
          %s500 = int_to_ptr.vmem [resolvable:$true] %s499
          %505 = dma.hbm_to_vmem [thread:$0]  %s9, 10240, %s500, [#allocation10], 128, 128, 8
        $region40: #{tpu_custom_call.1} parent=11 // pred_fallthru
          _
        // Predicated region
        $region41: #{tpu_custom_call.1} parent=11 // pred_check
          %p506 = pneg %p278
        $region42: #{tpu_custom_call.1} parent=11 // pred_check_branch
          %508 = sbr.rel (%p506) target = $region44
        $region43: #{tpu_custom_call.1} parent=11 // pred_region
          _
        $region44: #{tpu_custom_call.1} parent=11 // pred_fallthru
          _
        // Predicated region
        $region45: #{tpu_custom_call.1} parent=11 // pred_check
          %p509 = pneg %p299
        $region46: #{tpu_custom_call.1} parent=11 // pred_check_branch
          %511 = sbr.rel (%p509) target = $region48
        $region47: #{tpu_custom_call.1} parent=11 // pred_region
          %s513 = ssub.s32 3072, 3072
          %514 = vsyncadd [#allocation13], %s513
          %s515 = sshll.u32 [#allocation12], 4
          %s516 = int_to_ptr.vmem [resolvable:$true] %s515
          %521 = dma.hbm_to_vmem [thread:$0]  %s11, 3072, %s516, [#allocation13], 192, 192, 12
        $region48: #{tpu_custom_call.1} parent=11 // pred_fallthru
          _
        // Predicated region
        $region49: #{tpu_custom_call.1} parent=11 // pred_check
          %p522 = pneg %p320
        $region50: #{tpu_custom_call.1} parent=11 // pred_check_branch
          %524 = sbr.rel (%p522) target = $region52
        $region51: #{tpu_custom_call.1} parent=11 // pred_region
          _
        $region52: #{tpu_custom_call.1} parent=11 // pred_fallthru
          _
        // Predicated region
        $region53: #{tpu_custom_call.1} parent=11 // pred_check
          %p525 = pneg %p341
        $region54: #{tpu_custom_call.1} parent=11 // pred_check_branch
          %527 = sbr.rel (%p525) target = $region56
        $region55: #{tpu_custom_call.1} parent=11 // pred_region
          _
        $region56: #{tpu_custom_call.1} parent=11 // pred_fallthru
          _
        // Predicated region
        $region57: #{tpu_custom_call.1} parent=11 // pred_check
          %p528 = pneg %p362
        $region58: #{tpu_custom_call.1} parent=11 // pred_check_branch
          %530 = sbr.rel (%p528) target = $region60
        $region59: #{tpu_custom_call.1} parent=11 // pred_region
          _
        $region60: #{tpu_custom_call.1} parent=11 // pred_fallthru
          _
        // Predicated region
        $region61: #{tpu_custom_call.1} parent=11 // pred_check
          %p531 = pneg %p383
        $region62: #{tpu_custom_call.1} parent=11 // pred_check_branch
          %533 = sbr.rel (%p531) target = $region64
        $region63: #{tpu_custom_call.1} parent=11 // pred_region
          %s535 = ssub.s32 1024, 1024
          %536 = vsyncadd [#allocation13], %s535
          %s537 = sshll.u32 [#allocation14], 4
          %s538 = int_to_ptr.vmem [resolvable:$true] %s537
          %543 = dma.hbm_to_vmem [thread:$0]  %s15, 1024, %s538, [#allocation13], 64, 64, 4
        $region64: #{tpu_custom_call.1} parent=11 // pred_fallthru
          _
        // Predicated region
        $region65: #{tpu_custom_call.1} parent=11 // pred_check
          %p544 = pneg %p404
        $region66: #{tpu_custom_call.1} parent=11 // pred_check_branch
          %546 = sbr.rel (%p544) target = $region68
        $region67: #{tpu_custom_call.1} parent=11 // pred_region
          _
        $region68: #{tpu_custom_call.1} parent=11 // pred_fallthru
          _
      $region12: #{tpu_custom_call.1} parent=5 // pred_fallthru
        _
      %p547 = scmp.lt.s32.totalorder %s32, 2
      // Predicated region
      $region69: #{tpu_custom_call.1} parent=5 // pred_check
        %p548 = pneg %p547
      $region70: #{tpu_custom_call.1} parent=5 // pred_check_branch
        %550 = sbr.rel (%p548) target = $region72
      $region71: #{tpu_custom_call.1} parent=5 // pred_region
        // Predicated region
        $region73: #{tpu_custom_call.1} parent=71 // pred_check
          %p551 = pneg %p52
        $region74: #{tpu_custom_call.1} parent=71 // pred_check_branch
          %553 = sbr.rel (%p551) target = $region76
        $region75: #{tpu_custom_call.1} parent=71 // pred_region
          %s554 = sand.u32 %s42, 1
          %s555 = scalar_lea.sflag [#allocation4], %s554
          %s556 = sand.u32 %s42, 1
          %s557 = smul.addr %s556, 16
          %s558 = scalar_lea.vmem [#allocation3], %s557
          %s560 = ssub.s32 256, 256
          %561 = vsyncadd %s555, %s560
          %s562 = smul.addr %s32, 2
          %s563 = smul.addr %s562, 128
          %s564 = scalar_lea.hbm %s0, %s563
          %s565 = sshll.u32 %s558, 4
          %s566 = int_to_ptr.vmem [resolvable:$true] %s565
          %571 = dma.hbm_to_vmem [thread:$0]  %s564, 256, %s566, %s555, 128, 128, 8
        $region76: #{tpu_custom_call.1} parent=71 // pred_fallthru
          _
        // Predicated region
        $region77: #{tpu_custom_call.1} parent=71 // pred_check
          %p572 = pneg %p78
        $region78: #{tpu_custom_call.1} parent=71 // pred_check_branch
          %574 = sbr.rel (%p572) target = $region80
        $region79: #{tpu_custom_call.1} parent=71 // pred_region
          %p575 = scmp.lt.s32.totalorder %s32, 1
          %s576 = scalar_select %p575, %s32, 1
          %s577 = scalar_lea.vmem %s1, %s576
        $region80: #{tpu_custom_call.1} parent=71 // pred_fallthru
          _
        // Predicated region
        $region81: #{tpu_custom_call.1} parent=71 // pred_check
          %p578 = pneg %p104
        $region82: #{tpu_custom_call.1} parent=71 // pred_check_branch
          %580 = sbr.rel (%p578) target = $region84
        $region83: #{tpu_custom_call.1} parent=71 // pred_region
          %p581 = scmp.lt.s32.totalorder %s32, 1
          %s582 = scalar_select %p581, %s32, 1
          %s583 = smul.addr %s582, 2
          %s584 = smul.addr %s583, 8
          %s585 = scalar_lea.vmem %s2, %s584
        $region84: #{tpu_custom_call.1} parent=71 // pred_fallthru
          _
      $region72: #{tpu_custom_call.1} parent=5 // pred_fallthru
        _
      %p586 = scmp.le.s32.totalorder 1, %s32
      %p587 = scmp.lt.s32.totalorder %s32, 3
      %p588 = pnand %p586, %p587
      %p589 = pneg %p588
      // Predicated region
      $region85: #{tpu_custom_call.1} parent=5 // pred_check
        _
      $region86: #{tpu_custom_call.1} parent=5 // pred_check_branch
        %591 = sbr.rel (%p588) target = $region88
      $region87: #{tpu_custom_call.1} parent=5 // pred_region
        %s592 = ssub.s32 %s32, 1
        %s593 = sand.u32 %s45, 1
        %s594 = scalar_lea.sflag [#allocation4], %s593
        %s595 = sand.u32 %s45, 1
        %s596 = smul.addr %s595, 16
        %s597 = scalar_lea.vmem [#allocation3], %s596
        // Predicated region
        $region89: #{tpu_custom_call.1} parent=87 // pred_check
          %p598 = pneg %p58
        $region90: #{tpu_custom_call.1} parent=87 // pred_check_branch
          %600 = sbr.rel (%p598) target = $region92
        $region91: #{tpu_custom_call.1} parent=87 // pred_region
          %601 = dma.done %s594, 256
        $region92: #{tpu_custom_call.1} parent=87 // pred_fallthru
          _
        // Predicated region
        $region93: #{tpu_custom_call.1} parent=87 // pred_check
          %p602 = pneg %p131
        $region94: #{tpu_custom_call.1} parent=87 // pred_check_branch
          %604 = sbr.rel (%p602) target = $region96
        $region95: #{tpu_custom_call.1} parent=87 // pred_region
          %605 = dma.done [#allocation7], 640
        $region96: #{tpu_custom_call.1} parent=87 // pred_fallthru
          _
        // Predicated region
        $region97: #{tpu_custom_call.1} parent=87 // pred_check
          %p606 = pneg %p173
        $region98: #{tpu_custom_call.1} parent=87 // pred_check_branch
          %608 = sbr.rel (%p606) target = $region100
        $region99: #{tpu_custom_call.1} parent=87 // pred_region
          %609 = dma.done [#allocation7], 1024
        $region100: #{tpu_custom_call.1} parent=87 // pred_fallthru
          _
        // Predicated region
        $region101: #{tpu_custom_call.1} parent=87 // pred_check
          %p610 = pneg %p215
        $region102: #{tpu_custom_call.1} parent=87 // pred_check_branch
          %612 = sbr.rel (%p610) target = $region104
        $region103: #{tpu_custom_call.1} parent=87 // pred_region
          %613 = dma.done [#allocation10], 10240
        $region104: #{tpu_custom_call.1} parent=87 // pred_fallthru
          _
        // Predicated region
        $region105: #{tpu_custom_call.1} parent=87 // pred_check
          %p614 = pneg %p257
        $region106: #{tpu_custom_call.1} parent=87 // pred_check_branch
          %616 = sbr.rel (%p614) target = $region108
        $region107: #{tpu_custom_call.1} parent=87 // pred_region
          %617 = dma.done [#allocation10], 10240
        $region108: #{tpu_custom_call.1} parent=87 // pred_fallthru
          _
        // Predicated region
        $region109: #{tpu_custom_call.1} parent=87 // pred_check
          %p618 = pneg %p299
        $region110: #{tpu_custom_call.1} parent=87 // pred_check_branch
          %620 = sbr.rel (%p618) target = $region112
        $region111: #{tpu_custom_call.1} parent=87 // pred_region
          %621 = dma.done [#allocation13], 3072
        $region112: #{tpu_custom_call.1} parent=87 // pred_fallthru
          _
        // Predicated region
        $region113: #{tpu_custom_call.1} parent=87 // pred_check
          %p622 = pneg %p383
        $region114: #{tpu_custom_call.1} parent=87 // pred_check_branch
          %624 = sbr.rel (%p622) target = $region116
        $region115: #{tpu_custom_call.1} parent=87 // pred_region
          %625 = dma.done [#allocation13], 1024
        $region116: #{tpu_custom_call.1} parent=87 // pred_fallthru
          _
        %s626 = sand.u32 %s45, 1
        %s627 = scalar_lea.sflag [#allocation4], %s626
        %s628 = sand.u32 %s45, 1
        %s629 = smul.addr %s628, 16
        %s630 = scalar_lea.vmem [#allocation3], %s629
        %p631 = pneg %p58
        %p632 = pneg %p55
        %p633 = scmp.lt.s32.totalorder %s37, 1
        %s634 = scalar_select %p633, %s37, 1
        %s635 = scalar_lea.vmem %s1, %s634
        %p636 = pneg %p84
        %p637 = pneg %p81
        %p638 = scmp.lt.s32.totalorder %s37, 1
        %s639 = scalar_select %p638, %s37, 1
        %s640 = smul.addr %s639, 2
        %s641 = smul.addr %s640, 8
        %s642 = scalar_lea.vmem %s2, %s641
        %p643 = pneg %p110
        %p644 = pneg %p107
        %p645 = pneg %p131
        %p646 = pneg %p128
        %p647 = pneg %p152
        %p648 = pneg %p149
        %p649 = pneg %p173
        %p650 = pneg %p170
        %p651 = pneg %p194
        %p652 = pneg %p191
        %p653 = pneg %p215
        %p654 = pneg %p212
        %p655 = pneg %p236
        %p656 = pneg %p233
        %p657 = pneg %p257
        %p658 = pneg %p254
        %p659 = pneg %p278
        %p660 = pneg %p275
        %p661 = pneg %p299
        %p662 = pneg %p296
        %p663 = pneg %p320
        %p664 = pneg %p317
        %p665 = pneg %p341
        %p666 = pneg %p338
        %p667 = pneg %p362
        %p668 = pneg %p359
        %p669 = pneg %p383
        %p670 = pneg %p380
        %p671 = pneg %p404
        %p672 = pneg %p401
        %p673 = pneg %p430
        %p674 = pneg %p427
        %s675 = sand.u32 %s417, 1
        %s676 = scalar_lea.sflag [#allocation5], %s675
        %s677 = sand.u32 %s417, 1
        %s678 = scalar_lea.vmem [#allocation15], %s677
        %p679 = scmp.lt.s32.totalorder %s37, 1
        %s680 = scalar_select %p679, %s37, 1
        %s681 = scalar_lea.vmem %s1, %s680
        %p682 = scmp.lt.s32.totalorder %s37, 1
        %s683 = scalar_select %p682, %s37, 1
        %s684 = smul.addr %s683, 2
        %s685 = smul.addr %s684, 8
        %s686 = scalar_lea.vmem %s2, %s685
        %v688 = vld [vmem:[%s597] sm:$0xff]
        %v689 = vld [vmem:[%s597 + $0x8] sm:$0xff]
        %v690 = vld [vmem:[%s681] sm:$0x1]
        %v691 = vld [vmem:[%s686] sm:$0xff]
        %v692 = vld [vmem:[%s686 + $0x8] sm:$0xff]
        %v693 = vsub.f32 1.0, %v691
        %v694 = vsub.f32 1.0, %v692
        %695 = vst [vmem:[#allocation2] sm:$0x3] 0.0
        %696 = vst [vmem:[#allocation2 + $0x12] sm:$0x3] 0.0
        %v697 = vpack.c.bf16 %v689, %v688
        %v698 = vld [vmem:[#allocation6] sm:$0xf]
        %v699 = vld [vmem:[#allocation6 + $0x4] sm:$0xf]
        %v700 = vld [vmem:[#allocation6 + $0x8] sm:$0xf]
        %v701 = vld [vmem:[#allocation6 + $0xc] sm:$0xf]
        %v702 = vld [vmem:[#allocation6 + $0x10] sm:$0xf]
        %v703 = vld [vmem:[#allocation6 + $0x14] sm:$0xf]
        %v704 = vld [vmem:[#allocation6 + $0x18] sm:$0xf]
        %v705 = vld [vmem:[#allocation6 + $0x1c] sm:$0xf]
        %v706 = vld [vmem:[#allocation6 + $0x20] sm:$0xf]
        %v707 = vld [vmem:[#allocation6 + $0x24] sm:$0xf]
        %v708 = vld [vmem:[%s4] sm:$0x1]
        %v710 = vlaneseq
        %v711 = vshrl.u32 %v710, 7
        %v712 = vsub.s32 0, %v711
        %v713 = vrot.slane %v708, %v712
        %v725 = vunpack.c.l.b16 %v698
        %v726 = vunpack.c.l.b16 %v699
        %v727 = vunpack.c.l.b16 %v700
        %v728 = vunpack.c.l.b16 %v701
        %v729 = vunpack.c.l.b16 %v702
        %v730 = vunpack.c.l.b16 %v703
        %v731 = vunpack.c.l.b16 %v704
        %v732 = vunpack.c.l.b16 %v705
        %v733 = vunpack.c.l.b16 %v706
        %v734 = vunpack.c.l.b16 %v707
        %v735 = vpack.c.b16 %v726, %v725
        %v736 = vpack.c.b16 %v728, %v727
        %v737 = vpack.c.b16 %v730, %v729
        %v738 = vpack.c.b16 %v732, %v731
        %v739 = vpack.c.b16 %v734, %v733
        %vm745 = vcmask 654336
        %v747 = vsel %vm745, %v697, 0
        %749 = vmatprep.subr.bf16.mxu0 0
        %750 = vmatpush1.bf16.msra.mxu0 %v735
        %751 = vmatprep.subr.bf16.mxu0 0
        %752 = vmatpush1.bf16.msra.mxu0 %v736
        %753 = vmatprep.subr.bf16.mxu0 0
        %754 = vmatpush1.bf16.msra.mxu0 %v737
        %755 = vmatprep.subr.bf16.mxu0 0
        %756 = vmatpush1.bf16.msra.mxu0 %v738
        %757 = vmatprep.subr.bf16.mxu0 0
        %758 = vmatpush1.bf16.msra.mxu0 %v739
        %759 = vmatprep.subr.bf16.mxu0 0
        %760 = vmatpush1.bf16.msra.mxu0 0
        %761 = vmatprep.subr.bf16.mxu0 0
        %762 = vmatpush1.bf16.msra.mxu0 0
        %763 = vmatprep.subr.bf16.mxu0 0
        %764 = vmatpush1.bf16.msra.mxu0 0
        %765 = vmatprep.subr.bf16.mxu0 0
        %766 = vmatpush1.bf16.msra.mxu0 0
        %767 = vmatprep.subr.bf16.mxu0 0
        %768 = vmatpush1.bf16.msra.mxu0 0
        %769 = vmatprep.subr.bf16.mxu0 0
        %770 = vmatpush1.bf16.msra.mxu0 0
        %771 = vmatprep.subr.bf16.mxu0 0
        %772 = vmatpush1.bf16.msra.mxu0 0
        %773 = vmatprep.subr.bf16.mxu0 0
        %774 = vmatpush1.bf16.msra.mxu0 0
        %775 = vmatprep.subr.bf16.mxu0 0
        %776 = vmatpush1.bf16.msra.mxu0 0
        %777 = vmatprep.subr.bf16.mxu0 0
        %778 = vmatpush1.bf16.msra.mxu0 0
        %779 = vmatprep.subr.bf16.mxu0 0
        %780 = vmatpush1.bf16.msra.mxu0 0
        %781 = vmatprep.mubr.bf16.mxu0 0
        %782 = vmatmul.mubr.bf16.gmra.mrb[0].mxu0 %v747
        %v783 = vpop.f32.mrb[0].mxu0
        %v784 = vadd.f32 %v713, %v783
        %v785 = vpop.f32.mrb[0].mxu0
        %v786 = vpop.f32.mrb[0].mxu0
        %v787 = vadd.f32 %v713, %v786
        %v788 = vpop.f32.mrb[0].mxu0
        %789 = vdwg.mxu0
        %v790 = vmin.f32 %v784, 20.0
        %v791 = vmin.f32 %v787, 20.0
        %v792 = vmul.f32 %v790, 1.442695
        %v793 = vpow.pop %v792
        %v794 = vmul.f32 %v791, 1.442695
        %v795 = vpow.pop %v794
        %v796 = vadd.f32 %v793, 2.0
        %v797 = vadd.f32 %v795, 2.0
        %v798 = vmul.f32 %v793, %v796
        %v799 = vmul.f32 %v795, %v797
        %v800 = vadd.f32 %v798, 2.0
        %v801 = vadd.f32 %v799, 2.0
        %v802 = vrcp.pop %v800
        %v803 = vrcp.pop %v801
        %v804 = vmul.f32 %v798, %v802
        %v805 = vmul.f32 %v799, %v803
        %v806 = vmul.f32 %v784, %v804
        %v807 = vmul.f32 %v787, %v805
        %v808 = vpack.c.bf16 %v807, %v806
        %v809 = vld [vmem:[#allocation8] sm:$0xf]
        %v810 = vld [vmem:[#allocation8 + $0x4] sm:$0xf]
        %v811 = vld [vmem:[#allocation8 + $0x8] sm:$0xf]
        %v812 = vld [vmem:[#allocation8 + $0xc] sm:$0xf]
        %v813 = vld [vmem:[#allocation8 + $0x10] sm:$0xf]
        %v814 = vld [vmem:[#allocation8 + $0x14] sm:$0xf]
        %v815 = vld [vmem:[#allocation8 + $0x18] sm:$0xf]
        %v816 = vld [vmem:[#allocation8 + $0x1c] sm:$0xf]
        %v817 = vld [vmem:[#allocation8 + $0x20] sm:$0xf]
        %v818 = vld [vmem:[#allocation8 + $0x24] sm:$0xf]
        %v819 = vld [vmem:[#allocation8 + $0x28] sm:$0xf]
        %v820 = vld [vmem:[#allocation8 + $0x2c] sm:$0xf]
        %v821 = vld [vmem:[#allocation8 + $0x30] sm:$0xf]
        %v822 = vld [vmem:[#allocation8 + $0x34] sm:$0xf]
        %v823 = vld [vmem:[#allocation8 + $0x38] sm:$0xf]
        %v824 = vld [vmem:[#allocation8 + $0x3c] sm:$0xf]
        %v825 = vld [vmem:[%s6] sm:$0x1]
        %v827 = vlaneseq
        %v828 = vshrl.u32 %v827, 7
        %v829 = vsub.s32 0, %v828
        %v830 = vrot.slane %v825, %v829
        %v848 = vunpack.c.l.b16 %v809
        %v849 = vunpack.c.l.b16 %v810
        %v850 = vunpack.c.l.b16 %v811
        %v851 = vunpack.c.l.b16 %v812
        %v852 = vunpack.c.l.b16 %v813
        %v853 = vunpack.c.l.b16 %v814
        %v854 = vunpack.c.l.b16 %v815
        %v855 = vunpack.c.l.b16 %v816
        %v856 = vunpack.c.l.b16 %v817
        %v857 = vunpack.c.l.b16 %v818
        %v858 = vunpack.c.l.b16 %v819
        %v859 = vunpack.c.l.b16 %v820
        %v860 = vunpack.c.l.b16 %v821
        %v861 = vunpack.c.l.b16 %v822
        %v862 = vunpack.c.l.b16 %v823
        %v863 = vunpack.c.l.b16 %v824
        %v864 = vpack.c.b16 %v849, %v848
        %v865 = vpack.c.b16 %v851, %v850
        %v866 = vpack.c.b16 %v853, %v852
        %v867 = vpack.c.b16 %v855, %v854
        %v868 = vpack.c.b16 %v857, %v856
        %v869 = vpack.c.b16 %v859, %v858
        %v870 = vpack.c.b16 %v861, %v860
        %v871 = vpack.c.b16 %v863, %v862
        %880 = vmatprep.subr.bf16.mxu0 0
        %881 = vmatpush1.bf16.msra.mxu0 %v864
        %882 = vmatprep.subr.bf16.mxu0 0
        %883 = vmatpush1.bf16.msra.mxu0 %v865
        %884 = vmatprep.subr.bf16.mxu0 0
        %885 = vmatpush1.bf16.msra.mxu0 %v866
        %886 = vmatprep.subr.bf16.mxu0 0
        %887 = vmatpush1.bf16.msra.mxu0 %v867
        %888 = vmatprep.subr.bf16.mxu0 0
        %889 = vmatpush1.bf16.msra.mxu0 %v868
        %890 = vmatprep.subr.bf16.mxu0 0
        %891 = vmatpush1.bf16.msra.mxu0 %v869
        %892 = vmatprep.subr.bf16.mxu0 0
        %893 = vmatpush1.bf16.msra.mxu0 %v870
        %894 = vmatprep.subr.bf16.mxu0 0
        %895 = vmatpush1.bf16.msra.mxu0 %v871
        %896 = vmatprep.subr.bf16.mxu0 0
        %897 = vmatpush1.bf16.msra.mxu0 0
        %898 = vmatprep.subr.bf16.mxu0 0
        %899 = vmatpush1.bf16.msra.mxu0 0
        %900 = vmatprep.subr.bf16.mxu0 0
        %901 = vmatpush1.bf16.msra.mxu0 0
        %902 = vmatprep.subr.bf16.mxu0 0
        %903 = vmatpush1.bf16.msra.mxu0 0
        %904 = vmatprep.subr.bf16.mxu0 0
        %905 = vmatpush1.bf16.msra.mxu0 0
        %906 = vmatprep.subr.bf16.mxu0 0
        %907 = vmatpush1.bf16.msra.mxu0 0
        %908 = vmatprep.subr.bf16.mxu0 0
        %909 = vmatpush1.bf16.msra.mxu0 0
        %910 = vmatprep.subr.bf16.mxu0 0
        %911 = vmatpush1.bf16.msra.mxu0 0
        %912 = vmatprep.mubr.bf16.mxu0 0
        %913 = vmatmul.mubr.bf16.gmra.mrb[0].mxu0 %v808
        %v914 = vpop.f32.mrb[0].mxu0
        %v915 = vadd.f32 %v830, %v914
        %v916 = vpop.f32.mrb[0].mxu0
        %v917 = vpop.f32.mrb[0].mxu0
        %v918 = vadd.f32 %v830, %v917
        %v919 = vpop.f32.mrb[0].mxu0
        %920 = vdwg.mxu0
        %v921 = vmin.f32 %v915, 20.0
        %v922 = vmin.f32 %v918, 20.0
        %v923 = vmul.f32 %v921, 1.442695
        %v924 = vpow.pop %v923
        %v925 = vmul.f32 %v922, 1.442695
        %v926 = vpow.pop %v925
        %v927 = vadd.f32 %v924, 2.0
        %v928 = vadd.f32 %v926, 2.0
        %v929 = vmul.f32 %v924, %v927
        %v930 = vmul.f32 %v926, %v928
        %v931 = vadd.f32 %v929, 2.0
        %v932 = vadd.f32 %v930, 2.0
        %v933 = vrcp.pop %v931
        %v934 = vrcp.pop %v932
        %v935 = vmul.f32 %v929, %v933
        %v936 = vmul.f32 %v930, %v934
        %v937 = vmul.f32 %v915, %v935
        %v938 = vmul.f32 %v918, %v936
        %939 = vst [vmem:[#allocation2 + $0x2] sm:$0xff] %v937
        %940 = vst [vmem:[#allocation2 + $0xa] sm:$0xff] %v938
        %v941 = vld [vmem:[#allocation2] sm:$0xff]
        %v942 = vld [vmem:[#allocation2 + $0x8] sm:$0xff]
        %v943 = vld [vmem:[#allocation2 + $0x1] sm:$0xff]
        %v944 = vld [vmem:[#allocation2 + $0x9] sm:$0xff]
        %v945 = vld [vmem:[#allocation2 + $0x2] sm:$0xff]
        %v946 = vld [vmem:[#allocation2 + $0xa] sm:$0xff]
        %v947 = vld [vmem:[#allocation2 + $0x3] sm:$0xff]
        %v948 = vld [vmem:[#allocation2 + $0xb] sm:$0xff]
        %v949 = vld [vmem:[#allocation2 + $0x4] sm:$0xff]
        %v950 = vld [vmem:[#allocation2 + $0xc] sm:$0xff]
        %v951 = vpack.c.bf16 %v942, %v941
        %v952 = vpack.c.bf16 %v944, %v943
        %v953 = vpack.c.bf16 %v946, %v945
        %v954 = vpack.c.bf16 %v948, %v947
        %v955 = vpack.c.bf16 %v950, %v949
        %v956 = vld [vmem:[#allocation9] sm:$0xff]
        %v957 = vld [vmem:[#allocation9 + $0x8] sm:$0xff]
        %v958 = vld [vmem:[#allocation9 + $0x10] sm:$0xff]
        %v959 = vld [vmem:[#allocation9 + $0x18] sm:$0xff]
        %v960 = vld [vmem:[#allocation9 + $0x20] sm:$0xff]
        %v961 = vld [vmem:[#allocation9 + $0x28] sm:$0xff]
        %v962 = vld [vmem:[#allocation9 + $0x30] sm:$0xff]
        %v963 = vld [vmem:[#allocation9 + $0x38] sm:$0xff]
        %v964 = vld [vmem:[#allocation9 + $0x40] sm:$0xff]
        %v965 = vld [vmem:[#allocation9 + $0x48] sm:$0xff]
        %v966 = vld [vmem:[#allocation9 + $0x50] sm:$0xff]
        %v967 = vld [vmem:[#allocation9 + $0x58] sm:$0xff]
        %v968 = vld [vmem:[#allocation9 + $0x60] sm:$0xff]
        %v969 = vld [vmem:[#allocation9 + $0x68] sm:$0xff]
        %v970 = vld [vmem:[#allocation9 + $0x70] sm:$0xff]
        %v971 = vld [vmem:[#allocation9 + $0x78] sm:$0xff]
        %v972 = vld [vmem:[#allocation9 + $0x80] sm:$0xff]
        %v973 = vld [vmem:[#allocation9 + $0x88] sm:$0xff]
        %v974 = vld [vmem:[#allocation9 + $0x90] sm:$0xff]
        %v975 = vld [vmem:[#allocation9 + $0x98] sm:$0xff]
        %v976 = vld [vmem:[#allocation9 + $0xa0] sm:$0xff]
        %v977 = vld [vmem:[#allocation9 + $0xa8] sm:$0xff]
        %v978 = vld [vmem:[#allocation9 + $0xb0] sm:$0xff]
        %v979 = vld [vmem:[#allocation9 + $0xb8] sm:$0xff]
        %v980 = vld [vmem:[#allocation9 + $0xc0] sm:$0xff]
        %v981 = vld [vmem:[#allocation9 + $0xc8] sm:$0xff]
        %v982 = vld [vmem:[#allocation9 + $0xd0] sm:$0xff]
        %v983 = vld [vmem:[#allocation9 + $0xd8] sm:$0xff]
        %v984 = vld [vmem:[#allocation9 + $0xe0] sm:$0xff]
        %v985 = vld [vmem:[#allocation9 + $0xe8] sm:$0xff]
        %v986 = vld [vmem:[#allocation9 + $0xf0] sm:$0xff]
        %v987 = vld [vmem:[#allocation9 + $0xf8] sm:$0xff]
        %v988 = vld [vmem:[#allocation9 + $0x100] sm:$0xff]
        %v989 = vld [vmem:[#allocation9 + $0x108] sm:$0xff]
        %v990 = vld [vmem:[#allocation9 + $0x110] sm:$0xff]
        %v991 = vld [vmem:[#allocation9 + $0x118] sm:$0xff]
        %v992 = vld [vmem:[#allocation9 + $0x120] sm:$0xff]
        %v993 = vld [vmem:[#allocation9 + $0x128] sm:$0xff]
        %v994 = vld [vmem:[#allocation9 + $0x130] sm:$0xff]
        %v995 = vld [vmem:[#allocation9 + $0x138] sm:$0xff]
        %v996 = vld [vmem:[#allocation9 + $0x140] sm:$0xff]
        %v997 = vld [vmem:[#allocation9 + $0x148] sm:$0xff]
        %v998 = vld [vmem:[#allocation9 + $0x150] sm:$0xff]
        %v999 = vld [vmem:[#allocation9 + $0x158] sm:$0xff]
        %v1000 = vld [vmem:[#allocation9 + $0x160] sm:$0xff]
        %v1001 = vld [vmem:[#allocation9 + $0x168] sm:$0xff]
        %v1002 = vld [vmem:[#allocation9 + $0x170] sm:$0xff]
        %v1003 = vld [vmem:[#allocation9 + $0x178] sm:$0xff]
        %v1004 = vld [vmem:[#allocation9 + $0x180] sm:$0xff]
        %v1005 = vld [vmem:[#allocation9 + $0x188] sm:$0xff]
        %v1006 = vld [vmem:[#allocation9 + $0x190] sm:$0xff]
        %v1007 = vld [vmem:[#allocation9 + $0x198] sm:$0xff]
        %v1008 = vld [vmem:[#allocation9 + $0x1a0] sm:$0xff]
        %v1009 = vld [vmem:[#allocation9 + $0x1a8] sm:$0xff]
        %v1010 = vld [vmem:[#allocation9 + $0x1b0] sm:$0xff]
        %v1011 = vld [vmem:[#allocation9 + $0x1b8] sm:$0xff]
        %v1012 = vld [vmem:[#allocation9 + $0x1c0] sm:$0xff]
        %v1013 = vld [vmem:[#allocation9 + $0x1c8] sm:$0xff]
        %v1014 = vld [vmem:[#allocation9 + $0x1d0] sm:$0xff]
        %v1015 = vld [vmem:[#allocation9 + $0x1d8] sm:$0xff]
        %v1016 = vld [vmem:[#allocation9 + $0x1e0] sm:$0xff]
        %v1017 = vld [vmem:[#allocation9 + $0x1e8] sm:$0xff]
        %v1018 = vld [vmem:[#allocation9 + $0x1f0] sm:$0xff]
        %v1019 = vld [vmem:[#allocation9 + $0x1f8] sm:$0xff]
        %v1020 = vld [vmem:[#allocation9 + $0x200] sm:$0xff]
        %v1021 = vld [vmem:[#allocation9 + $0x208] sm:$0xff]
        %v1022 = vld [vmem:[#allocation9 + $0x210] sm:$0xff]
        %v1023 = vld [vmem:[#allocation9 + $0x218] sm:$0xff]
        %v1024 = vld [vmem:[#allocation9 + $0x220] sm:$0xff]
        %v1025 = vld [vmem:[#allocation9 + $0x228] sm:$0xff]
        %v1026 = vld [vmem:[#allocation9 + $0x230] sm:$0xff]
        %v1027 = vld [vmem:[#allocation9 + $0x238] sm:$0xff]
        %v1028 = vld [vmem:[#allocation9 + $0x240] sm:$0xff]
        %v1029 = vld [vmem:[#allocation9 + $0x248] sm:$0xff]
        %v1030 = vld [vmem:[#allocation9 + $0x250] sm:$0xff]
        %v1031 = vld [vmem:[#allocation9 + $0x258] sm:$0xff]
        %v1032 = vld [vmem:[#allocation9 + $0x260] sm:$0xff]
        %v1033 = vld [vmem:[#allocation9 + $0x268] sm:$0xff]
        %v1034 = vld [vmem:[#allocation9 + $0x270] sm:$0xff]
        %v1035 = vld [vmem:[#allocation9 + $0x278] sm:$0xff]
        %v1036 = vld [vmem:[%s8] sm:$0x3]
        %v1038 = vlaneseq
        %v1039 = vshrl.u32 %v1038, 7
        %v1040 = vsub.s32 0, %v1039
        %v1041 = vrot.slane %v1036, %v1040
        %v1042 = vlaneseq
        %v1043 = vshrl.u32 %v1042, 7
        %v1044 = vsub.s32 1, %v1043
        %v1045 = vrot.slane %v1036, %v1044
        %v1128 = vunpack.c.l.b16 %v956
        %v1129 = vunpack.c.h.b16 %v956
        %v1130 = vunpack.c.l.b16 %v957
        %v1131 = vunpack.c.h.b16 %v957
        %v1132 = vunpack.c.l.b16 %v958
        %v1133 = vunpack.c.h.b16 %v958
        %v1134 = vunpack.c.l.b16 %v959
        %v1135 = vunpack.c.h.b16 %v959
        %v1136 = vunpack.c.l.b16 %v960
        %v1137 = vunpack.c.h.b16 %v960
        %v1138 = vunpack.c.l.b16 %v961
        %v1139 = vunpack.c.h.b16 %v961
        %v1140 = vunpack.c.l.b16 %v962
        %v1141 = vunpack.c.h.b16 %v962
        %v1142 = vunpack.c.l.b16 %v963
        %v1143 = vunpack.c.h.b16 %v963
        %v1144 = vunpack.c.l.b16 %v964
        %v1145 = vunpack.c.h.b16 %v964
        %v1146 = vunpack.c.l.b16 %v965
        %v1147 = vunpack.c.h.b16 %v965
        %v1148 = vunpack.c.l.b16 %v966
        %v1149 = vunpack.c.h.b16 %v966
        %v1150 = vunpack.c.l.b16 %v967
        %v1151 = vunpack.c.h.b16 %v967
        %v1152 = vunpack.c.l.b16 %v968
        %v1153 = vunpack.c.h.b16 %v968
        %v1154 = vunpack.c.l.b16 %v969
        %v1155 = vunpack.c.h.b16 %v969
        %v1156 = vunpack.c.l.b16 %v970
        %v1157 = vunpack.c.h.b16 %v970
        %v1158 = vunpack.c.l.b16 %v971
        %v1159 = vunpack.c.h.b16 %v971
        %v1160 = vunpack.c.l.b16 %v972
        %v1161 = vunpack.c.h.b16 %v972
        %v1162 = vunpack.c.l.b16 %v973
        %v1163 = vunpack.c.h.b16 %v973
        %v1164 = vunpack.c.l.b16 %v974
        %v1165 = vunpack.c.h.b16 %v974
        %v1166 = vunpack.c.l.b16 %v975
        %v1167 = vunpack.c.h.b16 %v975
        %v1168 = vunpack.c.l.b16 %v976
        %v1169 = vunpack.c.h.b16 %v976
        %v1170 = vunpack.c.l.b16 %v977
        %v1171 = vunpack.c.h.b16 %v977
        %v1172 = vunpack.c.l.b16 %v978
        %v1173 = vunpack.c.h.b16 %v978
        %v1174 = vunpack.c.l.b16 %v979
        %v1175 = vunpack.c.h.b16 %v979
        %v1176 = vunpack.c.l.b16 %v980
        %v1177 = vunpack.c.h.b16 %v980
        %v1178 = vunpack.c.l.b16 %v981
        %v1179 = vunpack.c.h.b16 %v981
        %v1180 = vunpack.c.l.b16 %v982
        %v1181 = vunpack.c.h.b16 %v982
        %v1182 = vunpack.c.l.b16 %v983
        %v1183 = vunpack.c.h.b16 %v983
        %v1184 = vunpack.c.l.b16 %v984
        %v1185 = vunpack.c.h.b16 %v984
        %v1186 = vunpack.c.l.b16 %v985
        %v1187 = vunpack.c.h.b16 %v985
        %v1188 = vunpack.c.l.b16 %v986
        %v1189 = vunpack.c.h.b16 %v986
        %v1190 = vunpack.c.l.b16 %v987
        %v1191 = vunpack.c.h.b16 %v987
        %v1192 = vunpack.c.l.b16 %v988
        %v1193 = vunpack.c.h.b16 %v988
        %v1194 = vunpack.c.l.b16 %v989
        %v1195 = vunpack.c.h.b16 %v989
        %v1196 = vunpack.c.l.b16 %v990
        %v1197 = vunpack.c.h.b16 %v990
        %v1198 = vunpack.c.l.b16 %v991
        %v1199 = vunpack.c.h.b16 %v991
        %v1200 = vunpack.c.l.b16 %v992
        %v1201 = vunpack.c.h.b16 %v992
        %v1202 = vunpack.c.l.b16 %v993
        %v1203 = vunpack.c.h.b16 %v993
        %v1204 = vunpack.c.l.b16 %v994
        %v1205 = vunpack.c.h.b16 %v994
        %v1206 = vunpack.c.l.b16 %v995
        %v1207 = vunpack.c.h.b16 %v995
        %v1208 = vunpack.c.l.b16 %v996
        %v1209 = vunpack.c.h.b16 %v996
        %v1210 = vunpack.c.l.b16 %v997
        %v1211 = vunpack.c.h.b16 %v997
        %v1212 = vunpack.c.l.b16 %v998
        %v1213 = vunpack.c.h.b16 %v998
        %v1214 = vunpack.c.l.b16 %v999
        %v1215 = vunpack.c.h.b16 %v999
        %v1216 = vunpack.c.l.b16 %v1000
        %v1217 = vunpack.c.h.b16 %v1000
        %v1218 = vunpack.c.l.b16 %v1001
        %v1219 = vunpack.c.h.b16 %v1001
        %v1220 = vunpack.c.l.b16 %v1002
        %v1221 = vunpack.c.h.b16 %v1002
        %v1222 = vunpack.c.l.b16 %v1003
        %v1223 = vunpack.c.h.b16 %v1003
        %v1224 = vunpack.c.l.b16 %v1004
        %v1225 = vunpack.c.h.b16 %v1004
        %v1226 = vunpack.c.l.b16 %v1005
        %v1227 = vunpack.c.h.b16 %v1005
        %v1228 = vunpack.c.l.b16 %v1006
        %v1229 = vunpack.c.h.b16 %v1006
        %v1230 = vunpack.c.l.b16 %v1007
        %v1231 = vunpack.c.h.b16 %v1007
        %v1232 = vunpack.c.l.b16 %v1008
        %v1233 = vunpack.c.h.b16 %v1008
        %v1234 = vunpack.c.l.b16 %v1009
        %v1235 = vunpack.c.h.b16 %v1009
        %v1236 = vunpack.c.l.b16 %v1010
        %v1237 = vunpack.c.h.b16 %v1010
        %v1238 = vunpack.c.l.b16 %v1011
        %v1239 = vunpack.c.h.b16 %v1011
        %v1240 = vunpack.c.l.b16 %v1012
        %v1241 = vunpack.c.h.b16 %v1012
        %v1242 = vunpack.c.l.b16 %v1013
        %v1243 = vunpack.c.h.b16 %v1013
        %v1244 = vunpack.c.l.b16 %v1014
        %v1245 = vunpack.c.h.b16 %v1014
        %v1246 = vunpack.c.l.b16 %v1015
        %v1247 = vunpack.c.h.b16 %v1015
        %v1248 = vunpack.c.l.b16 %v1016
        %v1249 = vunpack.c.h.b16 %v1016
        %v1250 = vunpack.c.l.b16 %v1017
        %v1251 = vunpack.c.h.b16 %v1017
        %v1252 = vunpack.c.l.b16 %v1018
        %v1253 = vunpack.c.h.b16 %v1018
        %v1254 = vunpack.c.l.b16 %v1019
        %v1255 = vunpack.c.h.b16 %v1019
        %v1256 = vunpack.c.l.b16 %v1020
        %v1257 = vunpack.c.h.b16 %v1020
        %v1258 = vunpack.c.l.b16 %v1021
        %v1259 = vunpack.c.h.b16 %v1021
        %v1260 = vunpack.c.l.b16 %v1022
        %v1261 = vunpack.c.h.b16 %v1022
        %v1262 = vunpack.c.l.b16 %v1023
        %v1263 = vunpack.c.h.b16 %v1023
        %v1264 = vunpack.c.l.b16 %v1024
        %v1265 = vunpack.c.h.b16 %v1024
        %v1266 = vunpack.c.l.b16 %v1025
        %v1267 = vunpack.c.h.b16 %v1025
        %v1268 = vunpack.c.l.b16 %v1026
        %v1269 = vunpack.c.h.b16 %v1026
        %v1270 = vunpack.c.l.b16 %v1027
        %v1271 = vunpack.c.h.b16 %v1027
        %v1272 = vunpack.c.l.b16 %v1028
        %v1273 = vunpack.c.h.b16 %v1028
        %v1274 = vunpack.c.l.b16 %v1029
        %v1275 = vunpack.c.h.b16 %v1029
        %v1276 = vunpack.c.l.b16 %v1030
        %v1277 = vunpack.c.h.b16 %v1030
        %v1278 = vunpack.c.l.b16 %v1031
        %v1279 = vunpack.c.h.b16 %v1031
        %v1280 = vunpack.c.l.b16 %v1032
        %v1281 = vunpack.c.h.b16 %v1032
        %v1282 = vunpack.c.l.b16 %v1033
        %v1283 = vunpack.c.h.b16 %v1033
        %v1284 = vunpack.c.l.b16 %v1034
        %v1285 = vunpack.c.h.b16 %v1034
        %v1286 = vunpack.c.l.b16 %v1035
        %v1287 = vunpack.c.h.b16 %v1035
        %v1288 = vpack.c.b16 %v1130, %v1128
        %v1289 = vpack.c.b16 %v1131, %v1129
        %v1290 = vpack.c.b16 %v1134, %v1132
        %v1291 = vpack.c.b16 %v1135, %v1133
        %v1292 = vpack.c.b16 %v1138, %v1136
        %v1293 = vpack.c.b16 %v1139, %v1137
        %v1294 = vpack.c.b16 %v1142, %v1140
        %v1295 = vpack.c.b16 %v1143, %v1141
        %v1296 = vpack.c.b16 %v1146, %v1144
        %v1297 = vpack.c.b16 %v1147, %v1145
        %v1298 = vpack.c.b16 %v1150, %v1148
        %v1299 = vpack.c.b16 %v1151, %v1149
        %v1300 = vpack.c.b16 %v1154, %v1152
        %v1301 = vpack.c.b16 %v1155, %v1153
        %v1302 = vpack.c.b16 %v1158, %v1156
        %v1303 = vpack.c.b16 %v1159, %v1157
        %v1304 = vpack.c.b16 %v1162, %v1160
        %v1305 = vpack.c.b16 %v1163, %v1161
        %v1306 = vpack.c.b16 %v1166, %v1164
        %v1307 = vpack.c.b16 %v1167, %v1165
        %v1308 = vpack.c.b16 %v1170, %v1168
        %v1309 = vpack.c.b16 %v1171, %v1169
        %v1310 = vpack.c.b16 %v1174, %v1172
        %v1311 = vpack.c.b16 %v1175, %v1173
        %v1312 = vpack.c.b16 %v1178, %v1176
        %v1313 = vpack.c.b16 %v1179, %v1177
        %v1314 = vpack.c.b16 %v1182, %v1180
        %v1315 = vpack.c.b16 %v1183, %v1181
        %v1316 = vpack.c.b16 %v1186, %v1184
        %v1317 = vpack.c.b16 %v1187, %v1185
        %v1318 = vpack.c.b16 %v1190, %v1188
        %v1319 = vpack.c.b16 %v1191, %v1189
        %v1320 = vpack.c.b16 %v1194, %v1192
        %v1321 = vpack.c.b16 %v1195, %v1193
        %v1322 = vpack.c.b16 %v1198, %v1196
        %v1323 = vpack.c.b16 %v1199, %v1197
        %v1324 = vpack.c.b16 %v1202, %v1200
        %v1325 = vpack.c.b16 %v1203, %v1201
        %v1326 = vpack.c.b16 %v1206, %v1204
        %v1327 = vpack.c.b16 %v1207, %v1205
        %v1328 = vpack.c.b16 %v1210, %v1208
        %v1329 = vpack.c.b16 %v1211, %v1209
        %v1330 = vpack.c.b16 %v1214, %v1212
        %v1331 = vpack.c.b16 %v1215, %v1213
        %v1332 = vpack.c.b16 %v1218, %v1216
        %v1333 = vpack.c.b16 %v1219, %v1217
        %v1334 = vpack.c.b16 %v1222, %v1220
        %v1335 = vpack.c.b16 %v1223, %v1221
        %v1336 = vpack.c.b16 %v1226, %v1224
        %v1337 = vpack.c.b16 %v1227, %v1225
        %v1338 = vpack.c.b16 %v1230, %v1228
        %v1339 = vpack.c.b16 %v1231, %v1229
        %v1340 = vpack.c.b16 %v1234, %v1232
        %v1341 = vpack.c.b16 %v1235, %v1233
        %v1342 = vpack.c.b16 %v1238, %v1236
        %v1343 = vpack.c.b16 %v1239, %v1237
        %v1344 = vpack.c.b16 %v1242, %v1240
        %v1345 = vpack.c.b16 %v1243, %v1241
        %v1346 = vpack.c.b16 %v1246, %v1244
        %v1347 = vpack.c.b16 %v1247, %v1245
        %v1348 = vpack.c.b16 %v1250, %v1248
        %v1349 = vpack.c.b16 %v1251, %v1249
        %v1350 = vpack.c.b16 %v1254, %v1252
        %v1351 = vpack.c.b16 %v1255, %v1253
        %v1352 = vpack.c.b16 %v1258, %v1256
        %v1353 = vpack.c.b16 %v1259, %v1257
        %v1354 = vpack.c.b16 %v1262, %v1260
        %v1355 = vpack.c.b16 %v1263, %v1261
        %v1356 = vpack.c.b16 %v1266, %v1264
        %v1357 = vpack.c.b16 %v1267, %v1265
        %v1358 = vpack.c.b16 %v1270, %v1268
        %v1359 = vpack.c.b16 %v1271, %v1269
        %v1360 = vpack.c.b16 %v1274, %v1272
        %v1361 = vpack.c.b16 %v1275, %v1273
        %v1362 = vpack.c.b16 %v1278, %v1276
        %v1363 = vpack.c.b16 %v1279, %v1277
        %v1364 = vpack.c.b16 %v1282, %v1280
        %v1365 = vpack.c.b16 %v1283, %v1281
        %v1366 = vpack.c.b16 %v1286, %v1284
        %v1367 = vpack.c.b16 %v1287, %v1285
        %1448 = vmatprep.subr.bf16.mxu0 %v1289
        %1449 = vmatpush1.bf16.msra.mxu0 %v1288
        %1450 = vmatprep.subr.bf16.mxu0 %v1291
        %1451 = vmatpush1.bf16.msra.mxu0 %v1290
        %1452 = vmatprep.subr.bf16.mxu0 %v1293
        %1453 = vmatpush1.bf16.msra.mxu0 %v1292
        %1454 = vmatprep.subr.bf16.mxu0 %v1295
        %1455 = vmatpush1.bf16.msra.mxu0 %v1294
        %1456 = vmatprep.subr.bf16.mxu0 %v1297
        %1457 = vmatpush1.bf16.msra.mxu0 %v1296
        %1458 = vmatprep.subr.bf16.mxu0 %v1299
        %1459 = vmatpush1.bf16.msra.mxu0 %v1298
        %1460 = vmatprep.subr.bf16.mxu0 %v1301
        %1461 = vmatpush1.bf16.msra.mxu0 %v1300
        %1462 = vmatprep.subr.bf16.mxu0 %v1303
        %1463 = vmatpush1.bf16.msra.mxu0 %v1302
        %1464 = vmatprep.subr.bf16.mxu0 %v1305
        %1465 = vmatpush1.bf16.msra.mxu0 %v1304
        %1466 = vmatprep.subr.bf16.mxu0 %v1307
        %1467 = vmatpush1.bf16.msra.mxu0 %v1306
        %1468 = vmatprep.subr.bf16.mxu0 %v1309
        %1469 = vmatpush1.bf16.msra.mxu0 %v1308
        %1470 = vmatprep.subr.bf16.mxu0 %v1311
        %1471 = vmatpush1.bf16.msra.mxu0 %v1310
        %1472 = vmatprep.subr.bf16.mxu0 %v1313
        %1473 = vmatpush1.bf16.msra.mxu0 %v1312
        %1474 = vmatprep.subr.bf16.mxu0 %v1315
        %1475 = vmatpush1.bf16.msra.mxu0 %v1314
        %1476 = vmatprep.subr.bf16.mxu0 %v1317
        %1477 = vmatpush1.bf16.msra.mxu0 %v1316
        %1478 = vmatprep.subr.bf16.mxu0 %v1319
        %1479 = vmatpush1.bf16.msra.mxu0 %v1318
        %1480 = vmatprep.mubr.bf16.mxu0 %v952
        %1481 = vmatmul.mubr.bf16.gmra.mrb[0].mxu0 %v951
        %v1482 = vpop.f32.mrb[0].mxu0
        %v1483 = vadd.f32 %v1041, %v1482
        %v1484 = vpop.f32.mrb[0].mxu0
        %v1485 = vadd.f32 %v1045, %v1484
        %v1486 = vpop.f32.mrb[0].mxu0
        %v1487 = vadd.f32 %v1041, %v1486
        %v1488 = vpop.f32.mrb[0].mxu0
        %v1489 = vadd.f32 %v1045, %v1488
        %1490 = vdwg.mxu0
        %1491 = vmatprep.subr.bf16.mxu0 %v1321
        %1492 = vmatpush1.bf16.msra.mxu0 %v1320
        %1493 = vmatprep.subr.bf16.mxu0 %v1323
        %1494 = vmatpush1.bf16.msra.mxu0 %v1322
        %1495 = vmatprep.subr.bf16.mxu0 %v1325
        %1496 = vmatpush1.bf16.msra.mxu0 %v1324
        %1497 = vmatprep.subr.bf16.mxu0 %v1327
        %1498 = vmatpush1.bf16.msra.mxu0 %v1326
        %1499 = vmatprep.subr.bf16.mxu0 %v1329
        %1500 = vmatpush1.bf16.msra.mxu0 %v1328
        %1501 = vmatprep.subr.bf16.mxu0 %v1331
        %1502 = vmatpush1.bf16.msra.mxu0 %v1330
        %1503 = vmatprep.subr.bf16.mxu0 %v1333
        %1504 = vmatpush1.bf16.msra.mxu0 %v1332
        %1505 = vmatprep.subr.bf16.mxu0 %v1335
        %1506 = vmatpush1.bf16.msra.mxu0 %v1334
        %1507 = vmatprep.subr.bf16.mxu0 %v1337
        %1508 = vmatpush1.bf16.msra.mxu0 %v1336
        %1509 = vmatprep.subr.bf16.mxu0 %v1339
        %1510 = vmatpush1.bf16.msra.mxu0 %v1338
        %1511 = vmatprep.subr.bf16.mxu0 %v1341
        %1512 = vmatpush1.bf16.msra.mxu0 %v1340
        %1513 = vmatprep.subr.bf16.mxu0 %v1343
        %1514 = vmatpush1.bf16.msra.mxu0 %v1342
        %1515 = vmatprep.subr.bf16.mxu0 %v1345
        %1516 = vmatpush1.bf16.msra.mxu0 %v1344
        %1517 = vmatprep.subr.bf16.mxu0 %v1347
        %1518 = vmatpush1.bf16.msra.mxu0 %v1346
        %1519 = vmatprep.subr.bf16.mxu0 %v1349
        %1520 = vmatpush1.bf16.msra.mxu0 %v1348
        %1521 = vmatprep.subr.bf16.mxu0 %v1351
        %1522 = vmatpush1.bf16.msra.mxu0 %v1350
        %1523 = vmatprep.mubr.bf16.mxu0 %v954
        %1524 = vmatmul.mubr.bf16.gmra.mrb[0].mxu0 %v953
        %v1525 = vpop.f32.mrb[0].mxu0
        %v1526 = vadd.f32 %v1483, %v1525
        %v1527 = vpop.f32.mrb[0].mxu0
        %v1528 = vadd.f32 %v1485, %v1527
        %v1529 = vpop.f32.mrb[0].mxu0
        %v1530 = vadd.f32 %v1487, %v1529
        %v1531 = vpop.f32.mrb[0].mxu0
        %v1532 = vadd.f32 %v1489, %v1531
        %1533 = vdwg.mxu0
        %1534 = vmatprep.subr.bf16.mxu0 %v1353
        %1535 = vmatpush1.bf16.msra.mxu0 %v1352
        %1536 = vmatprep.subr.bf16.mxu0 %v1355
        %1537 = vmatpush1.bf16.msra.mxu0 %v1354
        %1538 = vmatprep.subr.bf16.mxu0 %v1357
        %1539 = vmatpush1.bf16.msra.mxu0 %v1356
        %1540 = vmatprep.subr.bf16.mxu0 %v1359
        %1541 = vmatpush1.bf16.msra.mxu0 %v1358
        %1542 = vmatprep.subr.bf16.mxu0 %v1361
        %1543 = vmatpush1.bf16.msra.mxu0 %v1360
        %1544 = vmatprep.subr.bf16.mxu0 %v1363
        %1545 = vmatpush1.bf16.msra.mxu0 %v1362
        %1546 = vmatprep.subr.bf16.mxu0 %v1365
        %1547 = vmatpush1.bf16.msra.mxu0 %v1364
        %1548 = vmatprep.subr.bf16.mxu0 %v1367
        %1549 = vmatpush1.bf16.msra.mxu0 %v1366
        %1550 = vmatprep.subr.bf16.mxu0 0
        %1551 = vmatpush1.bf16.msra.mxu0 0
        %1552 = vmatprep.subr.bf16.mxu0 0
        %1553 = vmatpush1.bf16.msra.mxu0 0
        %1554 = vmatprep.subr.bf16.mxu0 0
        %1555 = vmatpush1.bf16.msra.mxu0 0
        %1556 = vmatprep.subr.bf16.mxu0 0
        %1557 = vmatpush1.bf16.msra.mxu0 0
        %1558 = vmatprep.subr.bf16.mxu0 0
        %1559 = vmatpush1.bf16.msra.mxu0 0
        %1560 = vmatprep.subr.bf16.mxu0 0
        %1561 = vmatpush1.bf16.msra.mxu0 0
        %1562 = vmatprep.subr.bf16.mxu0 0
        %1563 = vmatpush1.bf16.msra.mxu0 0
        %1564 = vmatprep.subr.bf16.mxu0 0
        %1565 = vmatpush1.bf16.msra.mxu0 0
        %1566 = vmatprep.mubr.bf16.mxu0 0
        %1567 = vmatmul.mubr.bf16.gmra.mrb[0].mxu0 %v955
        %v1568 = vpop.f32.mrb[0].mxu0
        %v1569 = vadd.f32 %v1526, %v1568
        %v1570 = vpop.f32.mrb[0].mxu0
        %v1571 = vadd.f32 %v1528, %v1570
        %v1572 = vpop.f32.mrb[0].mxu0
        %v1573 = vadd.f32 %v1530, %v1572
        %v1574 = vpop.f32.mrb[0].mxu0
        %v1575 = vadd.f32 %v1532, %v1574
        %1576 = vdwg.mxu0
        %v1577 = vsub.f32 0.0, %v1571
        %v1578 = vsub.f32 0.0, %v1575
        %v1579 = vmul.f32 %v1577, 1.442695
        %v1580 = vpow.pop %v1579
        %v1581 = vmul.f32 %v1578, 1.442695
        %v1582 = vpow.pop %v1581
        %v1583 = vadd.f32 %v1580, 1.0
        %v1584 = vadd.f32 %v1582, 1.0
        %v1585 = vrcp.pop %v1583
        %v1586 = vrcp.pop %v1584
        %v1587 = vmul.f32 %v1569, %v1585
        %v1588 = vmul.f32 %v1573, %v1586
        %v1589 = vadd.f32 %v937, %v1587
        %v1590 = vadd.f32 %v938, %v1588
        %1591 = vst [vmem:[#allocation2 + $0x2] sm:$0xff] %v1589
        %1592 = vst [vmem:[#allocation2 + $0xa] sm:$0xff] %v1590
        %v1593 = vld [vmem:[#allocation2] sm:$0xff]
        %v1594 = vld [vmem:[#allocation2 + $0x8] sm:$0xff]
        %v1595 = vld [vmem:[#allocation2 + $0x1] sm:$0xff]
        %v1596 = vld [vmem:[#allocation2 + $0x9] sm:$0xff]
        %v1597 = vld [vmem:[#allocation2 + $0x2] sm:$0xff]
        %v1598 = vld [vmem:[#allocation2 + $0xa] sm:$0xff]
        %v1599 = vld [vmem:[#allocation2 + $0x3] sm:$0xff]
        %v1600 = vld [vmem:[#allocation2 + $0xb] sm:$0xff]
        %v1601 = vld [vmem:[#allocation2 + $0x4] sm:$0xff]
        %v1602 = vld [vmem:[#allocation2 + $0xc] sm:$0xff]
        %v1603 = vpack.c.bf16 %v1594, %v1593
        %v1604 = vpack.c.bf16 %v1596, %v1595
        %v1605 = vpack.c.bf16 %v1598, %v1597
        %v1606 = vpack.c.bf16 %v1600, %v1599
        %v1607 = vpack.c.bf16 %v1602, %v1601
        %v1608 = vld [vmem:[#allocation11] sm:$0xff]
        %v1609 = vld [vmem:[#allocation11 + $0x8] sm:$0xff]
        %v1610 = vld [vmem:[#allocation11 + $0x10] sm:$0xff]
        %v1611 = vld [vmem:[#allocation11 + $0x18] sm:$0xff]
        %v1612 = vld [vmem:[#allocation11 + $0x20] sm:$0xff]
        %v1613 = vld [vmem:[#allocation11 + $0x28] sm:$0xff]
        %v1614 = vld [vmem:[#allocation11 + $0x30] sm:$0xff]
        %v1615 = vld [vmem:[#allocation11 + $0x38] sm:$0xff]
        %v1616 = vld [vmem:[#allocation11 + $0x40] sm:$0xff]
        %v1617 = vld [vmem:[#allocation11 + $0x48] sm:$0xff]
        %v1618 = vld [vmem:[#allocation11 + $0x50] sm:$0xff]
        %v1619 = vld [vmem:[#allocation11 + $0x58] sm:$0xff]
        %v1620 = vld [vmem:[#allocation11 + $0x60] sm:$0xff]
        %v1621 = vld [vmem:[#allocation11 + $0x68] sm:$0xff]
        %v1622 = vld [vmem:[#allocation11 + $0x70] sm:$0xff]
        %v1623 = vld [vmem:[#allocation11 + $0x78] sm:$0xff]
        %v1624 = vld [vmem:[#allocation11 + $0x80] sm:$0xff]
        %v1625 = vld [vmem:[#allocation11 + $0x88] sm:$0xff]
        %v1626 = vld [vmem:[#allocation11 + $0x90] sm:$0xff]
        %v1627 = vld [vmem:[#allocation11 + $0x98] sm:$0xff]
        %v1628 = vld [vmem:[#allocation11 + $0xa0] sm:$0xff]
        %v1629 = vld [vmem:[#allocation11 + $0xa8] sm:$0xff]
        %v1630 = vld [vmem:[#allocation11 + $0xb0] sm:$0xff]
        %v1631 = vld [vmem:[#allocation11 + $0xb8] sm:$0xff]
        %v1632 = vld [vmem:[#allocation11 + $0xc0] sm:$0xff]
        %v1633 = vld [vmem:[#allocation11 + $0xc8] sm:$0xff]
        %v1634 = vld [vmem:[#allocation11 + $0xd0] sm:$0xff]
        %v1635 = vld [vmem:[#allocation11 + $0xd8] sm:$0xff]
        %v1636 = vld [vmem:[#allocation11 + $0xe0] sm:$0xff]
        %v1637 = vld [vmem:[#allocation11 + $0xe8] sm:$0xff]
        %v1638 = vld [vmem:[#allocation11 + $0xf0] sm:$0xff]
        %v1639 = vld [vmem:[#allocation11 + $0xf8] sm:$0xff]
        %v1640 = vld [vmem:[#allocation11 + $0x100] sm:$0xff]
        %v1641 = vld [vmem:[#allocation11 + $0x108] sm:$0xff]
        %v1642 = vld [vmem:[#allocation11 + $0x110] sm:$0xff]
        %v1643 = vld [vmem:[#allocation11 + $0x118] sm:$0xff]
        %v1644 = vld [vmem:[#allocation11 + $0x120] sm:$0xff]
        %v1645 = vld [vmem:[#allocation11 + $0x128] sm:$0xff]
        %v1646 = vld [vmem:[#allocation11 + $0x130] sm:$0xff]
        %v1647 = vld [vmem:[#allocation11 + $0x138] sm:$0xff]
        %v1648 = vld [vmem:[#allocation11 + $0x140] sm:$0xff]
        %v1649 = vld [vmem:[#allocation11 + $0x148] sm:$0xff]
        %v1650 = vld [vmem:[#allocation11 + $0x150] sm:$0xff]
        %v1651 = vld [vmem:[#allocation11 + $0x158] sm:$0xff]
        %v1652 = vld [vmem:[#allocation11 + $0x160] sm:$0xff]
        %v1653 = vld [vmem:[#allocation11 + $0x168] sm:$0xff]
        %v1654 = vld [vmem:[#allocation11 + $0x170] sm:$0xff]
        %v1655 = vld [vmem:[#allocation11 + $0x178] sm:$0xff]
        %v1656 = vld [vmem:[#allocation11 + $0x180] sm:$0xff]
        %v1657 = vld [vmem:[#allocation11 + $0x188] sm:$0xff]
        %v1658 = vld [vmem:[#allocation11 + $0x190] sm:$0xff]
        %v1659 = vld [vmem:[#allocation11 + $0x198] sm:$0xff]
        %v1660 = vld [vmem:[#allocation11 + $0x1a0] sm:$0xff]
        %v1661 = vld [vmem:[#allocation11 + $0x1a8] sm:$0xff]
        %v1662 = vld [vmem:[#allocation11 + $0x1b0] sm:$0xff]
        %v1663 = vld [vmem:[#allocation11 + $0x1b8] sm:$0xff]
        %v1664 = vld [vmem:[#allocation11 + $0x1c0] sm:$0xff]
        %v1665 = vld [vmem:[#allocation11 + $0x1c8] sm:$0xff]
        %v1666 = vld [vmem:[#allocation11 + $0x1d0] sm:$0xff]
        %v1667 = vld [vmem:[#allocation11 + $0x1d8] sm:$0xff]
        %v1668 = vld [vmem:[#allocation11 + $0x1e0] sm:$0xff]
        %v1669 = vld [vmem:[#allocation11 + $0x1e8] sm:$0xff]
        %v1670 = vld [vmem:[#allocation11 + $0x1f0] sm:$0xff]
        %v1671 = vld [vmem:[#allocation11 + $0x1f8] sm:$0xff]
        %v1672 = vld [vmem:[#allocation11 + $0x200] sm:$0xff]
        %v1673 = vld [vmem:[#allocation11 + $0x208] sm:$0xff]
        %v1674 = vld [vmem:[#allocation11 + $0x210] sm:$0xff]
        %v1675 = vld [vmem:[#allocation11 + $0x218] sm:$0xff]
        %v1676 = vld [vmem:[#allocation11 + $0x220] sm:$0xff]
        %v1677 = vld [vmem:[#allocation11 + $0x228] sm:$0xff]
        %v1678 = vld [vmem:[#allocation11 + $0x230] sm:$0xff]
        %v1679 = vld [vmem:[#allocation11 + $0x238] sm:$0xff]
        %v1680 = vld [vmem:[#allocation11 + $0x240] sm:$0xff]
        %v1681 = vld [vmem:[#allocation11 + $0x248] sm:$0xff]
        %v1682 = vld [vmem:[#allocation11 + $0x250] sm:$0xff]
        %v1683 = vld [vmem:[#allocation11 + $0x258] sm:$0xff]
        %v1684 = vld [vmem:[#allocation11 + $0x260] sm:$0xff]
        %v1685 = vld [vmem:[#allocation11 + $0x268] sm:$0xff]
        %v1686 = vld [vmem:[#allocation11 + $0x270] sm:$0xff]
        %v1687 = vld [vmem:[#allocation11 + $0x278] sm:$0xff]
        %v1688 = vld [vmem:[%s10] sm:$0x3]
        %v1690 = vlaneseq
        %v1691 = vshrl.u32 %v1690, 7
        %v1692 = vsub.s32 0, %v1691
        %v1693 = vrot.slane %v1688, %v1692
        %v1694 = vlaneseq
        %v1695 = vshrl.u32 %v1694, 7
        %v1696 = vsub.s32 1, %v1695
        %v1697 = vrot.slane %v1688, %v1696
        %v1780 = vunpack.c.l.b16 %v1608
        %v1781 = vunpack.c.h.b16 %v1608
        %v1782 = vunpack.c.l.b16 %v1609
        %v1783 = vunpack.c.h.b16 %v1609
        %v1784 = vunpack.c.l.b16 %v1610
        %v1785 = vunpack.c.h.b16 %v1610
        %v1786 = vunpack.c.l.b16 %v1611
        %v1787 = vunpack.c.h.b16 %v1611
        %v1788 = vunpack.c.l.b16 %v1612
        %v1789 = vunpack.c.h.b16 %v1612
        %v1790 = vunpack.c.l.b16 %v1613
        %v1791 = vunpack.c.h.b16 %v1613
        %v1792 = vunpack.c.l.b16 %v1614
        %v1793 = vunpack.c.h.b16 %v1614
        %v1794 = vunpack.c.l.b16 %v1615
        %v1795 = vunpack.c.h.b16 %v1615
        %v1796 = vunpack.c.l.b16 %v1616
        %v1797 = vunpack.c.h.b16 %v1616
        %v1798 = vunpack.c.l.b16 %v1617
        %v1799 = vunpack.c.h.b16 %v1617
        %v1800 = vunpack.c.l.b16 %v1618
        %v1801 = vunpack.c.h.b16 %v1618
        %v1802 = vunpack.c.l.b16 %v1619
        %v1803 = vunpack.c.h.b16 %v1619
        %v1804 = vunpack.c.l.b16 %v1620
        %v1805 = vunpack.c.h.b16 %v1620
        %v1806 = vunpack.c.l.b16 %v1621
        %v1807 = vunpack.c.h.b16 %v1621
        %v1808 = vunpack.c.l.b16 %v1622
        %v1809 = vunpack.c.h.b16 %v1622
        %v1810 = vunpack.c.l.b16 %v1623
        %v1811 = vunpack.c.h.b16 %v1623
        %v1812 = vunpack.c.l.b16 %v1624
        %v1813 = vunpack.c.h.b16 %v1624
        %v1814 = vunpack.c.l.b16 %v1625
        %v1815 = vunpack.c.h.b16 %v1625
        %v1816 = vunpack.c.l.b16 %v1626
        %v1817 = vunpack.c.h.b16 %v1626
        %v1818 = vunpack.c.l.b16 %v1627
        %v1819 = vunpack.c.h.b16 %v1627
        %v1820 = vunpack.c.l.b16 %v1628
        %v1821 = vunpack.c.h.b16 %v1628
        %v1822 = vunpack.c.l.b16 %v1629
        %v1823 = vunpack.c.h.b16 %v1629
        %v1824 = vunpack.c.l.b16 %v1630
        %v1825 = vunpack.c.h.b16 %v1630
        %v1826 = vunpack.c.l.b16 %v1631
        %v1827 = vunpack.c.h.b16 %v1631
        %v1828 = vunpack.c.l.b16 %v1632
        %v1829 = vunpack.c.h.b16 %v1632
        %v1830 = vunpack.c.l.b16 %v1633
        %v1831 = vunpack.c.h.b16 %v1633
        %v1832 = vunpack.c.l.b16 %v1634
        %v1833 = vunpack.c.h.b16 %v1634
        %v1834 = vunpack.c.l.b16 %v1635
        %v1835 = vunpack.c.h.b16 %v1635
        %v1836 = vunpack.c.l.b16 %v1636
        %v1837 = vunpack.c.h.b16 %v1636
        %v1838 = vunpack.c.l.b16 %v1637
        %v1839 = vunpack.c.h.b16 %v1637
        %v1840 = vunpack.c.l.b16 %v1638
        %v1841 = vunpack.c.h.b16 %v1638
        %v1842 = vunpack.c.l.b16 %v1639
        %v1843 = vunpack.c.h.b16 %v1639
        %v1844 = vunpack.c.l.b16 %v1640
        %v1845 = vunpack.c.h.b16 %v1640
        %v1846 = vunpack.c.l.b16 %v1641
        %v1847 = vunpack.c.h.b16 %v1641
        %v1848 = vunpack.c.l.b16 %v1642
        %v1849 = vunpack.c.h.b16 %v1642
        %v1850 = vunpack.c.l.b16 %v1643
        %v1851 = vunpack.c.h.b16 %v1643
        %v1852 = vunpack.c.l.b16 %v1644
        %v1853 = vunpack.c.h.b16 %v1644
        %v1854 = vunpack.c.l.b16 %v1645
        %v1855 = vunpack.c.h.b16 %v1645
        %v1856 = vunpack.c.l.b16 %v1646
        %v1857 = vunpack.c.h.b16 %v1646
        %v1858 = vunpack.c.l.b16 %v1647
        %v1859 = vunpack.c.h.b16 %v1647
        %v1860 = vunpack.c.l.b16 %v1648
        %v1861 = vunpack.c.h.b16 %v1648
        %v1862 = vunpack.c.l.b16 %v1649
        %v1863 = vunpack.c.h.b16 %v1649
        %v1864 = vunpack.c.l.b16 %v1650
        %v1865 = vunpack.c.h.b16 %v1650
        %v1866 = vunpack.c.l.b16 %v1651
        %v1867 = vunpack.c.h.b16 %v1651
        %v1868 = vunpack.c.l.b16 %v1652
        %v1869 = vunpack.c.h.b16 %v1652
        %v1870 = vunpack.c.l.b16 %v1653
        %v1871 = vunpack.c.h.b16 %v1653
        %v1872 = vunpack.c.l.b16 %v1654
        %v1873 = vunpack.c.h.b16 %v1654
        %v1874 = vunpack.c.l.b16 %v1655
        %v1875 = vunpack.c.h.b16 %v1655
        %v1876 = vunpack.c.l.b16 %v1656
        %v1877 = vunpack.c.h.b16 %v1656
        %v1878 = vunpack.c.l.b16 %v1657
        %v1879 = vunpack.c.h.b16 %v1657
        %v1880 = vunpack.c.l.b16 %v1658
        %v1881 = vunpack.c.h.b16 %v1658
        %v1882 = vunpack.c.l.b16 %v1659
        %v1883 = vunpack.c.h.b16 %v1659
        %v1884 = vunpack.c.l.b16 %v1660
        %v1885 = vunpack.c.h.b16 %v1660
        %v1886 = vunpack.c.l.b16 %v1661
        %v1887 = vunpack.c.h.b16 %v1661
        %v1888 = vunpack.c.l.b16 %v1662
        %v1889 = vunpack.c.h.b16 %v1662
        %v1890 = vunpack.c.l.b16 %v1663
        %v1891 = vunpack.c.h.b16 %v1663
        %v1892 = vunpack.c.l.b16 %v1664
        %v1893 = vunpack.c.h.b16 %v1664
        %v1894 = vunpack.c.l.b16 %v1665
        %v1895 = vunpack.c.h.b16 %v1665
        %v1896 = vunpack.c.l.b16 %v1666
        %v1897 = vunpack.c.h.b16 %v1666
        %v1898 = vunpack.c.l.b16 %v1667
        %v1899 = vunpack.c.h.b16 %v1667
        %v1900 = vunpack.c.l.b16 %v1668
        %v1901 = vunpack.c.h.b16 %v1668
        %v1902 = vunpack.c.l.b16 %v1669
        %v1903 = vunpack.c.h.b16 %v1669
        %v1904 = vunpack.c.l.b16 %v1670
        %v1905 = vunpack.c.h.b16 %v1670
        %v1906 = vunpack.c.l.b16 %v1671
        %v1907 = vunpack.c.h.b16 %v1671
        %v1908 = vunpack.c.l.b16 %v1672
        %v1909 = vunpack.c.h.b16 %v1672
        %v1910 = vunpack.c.l.b16 %v1673
        %v1911 = vunpack.c.h.b16 %v1673
        %v1912 = vunpack.c.l.b16 %v1674
        %v1913 = vunpack.c.h.b16 %v1674
        %v1914 = vunpack.c.l.b16 %v1675
        %v1915 = vunpack.c.h.b16 %v1675
        %v1916 = vunpack.c.l.b16 %v1676
        %v1917 = vunpack.c.h.b16 %v1676
        %v1918 = vunpack.c.l.b16 %v1677
        %v1919 = vunpack.c.h.b16 %v1677
        %v1920 = vunpack.c.l.b16 %v1678
        %v1921 = vunpack.c.h.b16 %v1678
        %v1922 = vunpack.c.l.b16 %v1679
        %v1923 = vunpack.c.h.b16 %v1679
        %v1924 = vunpack.c.l.b16 %v1680
        %v1925 = vunpack.c.h.b16 %v1680
        %v1926 = vunpack.c.l.b16 %v1681
        %v1927 = vunpack.c.h.b16 %v1681
        %v1928 = vunpack.c.l.b16 %v1682
        %v1929 = vunpack.c.h.b16 %v1682
        %v1930 = vunpack.c.l.b16 %v1683
        %v1931 = vunpack.c.h.b16 %v1683
        %v1932 = vunpack.c.l.b16 %v1684
        %v1933 = vunpack.c.h.b16 %v1684
        %v1934 = vunpack.c.l.b16 %v1685
        %v1935 = vunpack.c.h.b16 %v1685
        %v1936 = vunpack.c.l.b16 %v1686
        %v1937 = vunpack.c.h.b16 %v1686
        %v1938 = vunpack.c.l.b16 %v1687
        %v1939 = vunpack.c.h.b16 %v1687
        %v1940 = vpack.c.b16 %v1782, %v1780
        %v1941 = vpack.c.b16 %v1783, %v1781
        %v1942 = vpack.c.b16 %v1786, %v1784
        %v1943 = vpack.c.b16 %v1787, %v1785
        %v1944 = vpack.c.b16 %v1790, %v1788
        %v1945 = vpack.c.b16 %v1791, %v1789
        %v1946 = vpack.c.b16 %v1794, %v1792
        %v1947 = vpack.c.b16 %v1795, %v1793
        %v1948 = vpack.c.b16 %v1798, %v1796
        %v1949 = vpack.c.b16 %v1799, %v1797
        %v1950 = vpack.c.b16 %v1802, %v1800
        %v1951 = vpack.c.b16 %v1803, %v1801
        %v1952 = vpack.c.b16 %v1806, %v1804
        %v1953 = vpack.c.b16 %v1807, %v1805
        %v1954 = vpack.c.b16 %v1810, %v1808
        %v1955 = vpack.c.b16 %v1811, %v1809
        %v1956 = vpack.c.b16 %v1814, %v1812
        %v1957 = vpack.c.b16 %v1815, %v1813
        %v1958 = vpack.c.b16 %v1818, %v1816
        %v1959 = vpack.c.b16 %v1819, %v1817
        %v1960 = vpack.c.b16 %v1822, %v1820
        %v1961 = vpack.c.b16 %v1823, %v1821
        %v1962 = vpack.c.b16 %v1826, %v1824
        %v1963 = vpack.c.b16 %v1827, %v1825
        %v1964 = vpack.c.b16 %v1830, %v1828
        %v1965 = vpack.c.b16 %v1831, %v1829
        %v1966 = vpack.c.b16 %v1834, %v1832
        %v1967 = vpack.c.b16 %v1835, %v1833
        %v1968 = vpack.c.b16 %v1838, %v1836
        %v1969 = vpack.c.b16 %v1839, %v1837
        %v1970 = vpack.c.b16 %v1842, %v1840
        %v1971 = vpack.c.b16 %v1843, %v1841
        %v1972 = vpack.c.b16 %v1846, %v1844
        %v1973 = vpack.c.b16 %v1847, %v1845
        %v1974 = vpack.c.b16 %v1850, %v1848
        %v1975 = vpack.c.b16 %v1851, %v1849
        %v1976 = vpack.c.b16 %v1854, %v1852
        %v1977 = vpack.c.b16 %v1855, %v1853
        %v1978 = vpack.c.b16 %v1858, %v1856
        %v1979 = vpack.c.b16 %v1859, %v1857
        %v1980 = vpack.c.b16 %v1862, %v1860
        %v1981 = vpack.c.b16 %v1863, %v1861
        %v1982 = vpack.c.b16 %v1866, %v1864
        %v1983 = vpack.c.b16 %v1867, %v1865
        %v1984 = vpack.c.b16 %v1870, %v1868
        %v1985 = vpack.c.b16 %v1871, %v1869
        %v1986 = vpack.c.b16 %v1874, %v1872
        %v1987 = vpack.c.b16 %v1875, %v1873
        %v1988 = vpack.c.b16 %v1878, %v1876
        %v1989 = vpack.c.b16 %v1879, %v1877
        %v1990 = vpack.c.b16 %v1882, %v1880
        %v1991 = vpack.c.b16 %v1883, %v1881
        %v1992 = vpack.c.b16 %v1886, %v1884
        %v1993 = vpack.c.b16 %v1887, %v1885
        %v1994 = vpack.c.b16 %v1890, %v1888
        %v1995 = vpack.c.b16 %v1891, %v1889
        %v1996 = vpack.c.b16 %v1894, %v1892
        %v1997 = vpack.c.b16 %v1895, %v1893
        %v1998 = vpack.c.b16 %v1898, %v1896
        %v1999 = vpack.c.b16 %v1899, %v1897
        %v2000 = vpack.c.b16 %v1902, %v1900
        %v2001 = vpack.c.b16 %v1903, %v1901
        %v2002 = vpack.c.b16 %v1906, %v1904
        %v2003 = vpack.c.b16 %v1907, %v1905
        %v2004 = vpack.c.b16 %v1910, %v1908
        %v2005 = vpack.c.b16 %v1911, %v1909
        %v2006 = vpack.c.b16 %v1914, %v1912
        %v2007 = vpack.c.b16 %v1915, %v1913
        %v2008 = vpack.c.b16 %v1918, %v1916
        %v2009 = vpack.c.b16 %v1919, %v1917
        %v2010 = vpack.c.b16 %v1922, %v1920
        %v2011 = vpack.c.b16 %v1923, %v1921
        %v2012 = vpack.c.b16 %v1926, %v1924
        %v2013 = vpack.c.b16 %v1927, %v1925
        %v2014 = vpack.c.b16 %v1930, %v1928
        %v2015 = vpack.c.b16 %v1931, %v1929
        %v2016 = vpack.c.b16 %v1934, %v1932
        %v2017 = vpack.c.b16 %v1935, %v1933
        %v2018 = vpack.c.b16 %v1938, %v1936
        %v2019 = vpack.c.b16 %v1939, %v1937
        %2100 = vmatprep.subr.bf16.mxu0 %v1941
        %2101 = vmatpush1.bf16.msra.mxu0 %v1940
        %2102 = vmatprep.subr.bf16.mxu0 %v1943
        %2103 = vmatpush1.bf16.msra.mxu0 %v1942
        %2104 = vmatprep.subr.bf16.mxu0 %v1945
        %2105 = vmatpush1.bf16.msra.mxu0 %v1944
        %2106 = vmatprep.subr.bf16.mxu0 %v1947
        %2107 = vmatpush1.bf16.msra.mxu0 %v1946
        %2108 = vmatprep.subr.bf16.mxu0 %v1949
        %2109 = vmatpush1.bf16.msra.mxu0 %v1948
        %2110 = vmatprep.subr.bf16.mxu0 %v1951
        %2111 = vmatpush1.bf16.msra.mxu0 %v1950
        %2112 = vmatprep.subr.bf16.mxu0 %v1953
        %2113 = vmatpush1.bf16.msra.mxu0 %v1952
        %2114 = vmatprep.subr.bf16.mxu0 %v1955
        %2115 = vmatpush1.bf16.msra.mxu0 %v1954
        %2116 = vmatprep.subr.bf16.mxu0 %v1957
        %2117 = vmatpush1.bf16.msra.mxu0 %v1956
        %2118 = vmatprep.subr.bf16.mxu0 %v1959
        %2119 = vmatpush1.bf16.msra.mxu0 %v1958
        %2120 = vmatprep.subr.bf16.mxu0 %v1961
        %2121 = vmatpush1.bf16.msra.mxu0 %v1960
        %2122 = vmatprep.subr.bf16.mxu0 %v1963
        %2123 = vmatpush1.bf16.msra.mxu0 %v1962
        %2124 = vmatprep.subr.bf16.mxu0 %v1965
        %2125 = vmatpush1.bf16.msra.mxu0 %v1964
        %2126 = vmatprep.subr.bf16.mxu0 %v1967
        %2127 = vmatpush1.bf16.msra.mxu0 %v1966
        %2128 = vmatprep.subr.bf16.mxu0 %v1969
        %2129 = vmatpush1.bf16.msra.mxu0 %v1968
        %2130 = vmatprep.subr.bf16.mxu0 %v1971
        %2131 = vmatpush1.bf16.msra.mxu0 %v1970
        %2132 = vmatprep.mubr.bf16.mxu0 %v1604
        %2133 = vmatmul.mubr.bf16.gmra.mrb[0].mxu0 %v1603
        %v2134 = vpop.f32.mrb[0].mxu0
        %v2135 = vadd.f32 %v1693, %v2134
        %v2136 = vpop.f32.mrb[0].mxu0
        %v2137 = vadd.f32 %v1697, %v2136
        %v2138 = vpop.f32.mrb[0].mxu0
        %v2139 = vadd.f32 %v1693, %v2138
        %v2140 = vpop.f32.mrb[0].mxu0
        %v2141 = vadd.f32 %v1697, %v2140
        %2142 = vdwg.mxu0
        %2143 = vmatprep.subr.bf16.mxu0 %v1973
        %2144 = vmatpush1.bf16.msra.mxu0 %v1972
        %2145 = vmatprep.subr.bf16.mxu0 %v1975
        %2146 = vmatpush1.bf16.msra.mxu0 %v1974
        %2147 = vmatprep.subr.bf16.mxu0 %v1977
        %2148 = vmatpush1.bf16.msra.mxu0 %v1976
        %2149 = vmatprep.subr.bf16.mxu0 %v1979
        %2150 = vmatpush1.bf16.msra.mxu0 %v1978
        %2151 = vmatprep.subr.bf16.mxu0 %v1981
        %2152 = vmatpush1.bf16.msra.mxu0 %v1980
        %2153 = vmatprep.subr.bf16.mxu0 %v1983
        %2154 = vmatpush1.bf16.msra.mxu0 %v1982
        %2155 = vmatprep.subr.bf16.mxu0 %v1985
        %2156 = vmatpush1.bf16.msra.mxu0 %v1984
        %2157 = vmatprep.subr.bf16.mxu0 %v1987
        %2158 = vmatpush1.bf16.msra.mxu0 %v1986
        %2159 = vmatprep.subr.bf16.mxu0 %v1989
        %2160 = vmatpush1.bf16.msra.mxu0 %v1988
        %2161 = vmatprep.subr.bf16.mxu0 %v1991
        %2162 = vmatpush1.bf16.msra.mxu0 %v1990
        %2163 = vmatprep.subr.bf16.mxu0 %v1993
        %2164 = vmatpush1.bf16.msra.mxu0 %v1992
        %2165 = vmatprep.subr.bf16.mxu0 %v1995
        %2166 = vmatpush1.bf16.msra.mxu0 %v1994
        %2167 = vmatprep.subr.bf16.mxu0 %v1997
        %2168 = vmatpush1.bf16.msra.mxu0 %v1996
        %2169 = vmatprep.subr.bf16.mxu0 %v1999
        %2170 = vmatpush1.bf16.msra.mxu0 %v1998
        %2171 = vmatprep.subr.bf16.mxu0 %v2001
        %2172 = vmatpush1.bf16.msra.mxu0 %v2000
        %2173 = vmatprep.subr.bf16.mxu0 %v2003
        %2174 = vmatpush1.bf16.msra.mxu0 %v2002
        %2175 = vmatprep.mubr.bf16.mxu0 %v1606
        %2176 = vmatmul.mubr.bf16.gmra.mrb[0].mxu0 %v1605
        %v2177 = vpop.f32.mrb[0].mxu0
        %v2178 = vadd.f32 %v2135, %v2177
        %v2179 = vpop.f32.mrb[0].mxu0
        %v2180 = vadd.f32 %v2137, %v2179
        %v2181 = vpop.f32.mrb[0].mxu0
        %v2182 = vadd.f32 %v2139, %v2181
        %v2183 = vpop.f32.mrb[0].mxu0
        %v2184 = vadd.f32 %v2141, %v2183
        %2185 = vdwg.mxu0
        %2186 = vmatprep.subr.bf16.mxu0 %v2005
        %2187 = vmatpush1.bf16.msra.mxu0 %v2004
        %2188 = vmatprep.subr.bf16.mxu0 %v2007
        %2189 = vmatpush1.bf16.msra.mxu0 %v2006
        %2190 = vmatprep.subr.bf16.mxu0 %v2009
        %2191 = vmatpush1.bf16.msra.mxu0 %v2008
        %2192 = vmatprep.subr.bf16.mxu0 %v2011
        %2193 = vmatpush1.bf16.msra.mxu0 %v2010
        %2194 = vmatprep.subr.bf16.mxu0 %v2013
        %2195 = vmatpush1.bf16.msra.mxu0 %v2012
        %2196 = vmatprep.subr.bf16.mxu0 %v2015
        %2197 = vmatpush1.bf16.msra.mxu0 %v2014
        %2198 = vmatprep.subr.bf16.mxu0 %v2017
        %2199 = vmatpush1.bf16.msra.mxu0 %v2016
        %2200 = vmatprep.subr.bf16.mxu0 %v2019
        %2201 = vmatpush1.bf16.msra.mxu0 %v2018
        %2202 = vmatprep.subr.bf16.mxu0 0
        %2203 = vmatpush1.bf16.msra.mxu0 0
        %2204 = vmatprep.subr.bf16.mxu0 0
        %2205 = vmatpush1.bf16.msra.mxu0 0
        %2206 = vmatprep.subr.bf16.mxu0 0
        %2207 = vmatpush1.bf16.msra.mxu0 0
        %2208 = vmatprep.subr.bf16.mxu0 0
        %2209 = vmatpush1.bf16.msra.mxu0 0
        %2210 = vmatprep.subr.bf16.mxu0 0
        %2211 = vmatpush1.bf16.msra.mxu0 0
        %2212 = vmatprep.subr.bf16.mxu0 0
        %2213 = vmatpush1.bf16.msra.mxu0 0
        %2214 = vmatprep.subr.bf16.mxu0 0
        %2215 = vmatpush1.bf16.msra.mxu0 0
        %2216 = vmatprep.subr.bf16.mxu0 0
        %2217 = vmatpush1.bf16.msra.mxu0 0
        %2218 = vmatprep.mubr.bf16.mxu0 0
        %2219 = vmatmul.mubr.bf16.gmra.mrb[0].mxu0 %v1607
        %v2220 = vpop.f32.mrb[0].mxu0
        %v2221 = vadd.f32 %v2178, %v2220
        %v2222 = vpop.f32.mrb[0].mxu0
        %v2223 = vadd.f32 %v2180, %v2222
        %v2224 = vpop.f32.mrb[0].mxu0
        %v2225 = vadd.f32 %v2182, %v2224
        %v2226 = vpop.f32.mrb[0].mxu0
        %v2227 = vadd.f32 %v2184, %v2226
        %2228 = vdwg.mxu0
        %v2229 = vsub.f32 0.0, %v2223
        %v2230 = vsub.f32 0.0, %v2227
        %v2231 = vmul.f32 %v2229, 1.442695
        %v2232 = vpow.pop %v2231
        %v2233 = vmul.f32 %v2230, 1.442695
        %v2234 = vpow.pop %v2233
        %v2235 = vadd.f32 %v2232, 1.0
        %v2236 = vadd.f32 %v2234, 1.0
        %v2237 = vrcp.pop %v2235
        %v2238 = vrcp.pop %v2236
        %v2239 = vmul.f32 %v2221, %v2237
        %v2240 = vmul.f32 %v2225, %v2238
        %v2241 = vadd.f32 %v1589, %v2239
        %v2242 = vadd.f32 %v1590, %v2240
        %2244 = vset.pattern.permute.xlu0 0
        %2245 = vperm.xlu0 %2244, %v693
        %v2246 = vpop.permute.xlu0 %2245
        %2249 = vset.pattern.permute.xlu0 0
        %2250 = vperm.xlu0 %2249, %v694
        %v2251 = vpop.permute.xlu0 %2250
        %v2253 = vmul.f32 %v2241, %v2246
        %v2254 = vmul.f32 %v2242, %v2251
        %v2255 = vpack.c.bf16 %v2254, %v2253
        %v2256 = vld [vmem:[#allocation12] sm:$0xff]
        %v2257 = vld [vmem:[#allocation12 + $0x8] sm:$0xf]
        %v2258 = vld [vmem:[#allocation12 + $0xc] sm:$0xff]
        %v2259 = vld [vmem:[#allocation12 + $0x14] sm:$0xf]
        %v2260 = vld [vmem:[#allocation12 + $0x18] sm:$0xff]
        %v2261 = vld [vmem:[#allocation12 + $0x20] sm:$0xf]
        %v2262 = vld [vmem:[#allocation12 + $0x24] sm:$0xff]
        %v2263 = vld [vmem:[#allocation12 + $0x2c] sm:$0xf]
        %v2264 = vld [vmem:[#allocation12 + $0x30] sm:$0xff]
        %v2265 = vld [vmem:[#allocation12 + $0x38] sm:$0xf]
        %v2266 = vld [vmem:[#allocation12 + $0x3c] sm:$0xff]
        %v2267 = vld [vmem:[#allocation12 + $0x44] sm:$0xf]
        %v2268 = vld [vmem:[#allocation12 + $0x48] sm:$0xff]
        %v2269 = vld [vmem:[#allocation12 + $0x50] sm:$0xf]
        %v2270 = vld [vmem:[#allocation12 + $0x54] sm:$0xff]
        %v2271 = vld [vmem:[#allocation12 + $0x5c] sm:$0xf]
        %v2272 = vld [vmem:[#allocation12 + $0x60] sm:$0xff]
        %v2273 = vld [vmem:[#allocation12 + $0x68] sm:$0xf]
        %v2274 = vld [vmem:[#allocation12 + $0x6c] sm:$0xff]
        %v2275 = vld [vmem:[#allocation12 + $0x74] sm:$0xf]
        %v2276 = vld [vmem:[#allocation12 + $0x78] sm:$0xff]
        %v2277 = vld [vmem:[#allocation12 + $0x80] sm:$0xf]
        %v2278 = vld [vmem:[#allocation12 + $0x84] sm:$0xff]
        %v2279 = vld [vmem:[#allocation12 + $0x8c] sm:$0xf]
        %v2280 = vld [vmem:[#allocation12 + $0x90] sm:$0xff]
        %v2281 = vld [vmem:[#allocation12 + $0x98] sm:$0xf]
        %v2282 = vld [vmem:[#allocation12 + $0x9c] sm:$0xff]
        %v2283 = vld [vmem:[#allocation12 + $0xa4] sm:$0xf]
        %v2284 = vld [vmem:[#allocation12 + $0xa8] sm:$0xff]
        %v2285 = vld [vmem:[#allocation12 + $0xb0] sm:$0xf]
        %v2286 = vld [vmem:[#allocation12 + $0xb4] sm:$0xff]
        %v2287 = vld [vmem:[#allocation12 + $0xbc] sm:$0xf]
        %v2288 = vld [vmem:[%s12] sm:$0x7]
        %v2290 = vlaneseq
        %v2291 = vshrl.u32 %v2290, 7
        %v2292 = vsub.s32 0, %v2291
        %v2293 = vrot.slane %v2288, %v2292
        %v2294 = vlaneseq
        %v2295 = vshrl.u32 %v2294, 7
        %v2296 = vsub.s32 1, %v2295
        %v2297 = vrot.slane %v2288, %v2296
        %v2298 = vlaneseq
        %v2299 = vshrl.u32 %v2298, 7
        %v2300 = vsub.s32 2, %v2299
        %v2301 = vrot.slane %v2288, %v2300
        %v2337 = vunpack.c.l.b16 %v2256
        %v2338 = vunpack.c.h.b16 %v2256
        %v2339 = vunpack.c.l.b16 %v2257
        %v2340 = vunpack.c.l.b16 %v2258
        %v2341 = vunpack.c.h.b16 %v2258
        %v2342 = vunpack.c.l.b16 %v2259
        %v2343 = vunpack.c.l.b16 %v2260
        %v2344 = vunpack.c.h.b16 %v2260
        %v2345 = vunpack.c.l.b16 %v2261
        %v2346 = vunpack.c.l.b16 %v2262
        %v2347 = vunpack.c.h.b16 %v2262
        %v2348 = vunpack.c.l.b16 %v2263
        %v2349 = vunpack.c.l.b16 %v2264
        %v2350 = vunpack.c.h.b16 %v2264
        %v2351 = vunpack.c.l.b16 %v2265
        %v2352 = vunpack.c.l.b16 %v2266
        %v2353 = vunpack.c.h.b16 %v2266
        %v2354 = vunpack.c.l.b16 %v2267
        %v2355 = vunpack.c.l.b16 %v2268
        %v2356 = vunpack.c.h.b16 %v2268
        %v2357 = vunpack.c.l.b16 %v2269
        %v2358 = vunpack.c.l.b16 %v2270
        %v2359 = vunpack.c.h.b16 %v2270
        %v2360 = vunpack.c.l.b16 %v2271
        %v2361 = vunpack.c.l.b16 %v2272
        %v2362 = vunpack.c.h.b16 %v2272
        %v2363 = vunpack.c.l.b16 %v2273
        %v2364 = vunpack.c.l.b16 %v2274
        %v2365 = vunpack.c.h.b16 %v2274
        %v2366 = vunpack.c.l.b16 %v2275
        %v2367 = vunpack.c.l.b16 %v2276
        %v2368 = vunpack.c.h.b16 %v2276
        %v2369 = vunpack.c.l.b16 %v2277
        %v2370 = vunpack.c.l.b16 %v2278
        %v2371 = vunpack.c.h.b16 %v2278
        %v2372 = vunpack.c.l.b16 %v2279
        %v2373 = vunpack.c.l.b16 %v2280
        %v2374 = vunpack.c.h.b16 %v2280
        %v2375 = vunpack.c.l.b16 %v2281
        %v2376 = vunpack.c.l.b16 %v2282
        %v2377 = vunpack.c.h.b16 %v2282
        %v2378 = vunpack.c.l.b16 %v2283
        %v2379 = vunpack.c.l.b16 %v2284
        %v2380 = vunpack.c.h.b16 %v2284
        %v2381 = vunpack.c.l.b16 %v2285
        %v2382 = vunpack.c.l.b16 %v2286
        %v2383 = vunpack.c.h.b16 %v2286
        %v2384 = vunpack.c.l.b16 %v2287
        %v2385 = vpack.c.b16 %v2340, %v2337
        %v2386 = vpack.c.b16 %v2341, %v2338
        %v2387 = vpack.c.b16 %v2342, %v2339
        %v2388 = vpack.c.b16 %v2346, %v2343
        %v2389 = vpack.c.b16 %v2347, %v2344
        %v2390 = vpack.c.b16 %v2348, %v2345
        %v2391 = vpack.c.b16 %v2352, %v2349
        %v2392 = vpack.c.b16 %v2353, %v2350
        %v2393 = vpack.c.b16 %v2354, %v2351
        %v2394 = vpack.c.b16 %v2358, %v2355
        %v2395 = vpack.c.b16 %v2359, %v2356
        %v2396 = vpack.c.b16 %v2360, %v2357
        %v2397 = vpack.c.b16 %v2364, %v2361
        %v2398 = vpack.c.b16 %v2365, %v2362
        %v2399 = vpack.c.b16 %v2366, %v2363
        %v2400 = vpack.c.b16 %v2370, %v2367
        %v2401 = vpack.c.b16 %v2371, %v2368
        %v2402 = vpack.c.b16 %v2372, %v2369
        %v2403 = vpack.c.b16 %v2376, %v2373
        %v2404 = vpack.c.b16 %v2377, %v2374
        %v2405 = vpack.c.b16 %v2378, %v2375
        %v2406 = vpack.c.b16 %v2382, %v2379
        %v2407 = vpack.c.b16 %v2383, %v2380
        %v2408 = vpack.c.b16 %v2384, %v2381
        %2433 = vmatprep.subr.bf16.mxu0 %v2386
        %2434 = vmatpush1.bf16.msra.mxu0 %v2385
        %2435 = vmatprep.subr.bf16.mxu0 %v2389
        %2436 = vmatpush1.bf16.msra.mxu0 %v2388
        %2437 = vmatprep.subr.bf16.mxu0 %v2392
        %2438 = vmatpush1.bf16.msra.mxu0 %v2391
        %2439 = vmatprep.subr.bf16.mxu0 %v2395
        %2440 = vmatpush1.bf16.msra.mxu0 %v2394
        %2441 = vmatprep.subr.bf16.mxu0 %v2398
        %2442 = vmatpush1.bf16.msra.mxu0 %v2397
        %2443 = vmatprep.subr.bf16.mxu0 %v2401
        %2444 = vmatpush1.bf16.msra.mxu0 %v2400
        %2445 = vmatprep.subr.bf16.mxu0 %v2404
        %2446 = vmatpush1.bf16.msra.mxu0 %v2403
        %2447 = vmatprep.subr.bf16.mxu0 %v2407
        %2448 = vmatpush1.bf16.msra.mxu0 %v2406
        %2449 = vmatprep.subr.bf16.mxu0 0
        %2450 = vmatpush1.bf16.msra.mxu0 0
        %2451 = vmatprep.subr.bf16.mxu0 0
        %2452 = vmatpush1.bf16.msra.mxu0 0
        %2453 = vmatprep.subr.bf16.mxu0 0
        %2454 = vmatpush1.bf16.msra.mxu0 0
        %2455 = vmatprep.subr.bf16.mxu0 0
        %2456 = vmatpush1.bf16.msra.mxu0 0
        %2457 = vmatprep.subr.bf16.mxu0 0
        %2458 = vmatpush1.bf16.msra.mxu0 0
        %2459 = vmatprep.subr.bf16.mxu0 0
        %2460 = vmatpush1.bf16.msra.mxu0 0
        %2461 = vmatprep.subr.bf16.mxu0 0
        %2462 = vmatpush1.bf16.msra.mxu0 0
        %2463 = vmatprep.subr.bf16.mxu0 0
        %2464 = vmatpush1.bf16.msra.mxu0 0
        %2465 = vmatprep.mubr.bf16.mxu0 0
        %2466 = vmatmul.mubr.bf16.gmra.mrb[0].mxu0 %v2255
        %v2467 = vpop.f32.mrb[0].mxu0
        %v2468 = vadd.f32 %v2293, %v2467
        %v2469 = vpop.f32.mrb[0].mxu0
        %v2470 = vadd.f32 %v2297, %v2469
        %v2471 = vpop.f32.mrb[0].mxu0
        %v2472 = vadd.f32 %v2293, %v2471
        %v2473 = vpop.f32.mrb[0].mxu0
        %v2474 = vadd.f32 %v2297, %v2473
        %2475 = vdwg.mxu0
        %2476 = vmatprep.subr.bf16.mxu0 0
        %2477 = vmatpush1.bf16.msra.mxu0 %v2387
        %2478 = vmatprep.subr.bf16.mxu0 0
        %2479 = vmatpush1.bf16.msra.mxu0 %v2390
        %2480 = vmatprep.subr.bf16.mxu0 0
        %2481 = vmatpush1.bf16.msra.mxu0 %v2393
        %2482 = vmatprep.subr.bf16.mxu0 0
        %2483 = vmatpush1.bf16.msra.mxu0 %v2396
        %2484 = vmatprep.subr.bf16.mxu0 0
        %2485 = vmatpush1.bf16.msra.mxu0 %v2399
        %2486 = vmatprep.subr.bf16.mxu0 0
        %2487 = vmatpush1.bf16.msra.mxu0 %v2402
        %2488 = vmatprep.subr.bf16.mxu0 0
        %2489 = vmatpush1.bf16.msra.mxu0 %v2405
        %2490 = vmatprep.subr.bf16.mxu0 0
        %2491 = vmatpush1.bf16.msra.mxu0 %v2408
        %2492 = vmatprep.subr.bf16.mxu0 0
        %2493 = vmatpush1.bf16.msra.mxu0 0
        %2494 = vmatprep.subr.bf16.mxu0 0
        %2495 = vmatpush1.bf16.msra.mxu0 0
        %2496 = vmatprep.subr.bf16.mxu0 0
        %2497 = vmatpush1.bf16.msra.mxu0 0
        %2498 = vmatprep.subr.bf16.mxu0 0
        %2499 = vmatpush1.bf16.msra.mxu0 0
        %2500 = vmatprep.subr.bf16.mxu0 0
        %2501 = vmatpush1.bf16.msra.mxu0 0
        %2502 = vmatprep.subr.bf16.mxu0 0
        %2503 = vmatpush1.bf16.msra.mxu0 0
        %2504 = vmatprep.subr.bf16.mxu0 0
        %2505 = vmatpush1.bf16.msra.mxu0 0
        %2506 = vmatprep.subr.bf16.mxu0 0
        %2507 = vmatpush1.bf16.msra.mxu0 0
        %2508 = vmatprep.mubr.bf16.mxu0 0
        %2509 = vmatmul.mubr.bf16.gmra.mrb[0].mxu0 %v2255
        %v2510 = vpop.f32.mrb[0].mxu0
        %v2511 = vadd.f32 %v2301, %v2510
        %v2512 = vpop.f32.mrb[0].mxu0
        %v2513 = vpop.f32.mrb[0].mxu0
        %v2514 = vadd.f32 %v2301, %v2513
        %v2515 = vpop.f32.mrb[0].mxu0
        %2516 = vdwg.mxu0
        %v2517 = vmul.f32 %v690, -1e+30
        %v2518 = vpack.c.bf16 %v2472, %v2468
        %v2519 = vpack.c.bf16 %v2474, %v2470
        %vm2520 = vcmask 523264
        %v2522 = vsel %vm2520, %v2518, 0
        %v2525 = vsel %vm2520, %v2519, 0
        %2527 = vmatprep.subr.bf16.mxu0 0
        %2528 = vmatpush1.bf16.xpose.msra.mxu0 %v2525
        %2529 = vmatprep.subr.bf16.mxu0 0
        %2530 = vmatpush1.bf16.xpose.msra.mxu0 0
        %2531 = vmatprep.subr.bf16.mxu0 0
        %2532 = vmatpush1.bf16.xpose.msra.mxu0 0
        %2533 = vmatprep.subr.bf16.mxu0 0
        %2534 = vmatpush1.bf16.xpose.msra.mxu0 0
        %2535 = vmatprep.subr.bf16.mxu0 0
        %2536 = vmatpush1.bf16.xpose.msra.mxu0 0
        %2537 = vmatprep.subr.bf16.mxu0 0
        %2538 = vmatpush1.bf16.xpose.msra.mxu0 0
        %2539 = vmatprep.subr.bf16.mxu0 0
        %2540 = vmatpush1.bf16.xpose.msra.mxu0 0
        %2541 = vmatprep.subr.bf16.mxu0 0
        %2542 = vmatpush1.bf16.xpose.msra.mxu0 0
        %2543 = vmatprep.subr.bf16.mxu0 0
        %2544 = vmatpush1.bf16.xpose.msra.mxu0 0
        %2545 = vmatprep.subr.bf16.mxu0 0
        %2546 = vmatpush1.bf16.xpose.msra.mxu0 0
        %2547 = vmatprep.subr.bf16.mxu0 0
        %2548 = vmatpush1.bf16.xpose.msra.mxu0 0
        %2549 = vmatprep.subr.bf16.mxu0 0
        %2550 = vmatpush1.bf16.xpose.msra.mxu0 0
        %2551 = vmatprep.subr.bf16.mxu0 0
        %2552 = vmatpush1.bf16.xpose.msra.mxu0 0
        %2553 = vmatprep.subr.bf16.mxu0 0
        %2554 = vmatpush1.bf16.xpose.msra.mxu0 0
        %2555 = vmatprep.subr.bf16.mxu0 0
        %2556 = vmatpush1.bf16.xpose.msra.mxu0 0
        %2557 = vmatprep.subr.bf16.mxu0 0
        %2558 = vmatpush1.bf16.xpose.msra.mxu0 0
        %2559 = vmatprep.mubr.bf16.mxu0 0
        %2560 = vmatmul.mubr.bf16.gmra.mrb[0].mxu0 %v2522
        %v2561 = vpop.f32.mrb[0].mxu0
        %v2562 = vadd.f32 0.0, %v2561
        %v2563 = vpop.f32.mrb[0].mxu0
        %v2564 = vpop.f32.mrb[0].mxu0
        %v2565 = vadd.f32 0.0, %v2564
        %v2566 = vpop.f32.mrb[0].mxu0
        %2567 = vdwg.mxu0
        %v2568 = vmul.f32 %v2562, 0.088388346
        %v2569 = vmul.f32 %v2565, 0.088388346
        %v2571 = vlaneseq
        %v2572 = vshrl.u32 %v2571, 7
        %v2573 = vsub.s32 0, %v2572
        %v2574 = vrot.slane %v2517, %v2573
        %v2576 = vadd.f32 %v2568, %v2574
        %v2577 = vadd.f32 %v2569, %v2574
        %vm2578 = vcmask 130048
        %v2579 = vsel %vm2578, %v2576, -inf
        %2580 = vmax.xlane.f32.xlu0 %v2579
        %v2581 = vpop.xlane.xlu0 %2580
        %v2582 = vsel %vm2578, %v2577, -inf
        %2583 = vmax.xlane.f32.xlu0 %v2582
        %v2584 = vpop.xlane.xlu0 %2583
        %v2585 = vsub.f32 %v2576, %v2581
        %v2586 = vsub.f32 %v2577, %v2584
        %v2587 = vmul.f32 %v2585, 1.442695
        %v2588 = vpow.pop %v2587
        %v2589 = vmul.f32 %v2586, 1.442695
        %v2590 = vpow.pop %v2589
        %v2591 = vsel %vm2578, %v2588, 0.0
        %2592 = vadd.xlane.f32.xlu0 %v2591
        %v2593 = vpop.xlane.xlu0 %2592
        %v2594 = vsel %vm2578, %v2590, 0.0
        %2595 = vadd.xlane.f32.xlu0 %v2594
        %v2596 = vpop.xlane.xlu0 %2595
        %v2597 = vrcp.pop %v2593
        %v2598 = vrcp.pop %v2596
        %v2599 = vmul.f32 %v2588, %v2597
        %v2600 = vmul.f32 %v2590, %v2598
        %v2601 = vpack.c.bf16 %v2600, %v2599
        %v2602 = vpack.c.bf16 %v2514, %v2511
        %v2604 = vsel %vm2578, %v2601, 0
        %2606 = vmatprep.subr.bf16.mxu0 0
        %2607 = vmatpush1.bf16.msra.mxu0 %v2602
        %2608 = vmatprep.subr.bf16.mxu0 0
        %2609 = vmatpush1.bf16.msra.mxu0 0
        %2610 = vmatprep.subr.bf16.mxu0 0
        %2611 = vmatpush1.bf16.msra.mxu0 0
        %2612 = vmatprep.subr.bf16.mxu0 0
        %2613 = vmatpush1.bf16.msra.mxu0 0
        %2614 = vmatprep.subr.bf16.mxu0 0
        %2615 = vmatpush1.bf16.msra.mxu0 0
        %2616 = vmatprep.subr.bf16.mxu0 0
        %2617 = vmatpush1.bf16.msra.mxu0 0
        %2618 = vmatprep.subr.bf16.mxu0 0
        %2619 = vmatpush1.bf16.msra.mxu0 0
        %2620 = vmatprep.subr.bf16.mxu0 0
        %2621 = vmatpush1.bf16.msra.mxu0 0
        %2622 = vmatprep.subr.bf16.mxu0 0
        %2623 = vmatpush1.bf16.msra.mxu0 0
        %2624 = vmatprep.subr.bf16.mxu0 0
        %2625 = vmatpush1.bf16.msra.mxu0 0
        %2626 = vmatprep.subr.bf16.mxu0 0
        %2627 = vmatpush1.bf16.msra.mxu0 0
        %2628 = vmatprep.subr.bf16.mxu0 0
        %2629 = vmatpush1.bf16.msra.mxu0 0
        %2630 = vmatprep.subr.bf16.mxu0 0
        %2631 = vmatpush1.bf16.msra.mxu0 0
        %2632 = vmatprep.subr.bf16.mxu0 0
        %2633 = vmatpush1.bf16.msra.mxu0 0
        %2634 = vmatprep.subr.bf16.mxu0 0
        %2635 = vmatpush1.bf16.msra.mxu0 0
        %2636 = vmatprep.subr.bf16.mxu0 0
        %2637 = vmatpush1.bf16.msra.mxu0 0
        %2638 = vmatprep.mubr.bf16.mxu0 0
        %2639 = vmatmul.mubr.bf16.gmra.mrb[0].mxu0 %v2604
        %v2640 = vpop.f32.mrb[0].mxu0
        %v2641 = vadd.f32 0.0, %v2640
        %v2642 = vpop.f32.mrb[0].mxu0
        %v2643 = vpop.f32.mrb[0].mxu0
        %v2644 = vadd.f32 0.0, %v2643
        %v2645 = vpop.f32.mrb[0].mxu0
        %2646 = vdwg.mxu0
        %v2647 = vpack.c.bf16 %v2644, %v2641
        %v2648 = vld [vmem:[%s13] sm:$0xf]
        %v2649 = vld [vmem:[%s13 + $0x4] sm:$0xf]
        %v2650 = vld [vmem:[%s13 + $0x8] sm:$0xf]
        %v2651 = vld [vmem:[%s13 + $0xc] sm:$0xf]
        %v2652 = vld [vmem:[%s13 + $0x10] sm:$0xf]
        %v2653 = vld [vmem:[%s13 + $0x14] sm:$0xf]
        %v2654 = vld [vmem:[%s13 + $0x18] sm:$0xf]
        %v2655 = vld [vmem:[%s13 + $0x1c] sm:$0xf]
        %2657 = vrot.lane.b32.xlu0 %v2518, 64
        %v2658 = vpop.permute.xlu0 %2657
        %2660 = vrot.lane.b32.xlu0 %v2519, 64
        %v2661 = vpop.permute.xlu0 %2660
        %v2663 = vsel %vm2520, %v2658, 0
        %v2666 = vsel %vm2520, %v2661, 0
        %2668 = vmatprep.subr.bf16.mxu0 0
        %2669 = vmatpush1.bf16.xpose.msra.mxu0 %v2666
        %2670 = vmatprep.subr.bf16.mxu0 0
        %2671 = vmatpush1.bf16.xpose.msra.mxu0 0
        %2672 = vmatprep.subr.bf16.mxu0 0
        %2673 = vmatpush1.bf16.xpose.msra.mxu0 0
        %2674 = vmatprep.subr.bf16.mxu0 0
        %2675 = vmatpush1.bf16.xpose.msra.mxu0 0
        %2676 = vmatprep.subr.bf16.mxu0 0
        %2677 = vmatpush1.bf16.xpose.msra.mxu0 0
        %2678 = vmatprep.subr.bf16.mxu0 0
        %2679 = vmatpush1.bf16.xpose.msra.mxu0 0
        %2680 = vmatprep.subr.bf16.mxu0 0
        %2681 = vmatpush1.bf16.xpose.msra.mxu0 0
        %2682 = vmatprep.subr.bf16.mxu0 0
        %2683 = vmatpush1.bf16.xpose.msra.mxu0 0
        %2684 = vmatprep.subr.bf16.mxu0 0
        %2685 = vmatpush1.bf16.xpose.msra.mxu0 0
        %2686 = vmatprep.subr.bf16.mxu0 0
        %2687 = vmatpush1.bf16.xpose.msra.mxu0 0
        %2688 = vmatprep.subr.bf16.mxu0 0
        %2689 = vmatpush1.bf16.xpose.msra.mxu0 0
        %2690 = vmatprep.subr.bf16.mxu0 0
        %2691 = vmatpush1.bf16.xpose.msra.mxu0 0
        %2692 = vmatprep.subr.bf16.mxu0 0
        %2693 = vmatpush1.bf16.xpose.msra.mxu0 0
        %2694 = vmatprep.subr.bf16.mxu0 0
        %2695 = vmatpush1.bf16.xpose.msra.mxu0 0
        %2696 = vmatprep.subr.bf16.mxu0 0
        %2697 = vmatpush1.bf16.xpose.msra.mxu0 0
        %2698 = vmatprep.subr.bf16.mxu0 0
        %2699 = vmatpush1.bf16.xpose.msra.mxu0 0
        %2700 = vmatprep.mubr.bf16.mxu0 0
        %2701 = vmatmul.mubr.bf16.gmra.mrb[0].mxu0 %v2663
        %v2702 = vpop.f32.mrb[0].mxu0
        %v2703 = vadd.f32 0.0, %v2702
        %v2704 = vpop.f32.mrb[0].mxu0
        %v2705 = vpop.f32.mrb[0].mxu0
        %v2706 = vadd.f32 0.0, %v2705
        %v2707 = vpop.f32.mrb[0].mxu0
        %2708 = vdwg.mxu0
        %v2709 = vmul.f32 %v2703, 0.088388346
        %v2710 = vmul.f32 %v2706, 0.088388346
        %v2711 = vadd.f32 %v2709, %v2574
        %v2712 = vadd.f32 %v2710, %v2574
        %v2713 = vsel %vm2578, %v2711, -inf
        %2714 = vmax.xlane.f32.xlu0 %v2713
        %v2715 = vpop.xlane.xlu0 %2714
        %v2716 = vsel %vm2578, %v2712, -inf
        %2717 = vmax.xlane.f32.xlu0 %v2716
        %v2718 = vpop.xlane.xlu0 %2717
        %v2719 = vsub.f32 %v2711, %v2715
        %v2720 = vsub.f32 %v2712, %v2718
        %v2721 = vmul.f32 %v2719, 1.442695
        %v2722 = vpow.pop %v2721
        %v2723 = vmul.f32 %v2720, 1.442695
        %v2724 = vpow.pop %v2723
        %v2725 = vsel %vm2578, %v2722, 0.0
        %2726 = vadd.xlane.f32.xlu0 %v2725
        %v2727 = vpop.xlane.xlu0 %2726
        %v2728 = vsel %vm2578, %v2724, 0.0
        %2729 = vadd.xlane.f32.xlu0 %v2728
        %v2730 = vpop.xlane.xlu0 %2729
        %v2731 = vrcp.pop %v2727
        %v2732 = vrcp.pop %v2730
        %v2733 = vmul.f32 %v2722, %v2731
        %v2734 = vmul.f32 %v2724, %v2732
        %v2735 = vpack.c.bf16 %v2734, %v2733
        %2737 = vrot.lane.b32.xlu0 %v2602, 64
        %v2738 = vpop.permute.xlu0 %2737
        %v2741 = vsel %vm2578, %v2735, 0
        %2743 = vmatprep.subr.bf16.mxu0 0
        %2744 = vmatpush1.bf16.msra.mxu0 %v2738
        %2745 = vmatprep.subr.bf16.mxu0 0
        %2746 = vmatpush1.bf16.msra.mxu0 0
        %2747 = vmatprep.subr.bf16.mxu0 0
        %2748 = vmatpush1.bf16.msra.mxu0 0
        %2749 = vmatprep.subr.bf16.mxu0 0
        %2750 = vmatpush1.bf16.msra.mxu0 0
        %2751 = vmatprep.subr.bf16.mxu0 0
        %2752 = vmatpush1.bf16.msra.mxu0 0
        %2753 = vmatprep.subr.bf16.mxu0 0
        %2754 = vmatpush1.bf16.msra.mxu0 0
        %2755 = vmatprep.subr.bf16.mxu0 0
        %2756 = vmatpush1.bf16.msra.mxu0 0
        %2757 = vmatprep.subr.bf16.mxu0 0
        %2758 = vmatpush1.bf16.msra.mxu0 0
        %2759 = vmatprep.subr.bf16.mxu0 0
        %2760 = vmatpush1.bf16.msra.mxu0 0
        %2761 = vmatprep.subr.bf16.mxu0 0
        %2762 = vmatpush1.bf16.msra.mxu0 0
        %2763 = vmatprep.subr.bf16.mxu0 0
        %2764 = vmatpush1.bf16.msra.mxu0 0
        %2765 = vmatprep.subr.bf16.mxu0 0
        %2766 = vmatpush1.bf16.msra.mxu0 0
        %2767 = vmatprep.subr.bf16.mxu0 0
        %2768 = vmatpush1.bf16.msra.mxu0 0
        %2769 = vmatprep.subr.bf16.mxu0 0
        %2770 = vmatpush1.bf16.msra.mxu0 0
        %2771 = vmatprep.subr.bf16.mxu0 0
        %2772 = vmatpush1.bf16.msra.mxu0 0
        %2773 = vmatprep.subr.bf16.mxu0 0
        %2774 = vmatpush1.bf16.msra.mxu0 0
        %2775 = vmatprep.mubr.bf16.mxu0 0
        %2776 = vmatmul.mubr.bf16.gmra.mrb[0].mxu0 %v2741
        %v2777 = vpop.f32.mrb[0].mxu0
        %v2778 = vadd.f32 0.0, %v2777
        %v2779 = vpop.f32.mrb[0].mxu0
        %v2780 = vpop.f32.mrb[0].mxu0
        %v2781 = vadd.f32 0.0, %v2780
        %v2782 = vpop.f32.mrb[0].mxu0
        %2783 = vdwg.mxu0
        %v2784 = vpack.c.bf16 %v2781, %v2778
        %v2785 = vld [vmem:[%s13 + $0x20] sm:$0xf]
        %v2786 = vld [vmem:[%s13 + $0x24] sm:$0xf]
        %v2787 = vld [vmem:[%s13 + $0x28] sm:$0xf]
        %v2788 = vld [vmem:[%s13 + $0x2c] sm:$0xf]
        %v2789 = vld [vmem:[%s13 + $0x30] sm:$0xf]
        %v2790 = vld [vmem:[%s13 + $0x34] sm:$0xf]
        %v2791 = vld [vmem:[%s13 + $0x38] sm:$0xf]
        %v2792 = vld [vmem:[%s13 + $0x3c] sm:$0xf]
        %v2801 = vunpack.c.l.b16 %v2785
        %v2802 = vunpack.c.l.b16 %v2786
        %v2803 = vunpack.c.l.b16 %v2787
        %v2804 = vunpack.c.l.b16 %v2788
        %v2805 = vunpack.c.l.b16 %v2789
        %v2806 = vunpack.c.l.b16 %v2790
        %v2807 = vunpack.c.l.b16 %v2791
        %v2808 = vunpack.c.l.b16 %v2792
        %v2809 = vpack.c.b16 %v2802, %v2801
        %v2810 = vpack.c.b16 %v2804, %v2803
        %v2811 = vpack.c.b16 %v2806, %v2805
        %v2812 = vpack.c.b16 %v2808, %v2807
        %v2818 = vsel %vm2520, %v2784, 0
        %2820 = vmatprep.subr.bf16.mxu0 0
        %2821 = vmatpush1.bf16.msra.mxu0 %v2809
        %2822 = vmatprep.subr.bf16.mxu0 0
        %2823 = vmatpush1.bf16.msra.mxu0 %v2810
        %2824 = vmatprep.subr.bf16.mxu0 0
        %2825 = vmatpush1.bf16.msra.mxu0 %v2811
        %2826 = vmatprep.subr.bf16.mxu0 0
        %2827 = vmatpush1.bf16.msra.mxu0 %v2812
        %2828 = vmatprep.subr.bf16.mxu0 0
        %2829 = vmatpush1.bf16.msra.mxu0 0
        %2830 = vmatprep.subr.bf16.mxu0 0
        %2831 = vmatpush1.bf16.msra.mxu0 0
        %2832 = vmatprep.subr.bf16.mxu0 0
        %2833 = vmatpush1.bf16.msra.mxu0 0
        %2834 = vmatprep.subr.bf16.mxu0 0
        %2835 = vmatpush1.bf16.msra.mxu0 0
        %2836 = vmatprep.subr.bf16.mxu0 0
        %2837 = vmatpush1.bf16.msra.mxu0 0
        %2838 = vmatprep.subr.bf16.mxu0 0
        %2839 = vmatpush1.bf16.msra.mxu0 0
        %2840 = vmatprep.subr.bf16.mxu0 0
        %2841 = vmatpush1.bf16.msra.mxu0 0
        %2842 = vmatprep.subr.bf16.mxu0 0
        %2843 = vmatpush1.bf16.msra.mxu0 0
        %2844 = vmatprep.subr.bf16.mxu0 0
        %2845 = vmatpush1.bf16.msra.mxu0 0
        %2846 = vmatprep.subr.bf16.mxu0 0
        %2847 = vmatpush1.bf16.msra.mxu0 0
        %2848 = vmatprep.subr.bf16.mxu0 0
        %2849 = vmatpush1.bf16.msra.mxu0 0
        %2850 = vmatprep.subr.bf16.mxu0 0
        %2851 = vmatpush1.bf16.msra.mxu0 0
        %2852 = vmatprep.mubr.bf16.mxu0 0
        %2853 = vmatmul.mubr.bf16.gmra.mrb[0].mxu0 %v2818
        %v2854 = vpop.f32.mrb[0].mxu0
        %v2855 = vadd.f32 0.0, %v2854
        %v2856 = vpop.f32.mrb[0].mxu0
        %v2857 = vpop.f32.mrb[0].mxu0
        %v2858 = vadd.f32 0.0, %v2857
        %v2859 = vpop.f32.mrb[0].mxu0
        %2860 = vdwg.mxu0
        %v2869 = vunpack.c.l.b16 %v2648
        %v2870 = vunpack.c.l.b16 %v2649
        %v2871 = vunpack.c.l.b16 %v2650
        %v2872 = vunpack.c.l.b16 %v2651
        %v2873 = vunpack.c.l.b16 %v2652
        %v2874 = vunpack.c.l.b16 %v2653
        %v2875 = vunpack.c.l.b16 %v2654
        %v2876 = vunpack.c.l.b16 %v2655
        %v2877 = vpack.c.b16 %v2870, %v2869
        %v2878 = vpack.c.b16 %v2872, %v2871
        %v2879 = vpack.c.b16 %v2874, %v2873
        %v2880 = vpack.c.b16 %v2876, %v2875
        %v2886 = vsel %vm2520, %v2647, 0
        %2888 = vmatprep.subr.bf16.mxu0 0
        %2889 = vmatpush1.bf16.msra.mxu0 %v2877
        %2890 = vmatprep.subr.bf16.mxu0 0
        %2891 = vmatpush1.bf16.msra.mxu0 %v2878
        %2892 = vmatprep.subr.bf16.mxu0 0
        %2893 = vmatpush1.bf16.msra.mxu0 %v2879
        %2894 = vmatprep.subr.bf16.mxu0 0
        %2895 = vmatpush1.bf16.msra.mxu0 %v2880
        %2896 = vmatprep.subr.bf16.mxu0 0
        %2897 = vmatpush1.bf16.msra.mxu0 0
        %2898 = vmatprep.subr.bf16.mxu0 0
        %2899 = vmatpush1.bf16.msra.mxu0 0
        %2900 = vmatprep.subr.bf16.mxu0 0
        %2901 = vmatpush1.bf16.msra.mxu0 0
        %2902 = vmatprep.subr.bf16.mxu0 0
        %2903 = vmatpush1.bf16.msra.mxu0 0
        %2904 = vmatprep.subr.bf16.mxu0 0
        %2905 = vmatpush1.bf16.msra.mxu0 0
        %2906 = vmatprep.subr.bf16.mxu0 0
        %2907 = vmatpush1.bf16.msra.mxu0 0
        %2908 = vmatprep.subr.bf16.mxu0 0
        %2909 = vmatpush1.bf16.msra.mxu0 0
        %2910 = vmatprep.subr.bf16.mxu0 0
        %2911 = vmatpush1.bf16.msra.mxu0 0
        %2912 = vmatprep.subr.bf16.mxu0 0
        %2913 = vmatpush1.bf16.msra.mxu0 0
        %2914 = vmatprep.subr.bf16.mxu0 0
        %2915 = vmatpush1.bf16.msra.mxu0 0
        %2916 = vmatprep.subr.bf16.mxu0 0
        %2917 = vmatpush1.bf16.msra.mxu0 0
        %2918 = vmatprep.subr.bf16.mxu0 0
        %2919 = vmatpush1.bf16.msra.mxu0 0
        %2920 = vmatprep.mubr.bf16.mxu0 0
        %2921 = vmatmul.mubr.bf16.gmra.mrb[0].mxu0 %v2886
        %v2922 = vpop.f32.mrb[0].mxu0
        %v2923 = vadd.f32 %v2855, %v2922
        %v2924 = vpop.f32.mrb[0].mxu0
        %v2925 = vpop.f32.mrb[0].mxu0
        %v2926 = vadd.f32 %v2858, %v2925
        %v2927 = vpop.f32.mrb[0].mxu0
        %2928 = vdwg.mxu0
        %v2929 = vadd.f32 %v2253, %v2923
        %v2930 = vadd.f32 %v2254, %v2926
        %v2931 = vld [vmem:[%s14] sm:$0x1]
        %v2933 = vlaneseq
        %v2934 = vshrl.u32 %v2933, 7
        %v2935 = vsub.s32 0, %v2934
        %v2936 = vrot.slane %v2931, %v2935
        %v2938 = vadd.f32 %v2929, %v2936
        %v2939 = vadd.f32 %v2930, %v2936
        %v2940 = vpack.c.bf16 %v2939, %v2938
        %v2941 = vld [vmem:[#allocation14] sm:$0xf]
        %v2942 = vld [vmem:[#allocation14 + $0x4] sm:$0xf]
        %v2943 = vld [vmem:[#allocation14 + $0x8] sm:$0xf]
        %v2944 = vld [vmem:[#allocation14 + $0xc] sm:$0xf]
        %v2945 = vld [vmem:[#allocation14 + $0x10] sm:$0xf]
        %v2946 = vld [vmem:[#allocation14 + $0x14] sm:$0xf]
        %v2947 = vld [vmem:[#allocation14 + $0x18] sm:$0xf]
        %v2948 = vld [vmem:[#allocation14 + $0x1c] sm:$0xf]
        %v2949 = vld [vmem:[#allocation14 + $0x20] sm:$0xf]
        %v2950 = vld [vmem:[#allocation14 + $0x24] sm:$0xf]
        %v2951 = vld [vmem:[#allocation14 + $0x28] sm:$0xf]
        %v2952 = vld [vmem:[#allocation14 + $0x2c] sm:$0xf]
        %v2953 = vld [vmem:[#allocation14 + $0x30] sm:$0xf]
        %v2954 = vld [vmem:[#allocation14 + $0x34] sm:$0xf]
        %v2955 = vld [vmem:[#allocation14 + $0x38] sm:$0xf]
        %v2956 = vld [vmem:[#allocation14 + $0x3c] sm:$0xf]
        %v2957 = vld [vmem:[%s16] sm:$0x1]
        %v2959 = vlaneseq
        %v2960 = vshrl.u32 %v2959, 7
        %v2961 = vsub.s32 0, %v2960
        %v2962 = vrot.slane %v2957, %v2961
        %v2980 = vunpack.c.l.b16 %v2941
        %v2981 = vunpack.c.l.b16 %v2942
        %v2982 = vunpack.c.l.b16 %v2943
        %v2983 = vunpack.c.l.b16 %v2944
        %v2984 = vunpack.c.l.b16 %v2945
        %v2985 = vunpack.c.l.b16 %v2946
        %v2986 = vunpack.c.l.b16 %v2947
        %v2987 = vunpack.c.l.b16 %v2948
        %v2988 = vunpack.c.l.b16 %v2949
        %v2989 = vunpack.c.l.b16 %v2950
        %v2990 = vunpack.c.l.b16 %v2951
        %v2991 = vunpack.c.l.b16 %v2952
        %v2992 = vunpack.c.l.b16 %v2953
        %v2993 = vunpack.c.l.b16 %v2954
        %v2994 = vunpack.c.l.b16 %v2955
        %v2995 = vunpack.c.l.b16 %v2956
        %v2996 = vpack.c.b16 %v2981, %v2980
        %v2997 = vpack.c.b16 %v2983, %v2982
        %v2998 = vpack.c.b16 %v2985, %v2984
        %v2999 = vpack.c.b16 %v2987, %v2986
        %v3000 = vpack.c.b16 %v2989, %v2988
        %v3001 = vpack.c.b16 %v2991, %v2990
        %v3002 = vpack.c.b16 %v2993, %v2992
        %v3003 = vpack.c.b16 %v2995, %v2994
        %3012 = vmatprep.subr.bf16.mxu0 0
        %3013 = vmatpush1.bf16.msra.mxu0 %v2996
        %3014 = vmatprep.subr.bf16.mxu0 0
        %3015 = vmatpush1.bf16.msra.mxu0 %v2997
        %3016 = vmatprep.subr.bf16.mxu0 0
        %3017 = vmatpush1.bf16.msra.mxu0 %v2998
        %3018 = vmatprep.subr.bf16.mxu0 0
        %3019 = vmatpush1.bf16.msra.mxu0 %v2999
        %3020 = vmatprep.subr.bf16.mxu0 0
        %3021 = vmatpush1.bf16.msra.mxu0 %v3000
        %3022 = vmatprep.subr.bf16.mxu0 0
        %3023 = vmatpush1.bf16.msra.mxu0 %v3001
        %3024 = vmatprep.subr.bf16.mxu0 0
        %3025 = vmatpush1.bf16.msra.mxu0 %v3002
        %3026 = vmatprep.subr.bf16.mxu0 0
        %3027 = vmatpush1.bf16.msra.mxu0 %v3003
        %3028 = vmatprep.subr.bf16.mxu0 0
        %3029 = vmatpush1.bf16.msra.mxu0 0
        %3030 = vmatprep.subr.bf16.mxu0 0
        %3031 = vmatpush1.bf16.msra.mxu0 0
        %3032 = vmatprep.subr.bf16.mxu0 0
        %3033 = vmatpush1.bf16.msra.mxu0 0
        %3034 = vmatprep.subr.bf16.mxu0 0
        %3035 = vmatpush1.bf16.msra.mxu0 0
        %3036 = vmatprep.subr.bf16.mxu0 0
        %3037 = vmatpush1.bf16.msra.mxu0 0
        %3038 = vmatprep.subr.bf16.mxu0 0
        %3039 = vmatpush1.bf16.msra.mxu0 0
        %3040 = vmatprep.subr.bf16.mxu0 0
        %3041 = vmatpush1.bf16.msra.mxu0 0
        %3042 = vmatprep.subr.bf16.mxu0 0
        %3043 = vmatpush1.bf16.msra.mxu0 0
        %3044 = vmatprep.mubr.bf16.mxu0 0
        %3045 = vmatmul.mubr.bf16.gmra.mrb[0].mxu0 %v2940
        %v3046 = vpop.f32.mrb[0].mxu0
        %v3047 = vadd.f32 %v2962, %v3046
        %v3048 = vpop.f32.mrb[0].mxu0
        %v3049 = vpop.f32.mrb[0].mxu0
        %v3050 = vadd.f32 %v2962, %v3049
        %v3051 = vpop.f32.mrb[0].mxu0
        %3052 = vdwg.mxu0
        %v3053 = vmul.f32 %v3047, %v2246
        %v3054 = vmul.f32 %v3050, %v2251
        %vm3055 = vcmask 7168
        %v3056 = vsel %vm3055, %v693, 0.0
        %v3057 = vsel %vm3055, %v694, 0.0
        %v3058 = vadd.f32 %v3056, %v3057
        %v3059 = vrot.slane %v3058, 4
        %v3060 = vadd.f32 %v3058, %v3059
        %v3061 = vrot.slane %v3060, 2
        %v3062 = vadd.f32 %v3060, %v3061
        %v3063 = vrot.slane %v3062, 1
        %v3064 = vadd.f32 %v3062, %v3063
        %v3065 = vadd.f32 %v3053, %v3054
        %v3066 = vrot.slane %v3065, 4
        %v3067 = vadd.f32 %v3065, %v3066
        %v3068 = vrot.slane %v3067, 2
        %v3069 = vadd.f32 %v3067, %v3068
        %v3070 = vrot.slane %v3069, 1
        %v3071 = vadd.f32 %v3069, %v3070
        %3073 = vset.pattern.permute.xlu0 0
        %3074 = vperm.xlu0 %3073, %v3064
        %v3075 = vpop.permute.xlu0 %3074
        %v3077 = vrcp.pop %v3075
        %v3078 = vmul.f32 %v3071, %v3077
        %3079 = vst [vmem:[%s678] sm:$0x1] %v3078
        %s3080 = sand.u32 %s417, 1
        %s3081 = scalar_lea.sflag [#allocation5], %s3080
        %s3082 = sand.u32 %s417, 1
        %s3083 = scalar_lea.vmem [#allocation15], %s3082
        // Predicated region
        $region117: #{tpu_custom_call.1} parent=87 // pred_check
          %p3084 = pneg %p427
        $region118: #{tpu_custom_call.1} parent=87 // pred_check_branch
          %3086 = sbr.rel (%p3084) target = $region120
        $region119: #{tpu_custom_call.1} parent=87 // pred_region
          %s3088 = ssub.s32 16, 16
          %3089 = vsyncadd %s3081, %s3088
          %s3090 = smul.addr %s37, 16
          %s3091 = scalar_lea.hbm %s17, %s3090
          %s3093 = sshll.u32 %s3083, 4
          %s3094 = int_to_ptr.vmem [resolvable:$true] %s3093
          %3096 = dma.vmem_to_hbm [thread:$0]  %s3094, 16, %s3091, %s3081
        $region120: #{tpu_custom_call.1} parent=87 // pred_fallthru
          _
      $region88: #{tpu_custom_call.1} parent=5 // pred_fallthru
        _
      %p3097 = scmp.le.s32.totalorder 2, %s32
      // Predicated region
      $region121: #{tpu_custom_call.1} parent=5 // pred_check
        %p3098 = pneg %p3097
      $region122: #{tpu_custom_call.1} parent=5 // pred_check_branch
        %3100 = sbr.rel (%p3098) target = $region124
      $region123: #{tpu_custom_call.1} parent=5 // pred_region
        %s3101 = ssub.s32 %s32, 2
        // Predicated region
        $region125: #{tpu_custom_call.1} parent=123 // pred_check
          %p3102 = pneg %p433
        $region126: #{tpu_custom_call.1} parent=123 // pred_check_branch
          %3104 = sbr.rel (%p3102) target = $region128
        $region127: #{tpu_custom_call.1} parent=123 // pred_region
          %s3105 = sand.u32 %s418, 1
          %s3106 = scalar_lea.sflag [#allocation5], %s3105
          %s3107 = sand.u32 %s418, 1
          %s3108 = scalar_lea.vmem [#allocation15], %s3107
          %3109 = dma.done %s3106, 16
        $region128: #{tpu_custom_call.1} parent=123 // pred_fallthru
          _
      $region124: #{tpu_custom_call.1} parent=5 // pred_fallthru
        _
    $region6: #{tpu_custom_call.1} parent=1 // loop_footer
      %s36 = sadd.s32 1, %s32
    $region7: #{tpu_custom_call.1} parent=1 // loop_footer_branch
      %31 = sbr.rel target = $region3
    $region8: #{tpu_custom_call.1} parent=1 // loop_exit
      _
    %3110 = vsyncpa [#allocation4], 1
    %s3111 = scalar_lea.sflag [#allocation4], 1
    %3112 = vsyncpa %s3111, 1
    %3113 = vsyncpa [#allocation7], 1
    %3114 = vsyncpa [#allocation10], 1
    %3115 = vsyncpa [#allocation13], 1
    %3116 = vsyncpa [#allocation5], 1
    %s3117 = scalar_lea.sflag [#allocation5], 1
    %3118 = vsyncpa %s3117, 1

</llo_original>
